<compile_context>
chip_gen: v5e
topology: v5e:2x2
jax: 0.10.0
libtpu: 0.0.40
codegen_flags: <defaults>
</compile_context>

<pallas_src>
import functools

import numpy as np
import jax
import jax.numpy as jnp
from jax.experimental import pallas as pl
from jax.experimental.pallas import tpu as pltpu


def _cde_kernel(x0_ref,                          # VMEM (BB, C)            == X(t0) slab
                dx_ref,                          # VMEM (n_groups, BB, L)  dt*dX/dt, 4 stages, lane-packed
                w_init_ref, b_init_ref,          # (C, H), (1, H)
                w_in_ref, b_in_ref,              # (H, HH), (1, HH)
                w_out_ref, b_out_ref,            # (HH, C*H), (1, C*H)
                z_out_ref,                       # out block (OT, BB, H)
                *, BB, H, C, T, OT, G, n_groups):
    # Hoist all weight/bias loads out of the time loop.
    w_init = w_init_ref[...]
    b_init = b_init_ref[...]
    w_in = w_in_ref[...]
    b_in = b_in_ref[...]
    w_out = w_out_ref[...]
    b_out = b_out_ref[...]

    third = jnp.float32(1.0 / 3.0)

    # z0 = initial_network(spline.evaluate(times[0]))
    z0 = (jnp.dot(x0_ref[...], w_init, preferred_element_type=jnp.float32)
          + b_init)                                                  # (BB, H)
    if OT >= T:          # static: z0 itself is one of the emitted states
        z_out_ref[OT - T] = z0

    def vf(z, dxb):
        # FinalTanh vector field contracted with (dt * dX/dt):
        #   out[b,h] = sum_c tanh(relu(z W_in^T + b_in) W_out^T + b_out)[b, c*H+h] * dxb[c][b,h]
        # W_out columns are pre-permuted to c*H + h layout -> one fused matmul.
        h1 = jnp.maximum(
            jnp.dot(z, w_in, preferred_element_type=jnp.float32) + b_in, 0.0)   # (BB, HH)
        m = jnp.tanh(
            jnp.dot(h1, w_out, preferred_element_type=jnp.float32) + b_out)     # (BB, C*H)
        acc = m[:, 0:H] * dxb[0]
        for c in range(1, C):                    # static lane slices, C small
            acc = acc + m[:, c * H:(c + 1) * H] * dxb[c]
        return acc

    def group_body(g, z):
        # One lane-dense (BB, 128) row holds dt*dX/dt for G steps x 4 stages.
        dx_grp = dx_ref[g]                       # (BB, L)

        for r in range(G):                       # static unroll (scheduler visibility)
            k = g * G + r
            base = r * 4 * C

            # Hoist the stage slices AND their (BB,1)->(BB,H) lane broadcasts
            # off the serial k1..k4 dependency chain (independent of z).
            dxb = []
            for s in range(4):
                dx_s = dx_grp[:, base + s * C: base + (s + 1) * C]   # (BB, C) static slice
                dxb.append([jnp.broadcast_to(dx_s[:, c:c + 1], (BB, H))
                            for c in range(C)])

            # torchdiffeq 'rk4' = RK4 3/8 rule; dx is pre-scaled by dt, so the
            # k's below are already dt*k_i and no scalar dt enters the kernel.
            k1 = vf(z, dxb[0])
            k2 = vf(z + k1 * third, dxb[1])
            k3 = vf(z + (k2 - k1 * third), dxb[2])
            k4 = vf(z + (k1 - k2 + k3), dxb[3])
            z = z + jnp.float32(0.125) * (k1 + jnp.float32(3.0) * (k2 + k3) + k4)

            # Store only the last OT states; padded steps (dx == 0) never store.
            out_idx = k + 1 - (T - OT)
            @pl.when(jnp.logical_and(out_idx >= 0, out_idx < OT))
            def _store(z_new=z, out_idx=out_idx):
                z_out_ref[out_idx] = z_new
        return z

    jax.lax.fori_loop(0, n_groups, group_body, z0)


def neural_cde_forecasting_forward(times, coeffs, final_index, params, output_time,
                                   batch_block=128):
    a, b, c2, d3 = coeffs                        # each (B, T-1, C)  (torch layout)
    assert a.shape[:-2] == final_index.shape, "coeff.shape[:-2] must equal final_index.shape"
    B, Tm1, C = a.shape
    T = times.shape[0]
    assert Tm1 == T - 1 and T >= 2
    assert 1 <= output_time <= T

    W_init, b_init, W_in, b_in, W_out, b_out, W_lin, b_lin = params
    H = W_init.shape[0]
    HH = W_in.shape[0]

    # ---- kernel-friendly weight layouts (pure-JAX glue) ---------------------
    w_init_t = W_init.T.astype(jnp.float32)                    # (C, H)
    b_init_r = b_init.reshape(1, H).astype(jnp.float32)
    w_in_t = W_in.T.astype(jnp.float32)                        # (H, HH)
    b_in_r = b_in.reshape(1, HH).astype(jnp.float32)
    # torch linear_out rows indexed h*C + c; re-order to c*H + h so the fused
    # (B,HH)@(HH,C*H) matmul can be contracted with dx via static lane slices.
    w_out_f = jnp.transpose(W_out.reshape(H, C, HH), (1, 0, 2)) \
                 .reshape(C * H, HH).T.astype(jnp.float32)     # (HH, C*H)
    b_out_f = b_out.reshape(H, C).T.reshape(1, C * H).astype(jnp.float32)

    # ---- dt * dX/dt at the four RK-3/8 stage offsets, packed lane-dense ------
    dt = (times[1:] - times[:-1]).astype(jnp.float32)          # (T-1,)  (per-step, non-uniform ok)
    fracs = dt[:, None] * jnp.array([0.0, 1.0 / 3.0, 2.0 / 3.0, 1.0], jnp.float32)   # (T-1, 4)
    b_tm = jnp.transpose(b, (1, 0, 2)).astype(jnp.float32)     # (T-1, B, C)
    c_tm = jnp.transpose(c2, (1, 0, 2)).astype(jnp.float32)
    d_tm = jnp.transpose(d3, (1, 0, 2)).astype(jnp.float32)
    fr = fracs[:, :, None, None]                               # (T-1, 4, 1, 1)
    deriv = b_tm[:, None] + (c_tm[:, None] + d_tm[:, None] * fr) * fr    # (T-1, 4, B, C)
    dxh = deriv * dt[:, None, None, None]                      # pre-scaled by dt

    G = max(1, 128 // (4 * C))                  # steps packed per 128-lane row
    n_steps = T - 1
    n_groups = int(pl.cdiv(n_steps, G))
    pad = n_groups * G - n_steps
    if pad:
        # dt*dx == 0 padding makes the extra RK steps exact no-ops.
        dxh = jnp.pad(dxh, ((0, pad), (0, 0), (0, 0), (0, 0)))
    L = G * 4 * C
    dx_packed = jnp.transpose(dxh.reshape(n_groups, G, 4, B, C),
                              (0, 3, 1, 2, 4)).reshape(n_groups, B, L)   # (n_groups, B, L)

    x0 = a[:, 0, :].astype(jnp.float32)                        # (B, C) == X(t0)

    # ---- batch sharding across a "parallel" grid axis (megacore / v7x 2 TCs) --
    if B > batch_block and B % batch_block == 0:
        bb = batch_block
    else:
        bb = B
    grid = (B // bb,)

    # ---- explicit scoped-VMEM limit sized to the resident set (with headroom) --
    resident_bytes = 4 * (2 * n_groups * bb * L                 # dx block (double-buffered)
                          + 2 * output_time * bb * 128          # out block (lane-padded)
                          + 2 * bb * 128                        # x0
                          + (C + 1) * 128 + (H + 1) * 128 + (HH + 1) * max(C * H, 128))
    vmem_limit = int(min(64 * 2 ** 20, max(8 * 2 ** 20, 3 * resident_bytes)))

    kernel = functools.partial(_cde_kernel, BB=bb, H=H, C=C, T=T,
                               OT=output_time, G=G, n_groups=n_groups)

    def full(shape):
        return pl.BlockSpec(shape, lambda i, _s=shape: (0,) * len(_s))

    z_sel = pl.pallas_call(
        kernel,
        out_shape=jax.ShapeDtypeStruct((output_time, B, H), jnp.float32),
        grid=grid,
        in_specs=[
            pl.BlockSpec((bb, C), lambda i: (i, 0)),                  # x0
            pl.BlockSpec((n_groups, bb, L), lambda i: (0, i, 0)),     # packed dt*dX/dt
            full((C, H)), full((1, H)),                               # W_init^T, b_init
            full((H, HH)), full((1, HH)),                             # W_in^T,  b_in
            full((HH, C * H)), full((1, C * H)),                      # W_out (fused), b_out (fused)
        ],
        out_specs=pl.BlockSpec((output_time, bb, H), lambda i: (0, i, 0)),
        compiler_params=pltpu.CompilerParams(
            dimension_semantics=("parallel",),
            vmem_limit_bytes=vmem_limit),
    )(x0, dx_packed, w_init_t, b_init_r, w_in_t, b_in_r, w_out_f, b_out_f)

    # readout: one batched XLA matmul on the emitted `output_time` hidden states
    z_bt = jnp.transpose(z_sel, (1, 0, 2))                     # (B, output_time, H)
    pred_y = (jnp.matmul(z_bt, W_lin.T.astype(jnp.float32),
                         precision=jax.lax.Precision.HIGHEST)
              + b_lin.astype(jnp.float32))                     # (B, output_time, C)
    return pred_y


def reference_forward(times, coeffs, params, output_time):
    """Pure-JAX reference mirroring the PyTorch semantics (for validation)."""
    a, b, c2, d3 = coeffs
    W_init, b_init, W_in, b_in, W_out, b_out, W_lin, b_lin = params
    B, Tm1, C = a.shape
    H = W_init.shape[0]
    hp = lambda x, w, bb: jnp.dot(x, w.T, precision=jax.lax.Precision.HIGHEST) + bb

    z = hp(a[:, 0, :], W_init, b_init)                         # z0, (B, H)

    def vf_mat(zz):
        h1 = jax.nn.relu(hp(zz, W_in, b_in))
        return jnp.tanh(hp(h1, W_out, b_out)).reshape(B, H, C)

    zs = [z]
    for k in range(Tm1):
        dt = times[k + 1] - times[k]

        def dxdt(frac):
            return b[:, k, :] + (c2[:, k, :] + d3[:, k, :] * frac) * frac

        def f(zz, frac):
            return jnp.einsum('bhc,bc->bh', vf_mat(zz), dxdt(frac))

        k1 = f(z, 0.0)
        k2 = f(z + dt * k1 / 3.0, dt / 3.0)
        k3 = f(z + dt * (k2 - k1 / 3.0), 2.0 * dt / 3.0)
        k4 = f(z + dt * (k1 - k2 + k3), dt)
        z = z + dt * 0.125 * (k1 + 3.0 * (k2 + k3) + k4)
        zs.append(z)

    z_t = jnp.stack(zs, axis=1)                                # (B, T, H)
    return hp(z_t[:, z_t.shape[1] - output_time:, :], W_lin, b_lin)


if __name__ == "__main__":
    B, T, C, H, HH = 8, 8, 4, 32, 32          # batch, times, input_ch, hidden, hidden_hidden
    output_time = 4

    key = jax.random.PRNGKey(0)
    ks = jax.random.split(key, 12)

    def lin_init(k, shape, fan_in):
        bound = 1.0 / np.sqrt(fan_in)
        return jax.random.uniform(k, shape, jnp.float32, -bound, bound)

    times = jnp.linspace(0.0, 1.0, T).astype(jnp.float32)
    coeff_a = jax.random.normal(ks[0], (B, T - 1, C), jnp.float32)
    coeff_b = jax.random.normal(ks[1], (B, T - 1, C), jnp.float32)
    coeff_c = jax.random.normal(ks[2], (B, T - 1, C), jnp.float32)
    coeff_d = jax.random.normal(ks[3], (B, T - 1, C), jnp.float32)
    coeffs = (coeff_a, coeff_b, coeff_c, coeff_d)
    final_index = jnp.full((B,), T - 1, dtype=jnp.int32)

    # initial_network: Linear(C, H); func: FinalTanh(Linear(H,HH), Linear(HH,H*C));
    # readout: Linear(H, C)    -- PyTorch default uniform(-1/sqrt(fan_in), ...) init
    W_init = lin_init(ks[4], (H, C), C);        b_init = lin_init(ks[5], (H,), C)
    W_in   = lin_init(ks[6], (HH, H), H);       b_in   = lin_init(ks[7], (HH,), H)
    W_out  = lin_init(ks[8], (H * C, HH), HH);  b_out  = lin_init(ks[9], (H * C,), HH)
    W_lin  = lin_init(ks[10], (C, H), H);       b_lin  = lin_init(ks[11], (C,), H)
    params = (W_init, b_init, W_in, b_in, W_out, b_out, W_lin, b_lin)

    pred_y = neural_cde_forecasting_forward(times, coeffs, final_index, params, output_time)
    pred_y = jax.block_until_ready(pred_y)

    ref = reference_forward(times, coeffs, params, output_time)
    np.testing.assert_allclose(np.asarray(pred_y), np.asarray(ref), rtol=2e-2, atol=2e-2)
    assert pred_y.shape == (B, output_time, C)
    print("KERNEL_OK")
</pallas_src>

<mosaic_0001>
module attributes {stable_mosaic.version = 11 : i64} {
  func.func @_cde_kernel(%arg0: i32, %arg1: memref<8x4xf32, #tpu.memory_space<vmem>>, %arg2: memref<1x8x128xf32, #tpu.memory_space<vmem>>, %arg3: memref<4x32xf32, #tpu.memory_space<vmem>>, %arg4: memref<1x32xf32, #tpu.memory_space<vmem>>, %arg5: memref<32x32xf32, #tpu.memory_space<vmem>>, %arg6: memref<1x32xf32, #tpu.memory_space<vmem>>, %arg7: memref<32x128xf32, #tpu.memory_space<vmem>>, %arg8: memref<1x128xf32, #tpu.memory_space<vmem>>, %arg9: memref<4x8x32xf32, #tpu.memory_space<vmem>>) attributes {dimension_semantics = [#tpu.dimension_semantics<parallel>], iteration_bounds = array<i64: 1>, scalar_prefetch = 0 : i64, scratch_operands = 0 : i64, tpu.core_type = #tpu.core_type<tc>, window_params = [{transform_indices = @transform_0, window_bounds = array<i64: 8, 4>}, {transform_indices = @transform_1, window_bounds = array<i64: 1, 8, 128>}, {pipeline_mode = #tpu.pipeline_mode<synchronous>, transform_indices = @transform_2, window_bounds = array<i64: 4, 32>}, {pipeline_mode = #tpu.pipeline_mode<synchronous>, transform_indices = @transform_3, window_bounds = array<i64: 1, 32>}, {pipeline_mode = #tpu.pipeline_mode<synchronous>, transform_indices = @transform_4, window_bounds = array<i64: 32, 32>}, {pipeline_mode = #tpu.pipeline_mode<synchronous>, transform_indices = @transform_5, window_bounds = array<i64: 1, 32>}, {pipeline_mode = #tpu.pipeline_mode<synchronous>, transform_indices = @transform_6, window_bounds = array<i64: 32, 128>}, {pipeline_mode = #tpu.pipeline_mode<synchronous>, transform_indices = @transform_7, window_bounds = array<i64: 1, 128>}, {transform_indices = @transform_8, window_bounds = array<i64: 4, 8, 32>}]} {
    %c0 = arith.constant 0 : index
    %c0_0 = arith.constant 0 : index
    %0 = vector.load %arg3[%c0, %c0_0] : memref<4x32xf32, #tpu.memory_space<vmem>>, vector<4x32xf32>
    %c0_1 = arith.constant 0 : index
    %c0_2 = arith.constant 0 : index
    %1 = vector.load %arg4[%c0_1, %c0_2] : memref<1x32xf32, #tpu.memory_space<vmem>>, vector<1x32xf32>
    %c0_3 = arith.constant 0 : index
    %c0_4 = arith.constant 0 : index
    %2 = vector.load %arg5[%c0_3, %c0_4] : memref<32x32xf32, #tpu.memory_space<vmem>>, vector<32x32xf32>
    %c0_5 = arith.constant 0 : index
    %c0_6 = arith.constant 0 : index
    %3 = vector.load %arg6[%c0_5, %c0_6] : memref<1x32xf32, #tpu.memory_space<vmem>>, vector<1x32xf32>
    %c0_7 = arith.constant 0 : index
    %c0_8 = arith.constant 0 : index
    %4 = vector.load %arg7[%c0_7, %c0_8] : memref<32x128xf32, #tpu.memory_space<vmem>>, vector<32x128xf32>
    %c0_9 = arith.constant 0 : index
    %c0_10 = arith.constant 0 : index
    %5 = vector.load %arg8[%c0_9, %c0_10] : memref<1x128xf32, #tpu.memory_space<vmem>>, vector<1x128xf32>
    %c0_11 = arith.constant 0 : index
    %c0_12 = arith.constant 0 : index
    %6 = vector.load %arg1[%c0_11, %c0_12] : memref<8x4xf32, #tpu.memory_space<vmem>>, vector<8x4xf32>
    %cst = arith.constant dense<0.000000e+00> : vector<8x32xf32>
    %7 = tpu.matmul %6, %0, %cst {dimension_numbers = #tpu.dot_dimension_numbers<[1], [0], [0], [1], [0, 0, 1, 1], [], []>} : vector<8x4xf32>, vector<4x32xf32>, vector<8x32xf32> -> vector<8x32xf32>
    %8 = vector.broadcast %1 : vector<1x32xf32> to vector<8x32xf32>
    %9 = arith.addf %7, %8 : vector<8x32xf32>
    %cst_13 = arith.constant 0.333333343 : f32
    %c0_i32 = arith.constant 0 : i32
    %10 = arith.index_cast %c0_i32 : i32 to index
    %c0_14 = arith.constant 0 : index
    %c0_15 = arith.constant 0 : index
    %11 = vector.load %arg2[%10, %c0_14, %c0_15] : memref<1x8x128xf32, #tpu.memory_space<vmem>>, vector<1x8x128xf32>
    %12 = vector.shape_cast %11 : vector<1x8x128xf32> to vector<8x128xf32>
    %c8_i32 = arith.constant 8 : i32
    %13 = arith.muli %c0_i32, %c8_i32 : i32
    %c0_i32_16 = arith.constant 0 : i32
    %14 = arith.addi %13, %c0_i32_16 : i32
    %15 = vector.extract_strided_slice %12 {offsets = [0, 0], sizes = [8, 4], strides = [1, 1]} : vector<8x128xf32> to vector<8x4xf32>
    %16 = vector.extract_strided_slice %15 {offsets = [0, 0], sizes = [8, 1], strides = [1, 1]} : vector<8x4xf32> to vector<8x1xf32>
    %17 = vector.shape_cast %16 : vector<8x1xf32> to vector<8x1xf32>
    %18 = vector.broadcast %17 : vector<8x1xf32> to vector<8x32xf32>
    %19 = vector.extract_strided_slice %15 {offsets = [0, 1], sizes = [8, 1], strides = [1, 1]} : vector<8x4xf32> to vector<8x1xf32>
    %20 = vector.shape_cast %19 : vector<8x1xf32> to vector<8x1xf32>
    %21 = vector.broadcast %20 : vector<8x1xf32> to vector<8x32xf32>
    %22 = vector.extract_strided_slice %15 {offsets = [0, 2], sizes = [8, 1], strides = [1, 1]} : vector<8x4xf32> to vector<8x1xf32>
    %23 = vector.shape_cast %22 : vector<8x1xf32> to vector<8x1xf32>
    %24 = vector.broadcast %23 : vector<8x1xf32> to vector<8x32xf32>
    %25 = vector.extract_strided_slice %15 {offsets = [0, 3], sizes = [8, 1], strides = [1, 1]} : vector<8x4xf32> to vector<8x1xf32>
    %26 = vector.shape_cast %25 : vector<8x1xf32> to vector<8x1xf32>
    %27 = vector.broadcast %26 : vector<8x1xf32> to vector<8x32xf32>
    %28 = vector.extract_strided_slice %12 {offsets = [0, 4], sizes = [8, 4], strides = [1, 1]} : vector<8x128xf32> to vector<8x4xf32>
    %29 = vector.extract_strided_slice %28 {offsets = [0, 0], sizes = [8, 1], strides = [1, 1]} : vector<8x4xf32> to vector<8x1xf32>
    %30 = vector.shape_cast %29 : vector<8x1xf32> to vector<8x1xf32>
    %31 = vector.broadcast %30 : vector<8x1xf32> to vector<8x32xf32>
    %32 = vector.extract_strided_slice %28 {offsets = [0, 1], sizes = [8, 1], strides = [1, 1]} : vector<8x4xf32> to vector<8x1xf32>
    %33 = vector.shape_cast %32 : vector<8x1xf32> to vector<8x1xf32>
    %34 = vector.broadcast %33 : vector<8x1xf32> to vector<8x32xf32>
    %35 = vector.extract_strided_slice %28 {offsets = [0, 2], sizes = [8, 1], strides = [1, 1]} : vector<8x4xf32> to vector<8x1xf32>
    %36 = vector.shape_cast %35 : vector<8x1xf32> to vector<8x1xf32>
    %37 = vector.broadcast %36 : vector<8x1xf32> to vector<8x32xf32>
    %38 = vector.extract_strided_slice %28 {offsets = [0, 3], sizes = [8, 1], strides = [1, 1]} : vector<8x4xf32> to vector<8x1xf32>
    %39 = vector.shape_cast %38 : vector<8x1xf32> to vector<8x1xf32>
    %40 = vector.broadcast %39 : vector<8x1xf32> to vector<8x32xf32>
    %41 = vector.extract_strided_slice %12 {offsets = [0, 8], sizes = [8, 4], strides = [1, 1]} : vector<8x128xf32> to vector<8x4xf32>
    %42 = vector.extract_strided_slice %41 {offsets = [0, 0], sizes = [8, 1], strides = [1, 1]} : vector<8x4xf32> to vector<8x1xf32>
    %43 = vector.shape_cast %42 : vector<8x1xf32> to vector<8x1xf32>
    %44 = vector.broadcast %43 : vector<8x1xf32> to vector<8x32xf32>
    %45 = vector.extract_strided_slice %41 {offsets = [0, 1], sizes = [8, 1], strides = [1, 1]} : vector<8x4xf32> to vector<8x1xf32>
    %46 = vector.shape_cast %45 : vector<8x1xf32> to vector<8x1xf32>
    %47 = vector.broadcast %46 : vector<8x1xf32> to vector<8x32xf32>
    %48 = vector.extract_strided_slice %41 {offsets = [0, 2], sizes = [8, 1], strides = [1, 1]} : vector<8x4xf32> to vector<8x1xf32>
    %49 = vector.shape_cast %48 : vector<8x1xf32> to vector<8x1xf32>
    %50 = vector.broadcast %49 : vector<8x1xf32> to vector<8x32xf32>
    %51 = vector.extract_strided_slice %41 {offsets = [0, 3], sizes = [8, 1], strides = [1, 1]} : vector<8x4xf32> to vector<8x1xf32>
    %52 = vector.shape_cast %51 : vector<8x1xf32> to vector<8x1xf32>
    %53 = vector.broadcast %52 : vector<8x1xf32> to vector<8x32xf32>
    %54 = vector.extract_strided_slice %12 {offsets = [0, 12], sizes = [8, 4], strides = [1, 1]} : vector<8x128xf32> to vector<8x4xf32>
    %55 = vector.extract_strided_slice %54 {offsets = [0, 0], sizes = [8, 1], strides = [1, 1]} : vector<8x4xf32> to vector<8x1xf32>
    %56 = vector.shape_cast %55 : vector<8x1xf32> to vector<8x1xf32>
    %57 = vector.broadcast %56 : vector<8x1xf32> to vector<8x32xf32>
    %58 = vector.extract_strided_slice %54 {offsets = [0, 1], sizes = [8, 1], strides = [1, 1]} : vector<8x4xf32> to vector<8x1xf32>
    %59 = vector.shape_cast %58 : vector<8x1xf32> to vector<8x1xf32>
    %60 = vector.broadcast %59 : vector<8x1xf32> to vector<8x32xf32>
    %61 = vector.extract_strided_slice %54 {offsets = [0, 2], sizes = [8, 1], strides = [1, 1]} : vector<8x4xf32> to vector<8x1xf32>
    %62 = vector.shape_cast %61 : vector<8x1xf32> to vector<8x1xf32>
    %63 = vector.broadcast %62 : vector<8x1xf32> to vector<8x32xf32>
    %64 = vector.extract_strided_slice %54 {offsets = [0, 3], sizes = [8, 1], strides = [1, 1]} : vector<8x4xf32> to vector<8x1xf32>
    %65 = vector.shape_cast %64 : vector<8x1xf32> to vector<8x1xf32>
    %66 = vector.broadcast %65 : vector<8x1xf32> to vector<8x32xf32>
    %cst_17 = arith.constant dense<0.000000e+00> : vector<8x32xf32>
    %67 = tpu.matmul %9, %2, %cst_17 {dimension_numbers = #tpu.dot_dimension_numbers<[1], [0], [0], [1], [0, 0, 1, 1], [], []>} : vector<8x32xf32>, vector<32x32xf32>, vector<8x32xf32> -> vector<8x32xf32>
    %68 = vector.broadcast %3 : vector<1x32xf32> to vector<8x32xf32>
    %69 = arith.addf %67, %68 : vector<8x32xf32>
    %cst_18 = arith.constant 0.000000e+00 : f32
    %70 = vector.broadcast %cst_18 : f32 to vector<8x32xf32>
    %71 = arith.maximumf %69, %70 : vector<8x32xf32>
    %cst_19 = arith.constant dense<0.000000e+00> : vector<8x128xf32>
    %72 = tpu.matmul %71, %4, %cst_19 {dimension_numbers = #tpu.dot_dimension_numbers<[1], [0], [0], [1], [0, 0, 1, 1], [], []>} : vector<8x32xf32>, vector<32x128xf32>, vector<8x128xf32> -> vector<8x128xf32>
    %73 = vector.broadcast %5 : vector<1x128xf32> to vector<8x128xf32>
    %74 = arith.addf %72, %73 : vector<8x128xf32>
    %75 = math.tanh %74 : vector<8x128xf32>
    %76 = vector.extract_strided_slice %75 {offsets = [0, 0], sizes = [8, 32], strides = [1, 1]} : vector<8x128xf32> to vector<8x32xf32>
    %77 = arith.mulf %76, %18 : vector<8x32xf32>
    %78 = vector.extract_strided_slice %75 {offsets = [0, 32], sizes = [8, 32], strides = [1, 1]} : vector<8x128xf32> to vector<8x32xf32>
    %79 = arith.mulf %78, %21 : vector<8x32xf32>
    %80 = arith.addf %77, %79 : vector<8x32xf32>
    %81 = vector.extract_strided_slice %75 {offsets = [0, 64], sizes = [8, 32], strides = [1, 1]} : vector<8x128xf32> to vector<8x32xf32>
    %82 = arith.mulf %81, %24 : vector<8x32xf32>
    %83 = arith.addf %80, %82 : vector<8x32xf32>
    %84 = vector.extract_strided_slice %75 {offsets = [0, 96], sizes = [8, 32], strides = [1, 1]} : vector<8x128xf32> to vector<8x32xf32>
    %85 = arith.mulf %84, %27 : vector<8x32xf32>
    %86 = arith.addf %83, %85 : vector<8x32xf32>
    %87 = vector.broadcast %cst_13 : f32 to vector<8x32xf32>
    %88 = arith.mulf %86, %87 : vector<8x32xf32>
    %89 = arith.addf %9, %88 : vector<8x32xf32>
    %cst_20 = arith.constant dense<0.000000e+00> : vector<8x32xf32>
    %90 = tpu.matmul %89, %2, %cst_20 {dimension_numbers = #tpu.dot_dimension_numbers<[1], [0], [0], [1], [0, 0, 1, 1], [], []>} : vector<8x32xf32>, vector<32x32xf32>, vector<8x32xf32> -> vector<8x32xf32>
    %91 = vector.broadcast %3 : vector<1x32xf32> to vector<8x32xf32>
    %92 = arith.addf %90, %91 : vector<8x32xf32>
    %cst_21 = arith.constant 0.000000e+00 : f32
    %93 = vector.broadcast %cst_21 : f32 to vector<8x32xf32>
    %94 = arith.maximumf %92, %93 : vector<8x32xf32>
    %cst_22 = arith.constant dense<0.000000e+00> : vector<8x128xf32>
    %95 = tpu.matmul %94, %4, %cst_22 {dimension_numbers = #tpu.dot_dimension_numbers<[1], [0], [0], [1], [0, 0, 1, 1], [], []>} : vector<8x32xf32>, vector<32x128xf32>, vector<8x128xf32> -> vector<8x128xf32>
    %96 = vector.broadcast %5 : vector<1x128xf32> to vector<8x128xf32>
    %97 = arith.addf %95, %96 : vector<8x128xf32>
    %98 = math.tanh %97 : vector<8x128xf32>
    %99 = vector.extract_strided_slice %98 {offsets = [0, 0], sizes = [8, 32], strides = [1, 1]} : vector<8x128xf32> to vector<8x32xf32>
    %100 = arith.mulf %99, %31 : vector<8x32xf32>
    %101 = vector.extract_strided_slice %98 {offsets = [0, 32], sizes = [8, 32], strides = [1, 1]} : vector<8x128xf32> to vector<8x32xf32>
    %102 = arith.mulf %101, %34 : vector<8x32xf32>
    %103 = arith.addf %100, %102 : vector<8x32xf32>
    %104 = vector.extract_strided_slice %98 {offsets = [0, 64], sizes = [8, 32], strides = [1, 1]} : vector<8x128xf32> to vector<8x32xf32>
    %105 = arith.mulf %104, %37 : vector<8x32xf32>
    %106 = arith.addf %103, %105 : vector<8x32xf32>
    %107 = vector.extract_strided_slice %98 {offsets = [0, 96], sizes = [8, 32], strides = [1, 1]} : vector<8x128xf32> to vector<8x32xf32>
    %108 = arith.mulf %107, %40 : vector<8x32xf32>
    %109 = arith.addf %106, %108 : vector<8x32xf32>
    %110 = vector.broadcast %cst_13 : f32 to vector<8x32xf32>
    %111 = arith.mulf %86, %110 : vector<8x32xf32>
    %112 = arith.subf %109, %111 : vector<8x32xf32>
    %113 = arith.addf %9, %112 : vector<8x32xf32>
    %cst_23 = arith.constant dense<0.000000e+00> : vector<8x32xf32>
    %114 = tpu.matmul %113, %2, %cst_23 {dimension_numbers = #tpu.dot_dimension_numbers<[1], [0], [0], [1], [0, 0, 1, 1], [], []>} : vector<8x32xf32>, vector<32x32xf32>, vector<8x32xf32> -> vector<8x32xf32>
    %115 = vector.broadcast %3 : vector<1x32xf32> to vector<8x32xf32>
    %116 = arith.addf %114, %115 : vector<8x32xf32>
    %cst_24 = arith.constant 0.000000e+00 : f32
    %117 = vector.broadcast %cst_24 : f32 to vector<8x32xf32>
    %118 = arith.maximumf %116, %117 : vector<8x32xf32>
    %cst_25 = arith.constant dense<0.000000e+00> : vector<8x128xf32>
    %119 = tpu.matmul %118, %4, %cst_25 {dimension_numbers = #tpu.dot_dimension_numbers<[1], [0], [0], [1], [0, 0, 1, 1], [], []>} : vector<8x32xf32>, vector<32x128xf32>, vector<8x128xf32> -> vector<8x128xf32>
    %120 = vector.broadcast %5 : vector<1x128xf32> to vector<8x128xf32>
    %121 = arith.addf %119, %120 : vector<8x128xf32>
    %122 = math.tanh %121 : vector<8x128xf32>
    %123 = vector.extract_strided_slice %122 {offsets = [0, 0], sizes = [8, 32], strides = [1, 1]} : vector<8x128xf32> to vector<8x32xf32>
    %124 = arith.mulf %123, %44 : vector<8x32xf32>
    %125 = vector.extract_strided_slice %122 {offsets = [0, 32], sizes = [8, 32], strides = [1, 1]} : vector<8x128xf32> to vector<8x32xf32>
    %126 = arith.mulf %125, %47 : vector<8x32xf32>
    %127 = arith.addf %124, %126 : vector<8x32xf32>
    %128 = vector.extract_strided_slice %122 {offsets = [0, 64], sizes = [8, 32], strides = [1, 1]} : vector<8x128xf32> to vector<8x32xf32>
    %129 = arith.mulf %128, %50 : vector<8x32xf32>
    %130 = arith.addf %127, %129 : vector<8x32xf32>
    %131 = vector.extract_strided_slice %122 {offsets = [0, 96], sizes = [8, 32], strides = [1, 1]} : vector<8x128xf32> to vector<8x32xf32>
    %132 = arith.mulf %131, %53 : vector<8x32xf32>
    %133 = arith.addf %130, %132 : vector<8x32xf32>
    %134 = arith.subf %86, %109 : vector<8x32xf32>
    %135 = arith.addf %134, %133 : vector<8x32xf32>
    %136 = arith.addf %9, %135 : vector<8x32xf32>
    %cst_26 = arith.constant dense<0.000000e+00> : vector<8x32xf32>
    %137 = tpu.matmul %136, %2, %cst_26 {dimension_numbers = #tpu.dot_dimension_numbers<[1], [0], [0], [1], [0, 0, 1, 1], [], []>} : vector<8x32xf32>, vector<32x32xf32>, vector<8x32xf32> -> vector<8x32xf32>
    %138 = vector.broadcast %3 : vector<1x32xf32> to vector<8x32xf32>
    %139 = arith.addf %137, %138 : vector<8x32xf32>
    %cst_27 = arith.constant 0.000000e+00 : f32
    %140 = vector.broadcast %cst_27 : f32 to vector<8x32xf32>
    %141 = arith.maximumf %139, %140 : vector<8x32xf32>
    %cst_28 = arith.constant dense<0.000000e+00> : vector<8x128xf32>
    %142 = tpu.matmul %141, %4, %cst_28 {dimension_numbers = #tpu.dot_dimension_numbers<[1], [0], [0], [1], [0, 0, 1, 1], [], []>} : vector<8x32xf32>, vector<32x128xf32>, vector<8x128xf32> -> vector<8x128xf32>
    %143 = vector.broadcast %5 : vector<1x128xf32> to vector<8x128xf32>
    %144 = arith.addf %142, %143 : vector<8x128xf32>
    %145 = math.tanh %144 : vector<8x128xf32>
    %146 = vector.extract_strided_slice %145 {offsets = [0, 0], sizes = [8, 32], strides = [1, 1]} : vector<8x128xf32> to vector<8x32xf32>
    %147 = arith.mulf %146, %57 : vector<8x32xf32>
    %148 = vector.extract_strided_slice %145 {offsets = [0, 32], sizes = [8, 32], strides = [1, 1]} : vector<8x128xf32> to vector<8x32xf32>
    %149 = arith.mulf %148, %60 : vector<8x32xf32>
    %150 = arith.addf %147, %149 : vector<8x32xf32>
    %151 = vector.extract_strided_slice %145 {offsets = [0, 64], sizes = [8, 32], strides = [1, 1]} : vector<8x128xf32> to vector<8x32xf32>
    %152 = arith.mulf %151, %63 : vector<8x32xf32>
    %153 = arith.addf %150, %152 : vector<8x32xf32>
    %154 = vector.extract_strided_slice %145 {offsets = [0, 96], sizes = [8, 32], strides = [1, 1]} : vector<8x128xf32> to vector<8x32xf32>
    %155 = arith.mulf %154, %66 : vector<8x32xf32>
    %156 = arith.addf %153, %155 : vector<8x32xf32>
    %157 = arith.addf %109, %133 : vector<8x32xf32>
    %cst_29 = arith.constant 3.000000e+00 : f32
    %158 = vector.broadcast %cst_29 : f32 to vector<8x32xf32>
    %159 = arith.mulf %158, %157 : vector<8x32xf32>
    %160 = arith.addf %86, %159 : vector<8x32xf32>
    %161 = arith.addf %160, %156 : vector<8x32xf32>
    %cst_30 = arith.constant 1.250000e-01 : f32
    %162 = vector.broadcast %cst_30 : f32 to vector<8x32xf32>
    %163 = arith.mulf %162, %161 : vector<8x32xf32>
    %164 = arith.addf %9, %163 : vector<8x32xf32>
    %c1_i32 = arith.constant 1 : i32
    %165 = arith.addi %14, %c1_i32 : i32
    %c4_i32 = arith.constant 4 : i32
    %166 = arith.subi %165, %c4_i32 : i32
    %c0_i32_31 = arith.constant 0 : i32
    %167 = arith.cmpi sge, %166, %c0_i32_31 : i32
    %c4_i32_32 = arith.constant 4 : i32
    %168 = arith.cmpi slt, %166, %c4_i32_32 : i32
    %169 = arith.andi %167, %168 : i1
    %170 = arith.extui %169 : i1 to i32
    %c0_i32_33 = arith.constant 0 : i32
    %171 = arith.cmpi ne, %170, %c0_i32_33 : i32
    scf.if %171 {
      %1285 = arith.index_cast %166 : i32 to index
      %c0_177 = arith.constant 0 : index
      %c0_178 = arith.constant 0 : index
      %1286 = vector.load %arg9[%1285, %c0_177, %c0_178] : memref<4x8x32xf32, #tpu.memory_space<vmem>>, vector<1x8x32xf32>
      %1287 = vector.shape_cast %1286 : vector<1x8x32xf32> to vector<8x32xf32>
      %1288 = vector.shape_cast %164 : vector<8x32xf32> to vector<1x8x32xf32>
      tpu.vector_store %arg9[%1285, %c0_177, %c0_178], %1288 {strides = array<i32>} : memref<4x8x32xf32, #tpu.memory_space<vmem>>, vector<1x8x32xf32>,
    } else {
    }
    %c8_i32_34 = arith.constant 8 : i32
    %172 = arith.muli %c0_i32, %c8_i32_34 : i32
    %c1_i32_35 = arith.constant 1 : i32
    %173 = arith.addi %172, %c1_i32_35 : i32
    %174 = vector.extract_strided_slice %12 {offsets = [0, 16], sizes = [8, 4], strides = [1, 1]} : vector<8x128xf32> to vector<8x4xf32>
    %175 = vector.extract_strided_slice %174 {offsets = [0, 0], sizes = [8, 1], strides = [1, 1]} : vector<8x4xf32> to vector<8x1xf32>
    %176 = vector.shape_cast %175 : vector<8x1xf32> to vector<8x1xf32>
    %177 = vector.broadcast %176 : vector<8x1xf32> to vector<8x32xf32>
    %178 = vector.extract_strided_slice %174 {offsets = [0, 1], sizes = [8, 1], strides = [1, 1]} : vector<8x4xf32> to vector<8x1xf32>
    %179 = vector.shape_cast %178 : vector<8x1xf32> to vector<8x1xf32>
    %180 = vector.broadcast %179 : vector<8x1xf32> to vector<8x32xf32>
    %181 = vector.extract_strided_slice %174 {offsets = [0, 2], sizes = [8, 1], strides = [1, 1]} : vector<8x4xf32> to vector<8x1xf32>
    %182 = vector.shape_cast %181 : vector<8x1xf32> to vector<8x1xf32>
    %183 = vector.broadcast %182 : vector<8x1xf32> to vector<8x32xf32>
    %184 = vector.extract_strided_slice %174 {offsets = [0, 3], sizes = [8, 1], strides = [1, 1]} : vector<8x4xf32> to vector<8x1xf32>
    %185 = vector.shape_cast %184 : vector<8x1xf32> to vector<8x1xf32>
    %186 = vector.broadcast %185 : vector<8x1xf32> to vector<8x32xf32>
    %187 = vector.extract_strided_slice %12 {offsets = [0, 20], sizes = [8, 4], strides = [1, 1]} : vector<8x128xf32> to vector<8x4xf32>
    %188 = vector.extract_strided_slice %187 {offsets = [0, 0], sizes = [8, 1], strides = [1, 1]} : vector<8x4xf32> to vector<8x1xf32>
    %189 = vector.shape_cast %188 : vector<8x1xf32> to vector<8x1xf32>
    %190 = vector.broadcast %189 : vector<8x1xf32> to vector<8x32xf32>
    %191 = vector.extract_strided_slice %187 {offsets = [0, 1], sizes = [8, 1], strides = [1, 1]} : vector<8x4xf32> to vector<8x1xf32>
    %192 = vector.shape_cast %191 : vector<8x1xf32> to vector<8x1xf32>
    %193 = vector.broadcast %192 : vector<8x1xf32> to vector<8x32xf32>
    %194 = vector.extract_strided_slice %187 {offsets = [0, 2], sizes = [8, 1], strides = [1, 1]} : vector<8x4xf32> to vector<8x1xf32>
    %195 = vector.shape_cast %194 : vector<8x1xf32> to vector<8x1xf32>
    %196 = vector.broadcast %195 : vector<8x1xf32> to vector<8x32xf32>
    %197 = vector.extract_strided_slice %187 {offsets = [0, 3], sizes = [8, 1], strides = [1, 1]} : vector<8x4xf32> to vector<8x1xf32>
    %198 = vector.shape_cast %197 : vector<8x1xf32> to vector<8x1xf32>
    %199 = vector.broadcast %198 : vector<8x1xf32> to vector<8x32xf32>
    %200 = vector.extract_strided_slice %12 {offsets = [0, 24], sizes = [8, 4], strides = [1, 1]} : vector<8x128xf32> to vector<8x4xf32>
    %201 = vector.extract_strided_slice %200 {offsets = [0, 0], sizes = [8, 1], strides = [1, 1]} : vector<8x4xf32> to vector<8x1xf32>
    %202 = vector.shape_cast %201 : vector<8x1xf32> to vector<8x1xf32>
    %203 = vector.broadcast %202 : vector<8x1xf32> to vector<8x32xf32>
    %204 = vector.extract_strided_slice %200 {offsets = [0, 1], sizes = [8, 1], strides = [1, 1]} : vector<8x4xf32> to vector<8x1xf32>
    %205 = vector.shape_cast %204 : vector<8x1xf32> to vector<8x1xf32>
    %206 = vector.broadcast %205 : vector<8x1xf32> to vector<8x32xf32>
    %207 = vector.extract_strided_slice %200 {offsets = [0, 2], sizes = [8, 1], strides = [1, 1]} : vector<8x4xf32> to vector<8x1xf32>
    %208 = vector.shape_cast %207 : vector<8x1xf32> to vector<8x1xf32>
    %209 = vector.broadcast %208 : vector<8x1xf32> to vector<8x32xf32>
    %210 = vector.extract_strided_slice %200 {offsets = [0, 3], sizes = [8, 1], strides = [1, 1]} : vector<8x4xf32> to vector<8x1xf32>
    %211 = vector.shape_cast %210 : vector<8x1xf32> to vector<8x1xf32>
    %212 = vector.broadcast %211 : vector<8x1xf32> to vector<8x32xf32>
    %213 = vector.extract_strided_slice %12 {offsets = [0, 28], sizes = [8, 4], strides = [1, 1]} : vector<8x128xf32> to vector<8x4xf32>
    %214 = vector.extract_strided_slice %213 {offsets = [0, 0], sizes = [8, 1], strides = [1, 1]} : vector<8x4xf32> to vector<8x1xf32>
    %215 = vector.shape_cast %214 : vector<8x1xf32> to vector<8x1xf32>
    %216 = vector.broadcast %215 : vector<8x1xf32> to vector<8x32xf32>
    %217 = vector.extract_strided_slice %213 {offsets = [0, 1], sizes = [8, 1], strides = [1, 1]} : vector<8x4xf32> to vector<8x1xf32>
    %218 = vector.shape_cast %217 : vector<8x1xf32> to vector<8x1xf32>
    %219 = vector.broadcast %218 : vector<8x1xf32> to vector<8x32xf32>
    %220 = vector.extract_strided_slice %213 {offsets = [0, 2], sizes = [8, 1], strides = [1, 1]} : vector<8x4xf32> to vector<8x1xf32>
    %221 = vector.shape_cast %220 : vector<8x1xf32> to vector<8x1xf32>
    %222 = vector.broadcast %221 : vector<8x1xf32> to vector<8x32xf32>
    %223 = vector.extract_strided_slice %213 {offsets = [0, 3], sizes = [8, 1], strides = [1, 1]} : vector<8x4xf32> to vector<8x1xf32>
    %224 = vector.shape_cast %223 : vector<8x1xf32> to vector<8x1xf32>
    %225 = vector.broadcast %224 : vector<8x1xf32> to vector<8x32xf32>
    %cst_36 = arith.constant dense<0.000000e+00> : vector<8x32xf32>
    %226 = tpu.matmul %164, %2, %cst_36 {dimension_numbers = #tpu.dot_dimension_numbers<[1], [0], [0], [1], [0, 0, 1, 1], [], []>} : vector<8x32xf32>, vector<32x32xf32>, vector<8x32xf32> -> vector<8x32xf32>
    %227 = vector.broadcast %3 : vector<1x32xf32> to vector<8x32xf32>
    %228 = arith.addf %226, %227 : vector<8x32xf32>
    %cst_37 = arith.constant 0.000000e+00 : f32
    %229 = vector.broadcast %cst_37 : f32 to vector<8x32xf32>
    %230 = arith.maximumf %228, %229 : vector<8x32xf32>
    %cst_38 = arith.constant dense<0.000000e+00> : vector<8x128xf32>
    %231 = tpu.matmul %230, %4, %cst_38 {dimension_numbers = #tpu.dot_dimension_numbers<[1], [0], [0], [1], [0, 0, 1, 1], [], []>} : vector<8x32xf32>, vector<32x128xf32>, vector<8x128xf32> -> vector<8x128xf32>
    %232 = vector.broadcast %5 : vector<1x128xf32> to vector<8x128xf32>
    %233 = arith.addf %231, %232 : vector<8x128xf32>
    %234 = math.tanh %233 : vector<8x128xf32>
    %235 = vector.extract_strided_slice %234 {offsets = [0, 0], sizes = [8, 32], strides = [1, 1]} : vector<8x128xf32> to vector<8x32xf32>
    %236 = arith.mulf %235, %177 : vector<8x32xf32>
    %237 = vector.extract_strided_slice %234 {offsets = [0, 32], sizes = [8, 32], strides = [1, 1]} : vector<8x128xf32> to vector<8x32xf32>
    %238 = arith.mulf %237, %180 : vector<8x32xf32>
    %239 = arith.addf %236, %238 : vector<8x32xf32>
    %240 = vector.extract_strided_slice %234 {offsets = [0, 64], sizes = [8, 32], strides = [1, 1]} : vector<8x128xf32> to vector<8x32xf32>
    %241 = arith.mulf %240, %183 : vector<8x32xf32>
    %242 = arith.addf %239, %241 : vector<8x32xf32>
    %243 = vector.extract_strided_slice %234 {offsets = [0, 96], sizes = [8, 32], strides = [1, 1]} : vector<8x128xf32> to vector<8x32xf32>
    %244 = arith.mulf %243, %186 : vector<8x32xf32>
    %245 = arith.addf %242, %244 : vector<8x32xf32>
    %246 = vector.broadcast %cst_13 : f32 to vector<8x32xf32>
    %247 = arith.mulf %245, %246 : vector<8x32xf32>
    %248 = arith.addf %164, %247 : vector<8x32xf32>
    %cst_39 = arith.constant dense<0.000000e+00> : vector<8x32xf32>
    %249 = tpu.matmul %248, %2, %cst_39 {dimension_numbers = #tpu.dot_dimension_numbers<[1], [0], [0], [1], [0, 0, 1, 1], [], []>} : vector<8x32xf32>, vector<32x32xf32>, vector<8x32xf32> -> vector<8x32xf32>
    %250 = vector.broadcast %3 : vector<1x32xf32> to vector<8x32xf32>
    %251 = arith.addf %249, %250 : vector<8x32xf32>
    %cst_40 = arith.constant 0.000000e+00 : f32
    %252 = vector.broadcast %cst_40 : f32 to vector<8x32xf32>
    %253 = arith.maximumf %251, %252 : vector<8x32xf32>
    %cst_41 = arith.constant dense<0.000000e+00> : vector<8x128xf32>
    %254 = tpu.matmul %253, %4, %cst_41 {dimension_numbers = #tpu.dot_dimension_numbers<[1], [0], [0], [1], [0, 0, 1, 1], [], []>} : vector<8x32xf32>, vector<32x128xf32>, vector<8x128xf32> -> vector<8x128xf32>
    %255 = vector.broadcast %5 : vector<1x128xf32> to vector<8x128xf32>
    %256 = arith.addf %254, %255 : vector<8x128xf32>
    %257 = math.tanh %256 : vector<8x128xf32>
    %258 = vector.extract_strided_slice %257 {offsets = [0, 0], sizes = [8, 32], strides = [1, 1]} : vector<8x128xf32> to vector<8x32xf32>
    %259 = arith.mulf %258, %190 : vector<8x32xf32>
    %260 = vector.extract_strided_slice %257 {offsets = [0, 32], sizes = [8, 32], strides = [1, 1]} : vector<8x128xf32> to vector<8x32xf32>
    %261 = arith.mulf %260, %193 : vector<8x32xf32>
    %262 = arith.addf %259, %261 : vector<8x32xf32>
    %263 = vector.extract_strided_slice %257 {offsets = [0, 64], sizes = [8, 32], strides = [1, 1]} : vector<8x128xf32> to vector<8x32xf32>
    %264 = arith.mulf %263, %196 : vector<8x32xf32>
    %265 = arith.addf %262, %264 : vector<8x32xf32>
    %266 = vector.extract_strided_slice %257 {offsets = [0, 96], sizes = [8, 32], strides = [1, 1]} : vector<8x128xf32> to vector<8x32xf32>
    %267 = arith.mulf %266, %199 : vector<8x32xf32>
    %268 = arith.addf %265, %267 : vector<8x32xf32>
    %269 = vector.broadcast %cst_13 : f32 to vector<8x32xf32>
    %270 = arith.mulf %245, %269 : vector<8x32xf32>
    %271 = arith.subf %268, %270 : vector<8x32xf32>
    %272 = arith.addf %164, %271 : vector<8x32xf32>
    %cst_42 = arith.constant dense<0.000000e+00> : vector<8x32xf32>
    %273 = tpu.matmul %272, %2, %cst_42 {dimension_numbers = #tpu.dot_dimension_numbers<[1], [0], [0], [1], [0, 0, 1, 1], [], []>} : vector<8x32xf32>, vector<32x32xf32>, vector<8x32xf32> -> vector<8x32xf32>
    %274 = vector.broadcast %3 : vector<1x32xf32> to vector<8x32xf32>
    %275 = arith.addf %273, %274 : vector<8x32xf32>
    %cst_43 = arith.constant 0.000000e+00 : f32
    %276 = vector.broadcast %cst_43 : f32 to vector<8x32xf32>
    %277 = arith.maximumf %275, %276 : vector<8x32xf32>
    %cst_44 = arith.constant dense<0.000000e+00> : vector<8x128xf32>
    %278 = tpu.matmul %277, %4, %cst_44 {dimension_numbers = #tpu.dot_dimension_numbers<[1], [0], [0], [1], [0, 0, 1, 1], [], []>} : vector<8x32xf32>, vector<32x128xf32>, vector<8x128xf32> -> vector<8x128xf32>
    %279 = vector.broadcast %5 : vector<1x128xf32> to vector<8x128xf32>
    %280 = arith.addf %278, %279 : vector<8x128xf32>
    %281 = math.tanh %280 : vector<8x128xf32>
    %282 = vector.extract_strided_slice %281 {offsets = [0, 0], sizes = [8, 32], strides = [1, 1]} : vector<8x128xf32> to vector<8x32xf32>
    %283 = arith.mulf %282, %203 : vector<8x32xf32>
    %284 = vector.extract_strided_slice %281 {offsets = [0, 32], sizes = [8, 32], strides = [1, 1]} : vector<8x128xf32> to vector<8x32xf32>
    %285 = arith.mulf %284, %206 : vector<8x32xf32>
    %286 = arith.addf %283, %285 : vector<8x32xf32>
    %287 = vector.extract_strided_slice %281 {offsets = [0, 64], sizes = [8, 32], strides = [1, 1]} : vector<8x128xf32> to vector<8x32xf32>
    %288 = arith.mulf %287, %209 : vector<8x32xf32>
    %289 = arith.addf %286, %288 : vector<8x32xf32>
    %290 = vector.extract_strided_slice %281 {offsets = [0, 96], sizes = [8, 32], strides = [1, 1]} : vector<8x128xf32> to vector<8x32xf32>
    %291 = arith.mulf %290, %212 : vector<8x32xf32>
    %292 = arith.addf %289, %291 : vector<8x32xf32>
    %293 = arith.subf %245, %268 : vector<8x32xf32>
    %294 = arith.addf %293, %292 : vector<8x32xf32>
    %295 = arith.addf %164, %294 : vector<8x32xf32>
    %cst_45 = arith.constant dense<0.000000e+00> : vector<8x32xf32>
    %296 = tpu.matmul %295, %2, %cst_45 {dimension_numbers = #tpu.dot_dimension_numbers<[1], [0], [0], [1], [0, 0, 1, 1], [], []>} : vector<8x32xf32>, vector<32x32xf32>, vector<8x32xf32> -> vector<8x32xf32>
    %297 = vector.broadcast %3 : vector<1x32xf32> to vector<8x32xf32>
    %298 = arith.addf %296, %297 : vector<8x32xf32>
    %cst_46 = arith.constant 0.000000e+00 : f32
    %299 = vector.broadcast %cst_46 : f32 to vector<8x32xf32>
    %300 = arith.maximumf %298, %299 : vector<8x32xf32>
    %cst_47 = arith.constant dense<0.000000e+00> : vector<8x128xf32>
    %301 = tpu.matmul %300, %4, %cst_47 {dimension_numbers = #tpu.dot_dimension_numbers<[1], [0], [0], [1], [0, 0, 1, 1], [], []>} : vector<8x32xf32>, vector<32x128xf32>, vector<8x128xf32> -> vector<8x128xf32>
    %302 = vector.broadcast %5 : vector<1x128xf32> to vector<8x128xf32>
    %303 = arith.addf %301, %302 : vector<8x128xf32>
    %304 = math.tanh %303 : vector<8x128xf32>
    %305 = vector.extract_strided_slice %304 {offsets = [0, 0], sizes = [8, 32], strides = [1, 1]} : vector<8x128xf32> to vector<8x32xf32>
    %306 = arith.mulf %305, %216 : vector<8x32xf32>
    %307 = vector.extract_strided_slice %304 {offsets = [0, 32], sizes = [8, 32], strides = [1, 1]} : vector<8x128xf32> to vector<8x32xf32>
    %308 = arith.mulf %307, %219 : vector<8x32xf32>
    %309 = arith.addf %306, %308 : vector<8x32xf32>
    %310 = vector.extract_strided_slice %304 {offsets = [0, 64], sizes = [8, 32], strides = [1, 1]} : vector<8x128xf32> to vector<8x32xf32>
    %311 = arith.mulf %310, %222 : vector<8x32xf32>
    %312 = arith.addf %309, %311 : vector<8x32xf32>
    %313 = vector.extract_strided_slice %304 {offsets = [0, 96], sizes = [8, 32], strides = [1, 1]} : vector<8x128xf32> to vector<8x32xf32>
    %314 = arith.mulf %313, %225 : vector<8x32xf32>
    %315 = arith.addf %312, %314 : vector<8x32xf32>
    %316 = arith.addf %268, %292 : vector<8x32xf32>
    %cst_48 = arith.constant 3.000000e+00 : f32
    %317 = vector.broadcast %cst_48 : f32 to vector<8x32xf32>
    %318 = arith.mulf %317, %316 : vector<8x32xf32>
    %319 = arith.addf %245, %318 : vector<8x32xf32>
    %320 = arith.addf %319, %315 : vector<8x32xf32>
    %cst_49 = arith.constant 1.250000e-01 : f32
    %321 = vector.broadcast %cst_49 : f32 to vector<8x32xf32>
    %322 = arith.mulf %321, %320 : vector<8x32xf32>
    %323 = arith.addf %164, %322 : vector<8x32xf32>
    %c1_i32_50 = arith.constant 1 : i32
    %324 = arith.addi %173, %c1_i32_50 : i32
    %c4_i32_51 = arith.constant 4 : i32
    %325 = arith.subi %324, %c4_i32_51 : i32
    %c0_i32_52 = arith.constant 0 : i32
    %326 = arith.cmpi sge, %325, %c0_i32_52 : i32
    %c4_i32_53 = arith.constant 4 : i32
    %327 = arith.cmpi slt, %325, %c4_i32_53 : i32
    %328 = arith.andi %326, %327 : i1
    %329 = arith.extui %328 : i1 to i32
    %c0_i32_54 = arith.constant 0 : i32
    %330 = arith.cmpi ne, %329, %c0_i32_54 : i32
    scf.if %330 {
      %1285 = arith.index_cast %325 : i32 to index
      %c0_177 = arith.constant 0 : index
      %c0_178 = arith.constant 0 : index
      %1286 = vector.load %arg9[%1285, %c0_177, %c0_178] : memref<4x8x32xf32, #tpu.memory_space<vmem>>, vector<1x8x32xf32>
      %1287 = vector.shape_cast %1286 : vector<1x8x32xf32> to vector<8x32xf32>
      %1288 = vector.shape_cast %323 : vector<8x32xf32> to vector<1x8x32xf32>
      tpu.vector_store %arg9[%1285, %c0_177, %c0_178], %1288 {strides = array<i32>} : memref<4x8x32xf32, #tpu.memory_space<vmem>>, vector<1x8x32xf32>,
    } else {
    }
    %c8_i32_55 = arith.constant 8 : i32
    %331 = arith.muli %c0_i32, %c8_i32_55 : i32
    %c2_i32 = arith.constant 2 : i32
    %332 = arith.addi %331, %c2_i32 : i32
    %333 = vector.extract_strided_slice %12 {offsets = [0, 32], sizes = [8, 4], strides = [1, 1]} : vector<8x128xf32> to vector<8x4xf32>
    %334 = vector.extract_strided_slice %333 {offsets = [0, 0], sizes = [8, 1], strides = [1, 1]} : vector<8x4xf32> to vector<8x1xf32>
    %335 = vector.shape_cast %334 : vector<8x1xf32> to vector<8x1xf32>
    %336 = vector.broadcast %335 : vector<8x1xf32> to vector<8x32xf32>
    %337 = vector.extract_strided_slice %333 {offsets = [0, 1], sizes = [8, 1], strides = [1, 1]} : vector<8x4xf32> to vector<8x1xf32>
    %338 = vector.shape_cast %337 : vector<8x1xf32> to vector<8x1xf32>
    %339 = vector.broadcast %338 : vector<8x1xf32> to vector<8x32xf32>
    %340 = vector.extract_strided_slice %333 {offsets = [0, 2], sizes = [8, 1], strides = [1, 1]} : vector<8x4xf32> to vector<8x1xf32>
    %341 = vector.shape_cast %340 : vector<8x1xf32> to vector<8x1xf32>
    %342 = vector.broadcast %341 : vector<8x1xf32> to vector<8x32xf32>
    %343 = vector.extract_strided_slice %333 {offsets = [0, 3], sizes = [8, 1], strides = [1, 1]} : vector<8x4xf32> to vector<8x1xf32>
    %344 = vector.shape_cast %343 : vector<8x1xf32> to vector<8x1xf32>
    %345 = vector.broadcast %344 : vector<8x1xf32> to vector<8x32xf32>
    %346 = vector.extract_strided_slice %12 {offsets = [0, 36], sizes = [8, 4], strides = [1, 1]} : vector<8x128xf32> to vector<8x4xf32>
    %347 = vector.extract_strided_slice %346 {offsets = [0, 0], sizes = [8, 1], strides = [1, 1]} : vector<8x4xf32> to vector<8x1xf32>
    %348 = vector.shape_cast %347 : vector<8x1xf32> to vector<8x1xf32>
    %349 = vector.broadcast %348 : vector<8x1xf32> to vector<8x32xf32>
    %350 = vector.extract_strided_slice %346 {offsets = [0, 1], sizes = [8, 1], strides = [1, 1]} : vector<8x4xf32> to vector<8x1xf32>
    %351 = vector.shape_cast %350 : vector<8x1xf32> to vector<8x1xf32>
    %352 = vector.broadcast %351 : vector<8x1xf32> to vector<8x32xf32>
    %353 = vector.extract_strided_slice %346 {offsets = [0, 2], sizes = [8, 1], strides = [1, 1]} : vector<8x4xf32> to vector<8x1xf32>
    %354 = vector.shape_cast %353 : vector<8x1xf32> to vector<8x1xf32>
    %355 = vector.broadcast %354 : vector<8x1xf32> to vector<8x32xf32>
    %356 = vector.extract_strided_slice %346 {offsets = [0, 3], sizes = [8, 1], strides = [1, 1]} : vector<8x4xf32> to vector<8x1xf32>
    %357 = vector.shape_cast %356 : vector<8x1xf32> to vector<8x1xf32>
    %358 = vector.broadcast %357 : vector<8x1xf32> to vector<8x32xf32>
    %359 = vector.extract_strided_slice %12 {offsets = [0, 40], sizes = [8, 4], strides = [1, 1]} : vector<8x128xf32> to vector<8x4xf32>
    %360 = vector.extract_strided_slice %359 {offsets = [0, 0], sizes = [8, 1], strides = [1, 1]} : vector<8x4xf32> to vector<8x1xf32>
    %361 = vector.shape_cast %360 : vector<8x1xf32> to vector<8x1xf32>
    %362 = vector.broadcast %361 : vector<8x1xf32> to vector<8x32xf32>
    %363 = vector.extract_strided_slice %359 {offsets = [0, 1], sizes = [8, 1], strides = [1, 1]} : vector<8x4xf32> to vector<8x1xf32>
    %364 = vector.shape_cast %363 : vector<8x1xf32> to vector<8x1xf32>
    %365 = vector.broadcast %364 : vector<8x1xf32> to vector<8x32xf32>
    %366 = vector.extract_strided_slice %359 {offsets = [0, 2], sizes = [8, 1], strides = [1, 1]} : vector<8x4xf32> to vector<8x1xf32>
    %367 = vector.shape_cast %366 : vector<8x1xf32> to vector<8x1xf32>
    %368 = vector.broadcast %367 : vector<8x1xf32> to vector<8x32xf32>
    %369 = vector.extract_strided_slice %359 {offsets = [0, 3], sizes = [8, 1], strides = [1, 1]} : vector<8x4xf32> to vector<8x1xf32>
    %370 = vector.shape_cast %369 : vector<8x1xf32> to vector<8x1xf32>
    %371 = vector.broadcast %370 : vector<8x1xf32> to vector<8x32xf32>
    %372 = vector.extract_strided_slice %12 {offsets = [0, 44], sizes = [8, 4], strides = [1, 1]} : vector<8x128xf32> to vector<8x4xf32>
    %373 = vector.extract_strided_slice %372 {offsets = [0, 0], sizes = [8, 1], strides = [1, 1]} : vector<8x4xf32> to vector<8x1xf32>
    %374 = vector.shape_cast %373 : vector<8x1xf32> to vector<8x1xf32>
    %375 = vector.broadcast %374 : vector<8x1xf32> to vector<8x32xf32>
    %376 = vector.extract_strided_slice %372 {offsets = [0, 1], sizes = [8, 1], strides = [1, 1]} : vector<8x4xf32> to vector<8x1xf32>
    %377 = vector.shape_cast %376 : vector<8x1xf32> to vector<8x1xf32>
    %378 = vector.broadcast %377 : vector<8x1xf32> to vector<8x32xf32>
    %379 = vector.extract_strided_slice %372 {offsets = [0, 2], sizes = [8, 1], strides = [1, 1]} : vector<8x4xf32> to vector<8x1xf32>
    %380 = vector.shape_cast %379 : vector<8x1xf32> to vector<8x1xf32>
    %381 = vector.broadcast %380 : vector<8x1xf32> to vector<8x32xf32>
    %382 = vector.extract_strided_slice %372 {offsets = [0, 3], sizes = [8, 1], strides = [1, 1]} : vector<8x4xf32> to vector<8x1xf32>
    %383 = vector.shape_cast %382 : vector<8x1xf32> to vector<8x1xf32>
    %384 = vector.broadcast %383 : vector<8x1xf32> to vector<8x32xf32>
    %cst_56 = arith.constant dense<0.000000e+00> : vector<8x32xf32>
    %385 = tpu.matmul %323, %2, %cst_56 {dimension_numbers = #tpu.dot_dimension_numbers<[1], [0], [0], [1], [0, 0, 1, 1], [], []>} : vector<8x32xf32>, vector<32x32xf32>, vector<8x32xf32> -> vector<8x32xf32>
    %386 = vector.broadcast %3 : vector<1x32xf32> to vector<8x32xf32>
    %387 = arith.addf %385, %386 : vector<8x32xf32>
    %cst_57 = arith.constant 0.000000e+00 : f32
    %388 = vector.broadcast %cst_57 : f32 to vector<8x32xf32>
    %389 = arith.maximumf %387, %388 : vector<8x32xf32>
    %cst_58 = arith.constant dense<0.000000e+00> : vector<8x128xf32>
    %390 = tpu.matmul %389, %4, %cst_58 {dimension_numbers = #tpu.dot_dimension_numbers<[1], [0], [0], [1], [0, 0, 1, 1], [], []>} : vector<8x32xf32>, vector<32x128xf32>, vector<8x128xf32> -> vector<8x128xf32>
    %391 = vector.broadcast %5 : vector<1x128xf32> to vector<8x128xf32>
    %392 = arith.addf %390, %391 : vector<8x128xf32>
    %393 = math.tanh %392 : vector<8x128xf32>
    %394 = vector.extract_strided_slice %393 {offsets = [0, 0], sizes = [8, 32], strides = [1, 1]} : vector<8x128xf32> to vector<8x32xf32>
    %395 = arith.mulf %394, %336 : vector<8x32xf32>
    %396 = vector.extract_strided_slice %393 {offsets = [0, 32], sizes = [8, 32], strides = [1, 1]} : vector<8x128xf32> to vector<8x32xf32>
    %397 = arith.mulf %396, %339 : vector<8x32xf32>
    %398 = arith.addf %395, %397 : vector<8x32xf32>
    %399 = vector.extract_strided_slice %393 {offsets = [0, 64], sizes = [8, 32], strides = [1, 1]} : vector<8x128xf32> to vector<8x32xf32>
    %400 = arith.mulf %399, %342 : vector<8x32xf32>
    %401 = arith.addf %398, %400 : vector<8x32xf32>
    %402 = vector.extract_strided_slice %393 {offsets = [0, 96], sizes = [8, 32], strides = [1, 1]} : vector<8x128xf32> to vector<8x32xf32>
    %403 = arith.mulf %402, %345 : vector<8x32xf32>
    %404 = arith.addf %401, %403 : vector<8x32xf32>
    %405 = vector.broadcast %cst_13 : f32 to vector<8x32xf32>
    %406 = arith.mulf %404, %405 : vector<8x32xf32>
    %407 = arith.addf %323, %406 : vector<8x32xf32>
    %cst_59 = arith.constant dense<0.000000e+00> : vector<8x32xf32>
    %408 = tpu.matmul %407, %2, %cst_59 {dimension_numbers = #tpu.dot_dimension_numbers<[1], [0], [0], [1], [0, 0, 1, 1], [], []>} : vector<8x32xf32>, vector<32x32xf32>, vector<8x32xf32> -> vector<8x32xf32>
    %409 = vector.broadcast %3 : vector<1x32xf32> to vector<8x32xf32>
    %410 = arith.addf %408, %409 : vector<8x32xf32>
    %cst_60 = arith.constant 0.000000e+00 : f32
    %411 = vector.broadcast %cst_60 : f32 to vector<8x32xf32>
    %412 = arith.maximumf %410, %411 : vector<8x32xf32>
    %cst_61 = arith.constant dense<0.000000e+00> : vector<8x128xf32>
    %413 = tpu.matmul %412, %4, %cst_61 {dimension_numbers = #tpu.dot_dimension_numbers<[1], [0], [0], [1], [0, 0, 1, 1], [], []>} : vector<8x32xf32>, vector<32x128xf32>, vector<8x128xf32> -> vector<8x128xf32>
    %414 = vector.broadcast %5 : vector<1x128xf32> to vector<8x128xf32>
    %415 = arith.addf %413, %414 : vector<8x128xf32>
    %416 = math.tanh %415 : vector<8x128xf32>
    %417 = vector.extract_strided_slice %416 {offsets = [0, 0], sizes = [8, 32], strides = [1, 1]} : vector<8x128xf32> to vector<8x32xf32>
    %418 = arith.mulf %417, %349 : vector<8x32xf32>
    %419 = vector.extract_strided_slice %416 {offsets = [0, 32], sizes = [8, 32], strides = [1, 1]} : vector<8x128xf32> to vector<8x32xf32>
    %420 = arith.mulf %419, %352 : vector<8x32xf32>
    %421 = arith.addf %418, %420 : vector<8x32xf32>
    %422 = vector.extract_strided_slice %416 {offsets = [0, 64], sizes = [8, 32], strides = [1, 1]} : vector<8x128xf32> to vector<8x32xf32>
    %423 = arith.mulf %422, %355 : vector<8x32xf32>
    %424 = arith.addf %421, %423 : vector<8x32xf32>
    %425 = vector.extract_strided_slice %416 {offsets = [0, 96], sizes = [8, 32], strides = [1, 1]} : vector<8x128xf32> to vector<8x32xf32>
    %426 = arith.mulf %425, %358 : vector<8x32xf32>
    %427 = arith.addf %424, %426 : vector<8x32xf32>
    %428 = vector.broadcast %cst_13 : f32 to vector<8x32xf32>
    %429 = arith.mulf %404, %428 : vector<8x32xf32>
    %430 = arith.subf %427, %429 : vector<8x32xf32>
    %431 = arith.addf %323, %430 : vector<8x32xf32>
    %cst_62 = arith.constant dense<0.000000e+00> : vector<8x32xf32>
    %432 = tpu.matmul %431, %2, %cst_62 {dimension_numbers = #tpu.dot_dimension_numbers<[1], [0], [0], [1], [0, 0, 1, 1], [], []>} : vector<8x32xf32>, vector<32x32xf32>, vector<8x32xf32> -> vector<8x32xf32>
    %433 = vector.broadcast %3 : vector<1x32xf32> to vector<8x32xf32>
    %434 = arith.addf %432, %433 : vector<8x32xf32>
    %cst_63 = arith.constant 0.000000e+00 : f32
    %435 = vector.broadcast %cst_63 : f32 to vector<8x32xf32>
    %436 = arith.maximumf %434, %435 : vector<8x32xf32>
    %cst_64 = arith.constant dense<0.000000e+00> : vector<8x128xf32>
    %437 = tpu.matmul %436, %4, %cst_64 {dimension_numbers = #tpu.dot_dimension_numbers<[1], [0], [0], [1], [0, 0, 1, 1], [], []>} : vector<8x32xf32>, vector<32x128xf32>, vector<8x128xf32> -> vector<8x128xf32>
    %438 = vector.broadcast %5 : vector<1x128xf32> to vector<8x128xf32>
    %439 = arith.addf %437, %438 : vector<8x128xf32>
    %440 = math.tanh %439 : vector<8x128xf32>
    %441 = vector.extract_strided_slice %440 {offsets = [0, 0], sizes = [8, 32], strides = [1, 1]} : vector<8x128xf32> to vector<8x32xf32>
    %442 = arith.mulf %441, %362 : vector<8x32xf32>
    %443 = vector.extract_strided_slice %440 {offsets = [0, 32], sizes = [8, 32], strides = [1, 1]} : vector<8x128xf32> to vector<8x32xf32>
    %444 = arith.mulf %443, %365 : vector<8x32xf32>
    %445 = arith.addf %442, %444 : vector<8x32xf32>
    %446 = vector.extract_strided_slice %440 {offsets = [0, 64], sizes = [8, 32], strides = [1, 1]} : vector<8x128xf32> to vector<8x32xf32>
    %447 = arith.mulf %446, %368 : vector<8x32xf32>
    %448 = arith.addf %445, %447 : vector<8x32xf32>
    %449 = vector.extract_strided_slice %440 {offsets = [0, 96], sizes = [8, 32], strides = [1, 1]} : vector<8x128xf32> to vector<8x32xf32>
    %450 = arith.mulf %449, %371 : vector<8x32xf32>
    %451 = arith.addf %448, %450 : vector<8x32xf32>
    %452 = arith.subf %404, %427 : vector<8x32xf32>
    %453 = arith.addf %452, %451 : vector<8x32xf32>
    %454 = arith.addf %323, %453 : vector<8x32xf32>
    %cst_65 = arith.constant dense<0.000000e+00> : vector<8x32xf32>
    %455 = tpu.matmul %454, %2, %cst_65 {dimension_numbers = #tpu.dot_dimension_numbers<[1], [0], [0], [1], [0, 0, 1, 1], [], []>} : vector<8x32xf32>, vector<32x32xf32>, vector<8x32xf32> -> vector<8x32xf32>
    %456 = vector.broadcast %3 : vector<1x32xf32> to vector<8x32xf32>
    %457 = arith.addf %455, %456 : vector<8x32xf32>
    %cst_66 = arith.constant 0.000000e+00 : f32
    %458 = vector.broadcast %cst_66 : f32 to vector<8x32xf32>
    %459 = arith.maximumf %457, %458 : vector<8x32xf32>
    %cst_67 = arith.constant dense<0.000000e+00> : vector<8x128xf32>
    %460 = tpu.matmul %459, %4, %cst_67 {dimension_numbers = #tpu.dot_dimension_numbers<[1], [0], [0], [1], [0, 0, 1, 1], [], []>} : vector<8x32xf32>, vector<32x128xf32>, vector<8x128xf32> -> vector<8x128xf32>
    %461 = vector.broadcast %5 : vector<1x128xf32> to vector<8x128xf32>
    %462 = arith.addf %460, %461 : vector<8x128xf32>
    %463 = math.tanh %462 : vector<8x128xf32>
    %464 = vector.extract_strided_slice %463 {offsets = [0, 0], sizes = [8, 32], strides = [1, 1]} : vector<8x128xf32> to vector<8x32xf32>
    %465 = arith.mulf %464, %375 : vector<8x32xf32>
    %466 = vector.extract_strided_slice %463 {offsets = [0, 32], sizes = [8, 32], strides = [1, 1]} : vector<8x128xf32> to vector<8x32xf32>
    %467 = arith.mulf %466, %378 : vector<8x32xf32>
    %468 = arith.addf %465, %467 : vector<8x32xf32>
    %469 = vector.extract_strided_slice %463 {offsets = [0, 64], sizes = [8, 32], strides = [1, 1]} : vector<8x128xf32> to vector<8x32xf32>
    %470 = arith.mulf %469, %381 : vector<8x32xf32>
    %471 = arith.addf %468, %470 : vector<8x32xf32>
    %472 = vector.extract_strided_slice %463 {offsets = [0, 96], sizes = [8, 32], strides = [1, 1]} : vector<8x128xf32> to vector<8x32xf32>
    %473 = arith.mulf %472, %384 : vector<8x32xf32>
    %474 = arith.addf %471, %473 : vector<8x32xf32>
    %475 = arith.addf %427, %451 : vector<8x32xf32>
    %cst_68 = arith.constant 3.000000e+00 : f32
    %476 = vector.broadcast %cst_68 : f32 to vector<8x32xf32>
    %477 = arith.mulf %476, %475 : vector<8x32xf32>
    %478 = arith.addf %404, %477 : vector<8x32xf32>
    %479 = arith.addf %478, %474 : vector<8x32xf32>
    %cst_69 = arith.constant 1.250000e-01 : f32
    %480 = vector.broadcast %cst_69 : f32 to vector<8x32xf32>
    %481 = arith.mulf %480, %479 : vector<8x32xf32>
    %482 = arith.addf %323, %481 : vector<8x32xf32>
    %c1_i32_70 = arith.constant 1 : i32
    %483 = arith.addi %332, %c1_i32_70 : i32
    %c4_i32_71 = arith.constant 4 : i32
    %484 = arith.subi %483, %c4_i32_71 : i32
    %c0_i32_72 = arith.constant 0 : i32
    %485 = arith.cmpi sge, %484, %c0_i32_72 : i32
    %c4_i32_73 = arith.constant 4 : i32
    %486 = arith.cmpi slt, %484, %c4_i32_73 : i32
    %487 = arith.andi %485, %486 : i1
    %488 = arith.extui %487 : i1 to i32
    %c0_i32_74 = arith.constant 0 : i32
    %489 = arith.cmpi ne, %488, %c0_i32_74 : i32
    scf.if %489 {
      %1285 = arith.index_cast %484 : i32 to index
      %c0_177 = arith.constant 0 : index
      %c0_178 = arith.constant 0 : index
      %1286 = vector.load %arg9[%1285, %c0_177, %c0_178] : memref<4x8x32xf32, #tpu.memory_space<vmem>>, vector<1x8x32xf32>
      %1287 = vector.shape_cast %1286 : vector<1x8x32xf32> to vector<8x32xf32>
      %1288 = vector.shape_cast %482 : vector<8x32xf32> to vector<1x8x32xf32>
      tpu.vector_store %arg9[%1285, %c0_177, %c0_178], %1288 {strides = array<i32>} : memref<4x8x32xf32, #tpu.memory_space<vmem>>, vector<1x8x32xf32>,
    } else {
    }
    %c8_i32_75 = arith.constant 8 : i32
    %490 = arith.muli %c0_i32, %c8_i32_75 : i32
    %c3_i32 = arith.constant 3 : i32
    %491 = arith.addi %490, %c3_i32 : i32
    %492 = vector.extract_strided_slice %12 {offsets = [0, 48], sizes = [8, 4], strides = [1, 1]} : vector<8x128xf32> to vector<8x4xf32>
    %493 = vector.extract_strided_slice %492 {offsets = [0, 0], sizes = [8, 1], strides = [1, 1]} : vector<8x4xf32> to vector<8x1xf32>
    %494 = vector.shape_cast %493 : vector<8x1xf32> to vector<8x1xf32>
    %495 = vector.broadcast %494 : vector<8x1xf32> to vector<8x32xf32>
    %496 = vector.extract_strided_slice %492 {offsets = [0, 1], sizes = [8, 1], strides = [1, 1]} : vector<8x4xf32> to vector<8x1xf32>
    %497 = vector.shape_cast %496 : vector<8x1xf32> to vector<8x1xf32>
    %498 = vector.broadcast %497 : vector<8x1xf32> to vector<8x32xf32>
    %499 = vector.extract_strided_slice %492 {offsets = [0, 2], sizes = [8, 1], strides = [1, 1]} : vector<8x4xf32> to vector<8x1xf32>
    %500 = vector.shape_cast %499 : vector<8x1xf32> to vector<8x1xf32>
    %501 = vector.broadcast %500 : vector<8x1xf32> to vector<8x32xf32>
    %502 = vector.extract_strided_slice %492 {offsets = [0, 3], sizes = [8, 1], strides = [1, 1]} : vector<8x4xf32> to vector<8x1xf32>
    %503 = vector.shape_cast %502 : vector<8x1xf32> to vector<8x1xf32>
    %504 = vector.broadcast %503 : vector<8x1xf32> to vector<8x32xf32>
    %505 = vector.extract_strided_slice %12 {offsets = [0, 52], sizes = [8, 4], strides = [1, 1]} : vector<8x128xf32> to vector<8x4xf32>
    %506 = vector.extract_strided_slice %505 {offsets = [0, 0], sizes = [8, 1], strides = [1, 1]} : vector<8x4xf32> to vector<8x1xf32>
    %507 = vector.shape_cast %506 : vector<8x1xf32> to vector<8x1xf32>
    %508 = vector.broadcast %507 : vector<8x1xf32> to vector<8x32xf32>
    %509 = vector.extract_strided_slice %505 {offsets = [0, 1], sizes = [8, 1], strides = [1, 1]} : vector<8x4xf32> to vector<8x1xf32>
    %510 = vector.shape_cast %509 : vector<8x1xf32> to vector<8x1xf32>
    %511 = vector.broadcast %510 : vector<8x1xf32> to vector<8x32xf32>
    %512 = vector.extract_strided_slice %505 {offsets = [0, 2], sizes = [8, 1], strides = [1, 1]} : vector<8x4xf32> to vector<8x1xf32>
    %513 = vector.shape_cast %512 : vector<8x1xf32> to vector<8x1xf32>
    %514 = vector.broadcast %513 : vector<8x1xf32> to vector<8x32xf32>
    %515 = vector.extract_strided_slice %505 {offsets = [0, 3], sizes = [8, 1], strides = [1, 1]} : vector<8x4xf32> to vector<8x1xf32>
    %516 = vector.shape_cast %515 : vector<8x1xf32> to vector<8x1xf32>
    %517 = vector.broadcast %516 : vector<8x1xf32> to vector<8x32xf32>
    %518 = vector.extract_strided_slice %12 {offsets = [0, 56], sizes = [8, 4], strides = [1, 1]} : vector<8x128xf32> to vector<8x4xf32>
    %519 = vector.extract_strided_slice %518 {offsets = [0, 0], sizes = [8, 1], strides = [1, 1]} : vector<8x4xf32> to vector<8x1xf32>
    %520 = vector.shape_cast %519 : vector<8x1xf32> to vector<8x1xf32>
    %521 = vector.broadcast %520 : vector<8x1xf32> to vector<8x32xf32>
    %522 = vector.extract_strided_slice %518 {offsets = [0, 1], sizes = [8, 1], strides = [1, 1]} : vector<8x4xf32> to vector<8x1xf32>
    %523 = vector.shape_cast %522 : vector<8x1xf32> to vector<8x1xf32>
    %524 = vector.broadcast %523 : vector<8x1xf32> to vector<8x32xf32>
    %525 = vector.extract_strided_slice %518 {offsets = [0, 2], sizes = [8, 1], strides = [1, 1]} : vector<8x4xf32> to vector<8x1xf32>
    %526 = vector.shape_cast %525 : vector<8x1xf32> to vector<8x1xf32>
    %527 = vector.broadcast %526 : vector<8x1xf32> to vector<8x32xf32>
    %528 = vector.extract_strided_slice %518 {offsets = [0, 3], sizes = [8, 1], strides = [1, 1]} : vector<8x4xf32> to vector<8x1xf32>
    %529 = vector.shape_cast %528 : vector<8x1xf32> to vector<8x1xf32>
    %530 = vector.broadcast %529 : vector<8x1xf32> to vector<8x32xf32>
    %531 = vector.extract_strided_slice %12 {offsets = [0, 60], sizes = [8, 4], strides = [1, 1]} : vector<8x128xf32> to vector<8x4xf32>
    %532 = vector.extract_strided_slice %531 {offsets = [0, 0], sizes = [8, 1], strides = [1, 1]} : vector<8x4xf32> to vector<8x1xf32>
    %533 = vector.shape_cast %532 : vector<8x1xf32> to vector<8x1xf32>
    %534 = vector.broadcast %533 : vector<8x1xf32> to vector<8x32xf32>
    %535 = vector.extract_strided_slice %531 {offsets = [0, 1], sizes = [8, 1], strides = [1, 1]} : vector<8x4xf32> to vector<8x1xf32>
    %536 = vector.shape_cast %535 : vector<8x1xf32> to vector<8x1xf32>
    %537 = vector.broadcast %536 : vector<8x1xf32> to vector<8x32xf32>
    %538 = vector.extract_strided_slice %531 {offsets = [0, 2], sizes = [8, 1], strides = [1, 1]} : vector<8x4xf32> to vector<8x1xf32>
    %539 = vector.shape_cast %538 : vector<8x1xf32> to vector<8x1xf32>
    %540 = vector.broadcast %539 : vector<8x1xf32> to vector<8x32xf32>
    %541 = vector.extract_strided_slice %531 {offsets = [0, 3], sizes = [8, 1], strides = [1, 1]} : vector<8x4xf32> to vector<8x1xf32>
    %542 = vector.shape_cast %541 : vector<8x1xf32> to vector<8x1xf32>
    %543 = vector.broadcast %542 : vector<8x1xf32> to vector<8x32xf32>
    %cst_76 = arith.constant dense<0.000000e+00> : vector<8x32xf32>
    %544 = tpu.matmul %482, %2, %cst_76 {dimension_numbers = #tpu.dot_dimension_numbers<[1], [0], [0], [1], [0, 0, 1, 1], [], []>} : vector<8x32xf32>, vector<32x32xf32>, vector<8x32xf32> -> vector<8x32xf32>
    %545 = vector.broadcast %3 : vector<1x32xf32> to vector<8x32xf32>
    %546 = arith.addf %544, %545 : vector<8x32xf32>
    %cst_77 = arith.constant 0.000000e+00 : f32
    %547 = vector.broadcast %cst_77 : f32 to vector<8x32xf32>
    %548 = arith.maximumf %546, %547 : vector<8x32xf32>
    %cst_78 = arith.constant dense<0.000000e+00> : vector<8x128xf32>
    %549 = tpu.matmul %548, %4, %cst_78 {dimension_numbers = #tpu.dot_dimension_numbers<[1], [0], [0], [1], [0, 0, 1, 1], [], []>} : vector<8x32xf32>, vector<32x128xf32>, vector<8x128xf32> -> vector<8x128xf32>
    %550 = vector.broadcast %5 : vector<1x128xf32> to vector<8x128xf32>
    %551 = arith.addf %549, %550 : vector<8x128xf32>
    %552 = math.tanh %551 : vector<8x128xf32>
    %553 = vector.extract_strided_slice %552 {offsets = [0, 0], sizes = [8, 32], strides = [1, 1]} : vector<8x128xf32> to vector<8x32xf32>
    %554 = arith.mulf %553, %495 : vector<8x32xf32>
    %555 = vector.extract_strided_slice %552 {offsets = [0, 32], sizes = [8, 32], strides = [1, 1]} : vector<8x128xf32> to vector<8x32xf32>
    %556 = arith.mulf %555, %498 : vector<8x32xf32>
    %557 = arith.addf %554, %556 : vector<8x32xf32>
    %558 = vector.extract_strided_slice %552 {offsets = [0, 64], sizes = [8, 32], strides = [1, 1]} : vector<8x128xf32> to vector<8x32xf32>
    %559 = arith.mulf %558, %501 : vector<8x32xf32>
    %560 = arith.addf %557, %559 : vector<8x32xf32>
    %561 = vector.extract_strided_slice %552 {offsets = [0, 96], sizes = [8, 32], strides = [1, 1]} : vector<8x128xf32> to vector<8x32xf32>
    %562 = arith.mulf %561, %504 : vector<8x32xf32>
    %563 = arith.addf %560, %562 : vector<8x32xf32>
    %564 = vector.broadcast %cst_13 : f32 to vector<8x32xf32>
    %565 = arith.mulf %563, %564 : vector<8x32xf32>
    %566 = arith.addf %482, %565 : vector<8x32xf32>
    %cst_79 = arith.constant dense<0.000000e+00> : vector<8x32xf32>
    %567 = tpu.matmul %566, %2, %cst_79 {dimension_numbers = #tpu.dot_dimension_numbers<[1], [0], [0], [1], [0, 0, 1, 1], [], []>} : vector<8x32xf32>, vector<32x32xf32>, vector<8x32xf32> -> vector<8x32xf32>
    %568 = vector.broadcast %3 : vector<1x32xf32> to vector<8x32xf32>
    %569 = arith.addf %567, %568 : vector<8x32xf32>
    %cst_80 = arith.constant 0.000000e+00 : f32
    %570 = vector.broadcast %cst_80 : f32 to vector<8x32xf32>
    %571 = arith.maximumf %569, %570 : vector<8x32xf32>
    %cst_81 = arith.constant dense<0.000000e+00> : vector<8x128xf32>
    %572 = tpu.matmul %571, %4, %cst_81 {dimension_numbers = #tpu.dot_dimension_numbers<[1], [0], [0], [1], [0, 0, 1, 1], [], []>} : vector<8x32xf32>, vector<32x128xf32>, vector<8x128xf32> -> vector<8x128xf32>
    %573 = vector.broadcast %5 : vector<1x128xf32> to vector<8x128xf32>
    %574 = arith.addf %572, %573 : vector<8x128xf32>
    %575 = math.tanh %574 : vector<8x128xf32>
    %576 = vector.extract_strided_slice %575 {offsets = [0, 0], sizes = [8, 32], strides = [1, 1]} : vector<8x128xf32> to vector<8x32xf32>
    %577 = arith.mulf %576, %508 : vector<8x32xf32>
    %578 = vector.extract_strided_slice %575 {offsets = [0, 32], sizes = [8, 32], strides = [1, 1]} : vector<8x128xf32> to vector<8x32xf32>
    %579 = arith.mulf %578, %511 : vector<8x32xf32>
    %580 = arith.addf %577, %579 : vector<8x32xf32>
    %581 = vector.extract_strided_slice %575 {offsets = [0, 64], sizes = [8, 32], strides = [1, 1]} : vector<8x128xf32> to vector<8x32xf32>
    %582 = arith.mulf %581, %514 : vector<8x32xf32>
    %583 = arith.addf %580, %582 : vector<8x32xf32>
    %584 = vector.extract_strided_slice %575 {offsets = [0, 96], sizes = [8, 32], strides = [1, 1]} : vector<8x128xf32> to vector<8x32xf32>
    %585 = arith.mulf %584, %517 : vector<8x32xf32>
    %586 = arith.addf %583, %585 : vector<8x32xf32>
    %587 = vector.broadcast %cst_13 : f32 to vector<8x32xf32>
    %588 = arith.mulf %563, %587 : vector<8x32xf32>
    %589 = arith.subf %586, %588 : vector<8x32xf32>
    %590 = arith.addf %482, %589 : vector<8x32xf32>
    %cst_82 = arith.constant dense<0.000000e+00> : vector<8x32xf32>
    %591 = tpu.matmul %590, %2, %cst_82 {dimension_numbers = #tpu.dot_dimension_numbers<[1], [0], [0], [1], [0, 0, 1, 1], [], []>} : vector<8x32xf32>, vector<32x32xf32>, vector<8x32xf32> -> vector<8x32xf32>
    %592 = vector.broadcast %3 : vector<1x32xf32> to vector<8x32xf32>
    %593 = arith.addf %591, %592 : vector<8x32xf32>
    %cst_83 = arith.constant 0.000000e+00 : f32
    %594 = vector.broadcast %cst_83 : f32 to vector<8x32xf32>
    %595 = arith.maximumf %593, %594 : vector<8x32xf32>
    %cst_84 = arith.constant dense<0.000000e+00> : vector<8x128xf32>
    %596 = tpu.matmul %595, %4, %cst_84 {dimension_numbers = #tpu.dot_dimension_numbers<[1], [0], [0], [1], [0, 0, 1, 1], [], []>} : vector<8x32xf32>, vector<32x128xf32>, vector<8x128xf32> -> vector<8x128xf32>
    %597 = vector.broadcast %5 : vector<1x128xf32> to vector<8x128xf32>
    %598 = arith.addf %596, %597 : vector<8x128xf32>
    %599 = math.tanh %598 : vector<8x128xf32>
    %600 = vector.extract_strided_slice %599 {offsets = [0, 0], sizes = [8, 32], strides = [1, 1]} : vector<8x128xf32> to vector<8x32xf32>
    %601 = arith.mulf %600, %521 : vector<8x32xf32>
    %602 = vector.extract_strided_slice %599 {offsets = [0, 32], sizes = [8, 32], strides = [1, 1]} : vector<8x128xf32> to vector<8x32xf32>
    %603 = arith.mulf %602, %524 : vector<8x32xf32>
    %604 = arith.addf %601, %603 : vector<8x32xf32>
    %605 = vector.extract_strided_slice %599 {offsets = [0, 64], sizes = [8, 32], strides = [1, 1]} : vector<8x128xf32> to vector<8x32xf32>
    %606 = arith.mulf %605, %527 : vector<8x32xf32>
    %607 = arith.addf %604, %606 : vector<8x32xf32>
    %608 = vector.extract_strided_slice %599 {offsets = [0, 96], sizes = [8, 32], strides = [1, 1]} : vector<8x128xf32> to vector<8x32xf32>
    %609 = arith.mulf %608, %530 : vector<8x32xf32>
    %610 = arith.addf %607, %609 : vector<8x32xf32>
    %611 = arith.subf %563, %586 : vector<8x32xf32>
    %612 = arith.addf %611, %610 : vector<8x32xf32>
    %613 = arith.addf %482, %612 : vector<8x32xf32>
    %cst_85 = arith.constant dense<0.000000e+00> : vector<8x32xf32>
    %614 = tpu.matmul %613, %2, %cst_85 {dimension_numbers = #tpu.dot_dimension_numbers<[1], [0], [0], [1], [0, 0, 1, 1], [], []>} : vector<8x32xf32>, vector<32x32xf32>, vector<8x32xf32> -> vector<8x32xf32>
    %615 = vector.broadcast %3 : vector<1x32xf32> to vector<8x32xf32>
    %616 = arith.addf %614, %615 : vector<8x32xf32>
    %cst_86 = arith.constant 0.000000e+00 : f32
    %617 = vector.broadcast %cst_86 : f32 to vector<8x32xf32>
    %618 = arith.maximumf %616, %617 : vector<8x32xf32>
    %cst_87 = arith.constant dense<0.000000e+00> : vector<8x128xf32>
    %619 = tpu.matmul %618, %4, %cst_87 {dimension_numbers = #tpu.dot_dimension_numbers<[1], [0], [0], [1], [0, 0, 1, 1], [], []>} : vector<8x32xf32>, vector<32x128xf32>, vector<8x128xf32> -> vector<8x128xf32>
    %620 = vector.broadcast %5 : vector<1x128xf32> to vector<8x128xf32>
    %621 = arith.addf %619, %620 : vector<8x128xf32>
    %622 = math.tanh %621 : vector<8x128xf32>
    %623 = vector.extract_strided_slice %622 {offsets = [0, 0], sizes = [8, 32], strides = [1, 1]} : vector<8x128xf32> to vector<8x32xf32>
    %624 = arith.mulf %623, %534 : vector<8x32xf32>
    %625 = vector.extract_strided_slice %622 {offsets = [0, 32], sizes = [8, 32], strides = [1, 1]} : vector<8x128xf32> to vector<8x32xf32>
    %626 = arith.mulf %625, %537 : vector<8x32xf32>
    %627 = arith.addf %624, %626 : vector<8x32xf32>
    %628 = vector.extract_strided_slice %622 {offsets = [0, 64], sizes = [8, 32], strides = [1, 1]} : vector<8x128xf32> to vector<8x32xf32>
    %629 = arith.mulf %628, %540 : vector<8x32xf32>
    %630 = arith.addf %627, %629 : vector<8x32xf32>
    %631 = vector.extract_strided_slice %622 {offsets = [0, 96], sizes = [8, 32], strides = [1, 1]} : vector<8x128xf32> to vector<8x32xf32>
    %632 = arith.mulf %631, %543 : vector<8x32xf32>
    %633 = arith.addf %630, %632 : vector<8x32xf32>
    %634 = arith.addf %586, %610 : vector<8x32xf32>
    %cst_88 = arith.constant 3.000000e+00 : f32
    %635 = vector.broadcast %cst_88 : f32 to vector<8x32xf32>
    %636 = arith.mulf %635, %634 : vector<8x32xf32>
    %637 = arith.addf %563, %636 : vector<8x32xf32>
    %638 = arith.addf %637, %633 : vector<8x32xf32>
    %cst_89 = arith.constant 1.250000e-01 : f32
    %639 = vector.broadcast %cst_89 : f32 to vector<8x32xf32>
    %640 = arith.mulf %639, %638 : vector<8x32xf32>
    %641 = arith.addf %482, %640 : vector<8x32xf32>
    %c1_i32_90 = arith.constant 1 : i32
    %642 = arith.addi %491, %c1_i32_90 : i32
    %c4_i32_91 = arith.constant 4 : i32
    %643 = arith.subi %642, %c4_i32_91 : i32
    %c0_i32_92 = arith.constant 0 : i32
    %644 = arith.cmpi sge, %643, %c0_i32_92 : i32
    %c4_i32_93 = arith.constant 4 : i32
    %645 = arith.cmpi slt, %643, %c4_i32_93 : i32
    %646 = arith.andi %644, %645 : i1
    %647 = arith.extui %646 : i1 to i32
    %c0_i32_94 = arith.constant 0 : i32
    %648 = arith.cmpi ne, %647, %c0_i32_94 : i32
    scf.if %648 {
      %1285 = arith.index_cast %643 : i32 to index
      %c0_177 = arith.constant 0 : index
      %c0_178 = arith.constant 0 : index
      %1286 = vector.load %arg9[%1285, %c0_177, %c0_178] : memref<4x8x32xf32, #tpu.memory_space<vmem>>, vector<1x8x32xf32>
      %1287 = vector.shape_cast %1286 : vector<1x8x32xf32> to vector<8x32xf32>
      %1288 = vector.shape_cast %641 : vector<8x32xf32> to vector<1x8x32xf32>
      tpu.vector_store %arg9[%1285, %c0_177, %c0_178], %1288 {strides = array<i32>} : memref<4x8x32xf32, #tpu.memory_space<vmem>>, vector<1x8x32xf32>,
    } else {
    }
    %c8_i32_95 = arith.constant 8 : i32
    %649 = arith.muli %c0_i32, %c8_i32_95 : i32
    %c4_i32_96 = arith.constant 4 : i32
    %650 = arith.addi %649, %c4_i32_96 : i32
    %651 = vector.extract_strided_slice %12 {offsets = [0, 64], sizes = [8, 4], strides = [1, 1]} : vector<8x128xf32> to vector<8x4xf32>
    %652 = vector.extract_strided_slice %651 {offsets = [0, 0], sizes = [8, 1], strides = [1, 1]} : vector<8x4xf32> to vector<8x1xf32>
    %653 = vector.shape_cast %652 : vector<8x1xf32> to vector<8x1xf32>
    %654 = vector.broadcast %653 : vector<8x1xf32> to vector<8x32xf32>
    %655 = vector.extract_strided_slice %651 {offsets = [0, 1], sizes = [8, 1], strides = [1, 1]} : vector<8x4xf32> to vector<8x1xf32>
    %656 = vector.shape_cast %655 : vector<8x1xf32> to vector<8x1xf32>
    %657 = vector.broadcast %656 : vector<8x1xf32> to vector<8x32xf32>
    %658 = vector.extract_strided_slice %651 {offsets = [0, 2], sizes = [8, 1], strides = [1, 1]} : vector<8x4xf32> to vector<8x1xf32>
    %659 = vector.shape_cast %658 : vector<8x1xf32> to vector<8x1xf32>
    %660 = vector.broadcast %659 : vector<8x1xf32> to vector<8x32xf32>
    %661 = vector.extract_strided_slice %651 {offsets = [0, 3], sizes = [8, 1], strides = [1, 1]} : vector<8x4xf32> to vector<8x1xf32>
    %662 = vector.shape_cast %661 : vector<8x1xf32> to vector<8x1xf32>
    %663 = vector.broadcast %662 : vector<8x1xf32> to vector<8x32xf32>
    %664 = vector.extract_strided_slice %12 {offsets = [0, 68], sizes = [8, 4], strides = [1, 1]} : vector<8x128xf32> to vector<8x4xf32>
    %665 = vector.extract_strided_slice %664 {offsets = [0, 0], sizes = [8, 1], strides = [1, 1]} : vector<8x4xf32> to vector<8x1xf32>
    %666 = vector.shape_cast %665 : vector<8x1xf32> to vector<8x1xf32>
    %667 = vector.broadcast %666 : vector<8x1xf32> to vector<8x32xf32>
    %668 = vector.extract_strided_slice %664 {offsets = [0, 1], sizes = [8, 1], strides = [1, 1]} : vector<8x4xf32> to vector<8x1xf32>
    %669 = vector.shape_cast %668 : vector<8x1xf32> to vector<8x1xf32>
    %670 = vector.broadcast %669 : vector<8x1xf32> to vector<8x32xf32>
    %671 = vector.extract_strided_slice %664 {offsets = [0, 2], sizes = [8, 1], strides = [1, 1]} : vector<8x4xf32> to vector<8x1xf32>
    %672 = vector.shape_cast %671 : vector<8x1xf32> to vector<8x1xf32>
    %673 = vector.broadcast %672 : vector<8x1xf32> to vector<8x32xf32>
    %674 = vector.extract_strided_slice %664 {offsets = [0, 3], sizes = [8, 1], strides = [1, 1]} : vector<8x4xf32> to vector<8x1xf32>
    %675 = vector.shape_cast %674 : vector<8x1xf32> to vector<8x1xf32>
    %676 = vector.broadcast %675 : vector<8x1xf32> to vector<8x32xf32>
    %677 = vector.extract_strided_slice %12 {offsets = [0, 72], sizes = [8, 4], strides = [1, 1]} : vector<8x128xf32> to vector<8x4xf32>
    %678 = vector.extract_strided_slice %677 {offsets = [0, 0], sizes = [8, 1], strides = [1, 1]} : vector<8x4xf32> to vector<8x1xf32>
    %679 = vector.shape_cast %678 : vector<8x1xf32> to vector<8x1xf32>
    %680 = vector.broadcast %679 : vector<8x1xf32> to vector<8x32xf32>
    %681 = vector.extract_strided_slice %677 {offsets = [0, 1], sizes = [8, 1], strides = [1, 1]} : vector<8x4xf32> to vector<8x1xf32>
    %682 = vector.shape_cast %681 : vector<8x1xf32> to vector<8x1xf32>
    %683 = vector.broadcast %682 : vector<8x1xf32> to vector<8x32xf32>
    %684 = vector.extract_strided_slice %677 {offsets = [0, 2], sizes = [8, 1], strides = [1, 1]} : vector<8x4xf32> to vector<8x1xf32>
    %685 = vector.shape_cast %684 : vector<8x1xf32> to vector<8x1xf32>
    %686 = vector.broadcast %685 : vector<8x1xf32> to vector<8x32xf32>
    %687 = vector.extract_strided_slice %677 {offsets = [0, 3], sizes = [8, 1], strides = [1, 1]} : vector<8x4xf32> to vector<8x1xf32>
    %688 = vector.shape_cast %687 : vector<8x1xf32> to vector<8x1xf32>
    %689 = vector.broadcast %688 : vector<8x1xf32> to vector<8x32xf32>
    %690 = vector.extract_strided_slice %12 {offsets = [0, 76], sizes = [8, 4], strides = [1, 1]} : vector<8x128xf32> to vector<8x4xf32>
    %691 = vector.extract_strided_slice %690 {offsets = [0, 0], sizes = [8, 1], strides = [1, 1]} : vector<8x4xf32> to vector<8x1xf32>
    %692 = vector.shape_cast %691 : vector<8x1xf32> to vector<8x1xf32>
    %693 = vector.broadcast %692 : vector<8x1xf32> to vector<8x32xf32>
    %694 = vector.extract_strided_slice %690 {offsets = [0, 1], sizes = [8, 1], strides = [1, 1]} : vector<8x4xf32> to vector<8x1xf32>
    %695 = vector.shape_cast %694 : vector<8x1xf32> to vector<8x1xf32>
    %696 = vector.broadcast %695 : vector<8x1xf32> to vector<8x32xf32>
    %697 = vector.extract_strided_slice %690 {offsets = [0, 2], sizes = [8, 1], strides = [1, 1]} : vector<8x4xf32> to vector<8x1xf32>
    %698 = vector.shape_cast %697 : vector<8x1xf32> to vector<8x1xf32>
    %699 = vector.broadcast %698 : vector<8x1xf32> to vector<8x32xf32>
    %700 = vector.extract_strided_slice %690 {offsets = [0, 3], sizes = [8, 1], strides = [1, 1]} : vector<8x4xf32> to vector<8x1xf32>
    %701 = vector.shape_cast %700 : vector<8x1xf32> to vector<8x1xf32>
    %702 = vector.broadcast %701 : vector<8x1xf32> to vector<8x32xf32>
    %cst_97 = arith.constant dense<0.000000e+00> : vector<8x32xf32>
    %703 = tpu.matmul %641, %2, %cst_97 {dimension_numbers = #tpu.dot_dimension_numbers<[1], [0], [0], [1], [0, 0, 1, 1], [], []>} : vector<8x32xf32>, vector<32x32xf32>, vector<8x32xf32> -> vector<8x32xf32>
    %704 = vector.broadcast %3 : vector<1x32xf32> to vector<8x32xf32>
    %705 = arith.addf %703, %704 : vector<8x32xf32>
    %cst_98 = arith.constant 0.000000e+00 : f32
    %706 = vector.broadcast %cst_98 : f32 to vector<8x32xf32>
    %707 = arith.maximumf %705, %706 : vector<8x32xf32>
    %cst_99 = arith.constant dense<0.000000e+00> : vector<8x128xf32>
    %708 = tpu.matmul %707, %4, %cst_99 {dimension_numbers = #tpu.dot_dimension_numbers<[1], [0], [0], [1], [0, 0, 1, 1], [], []>} : vector<8x32xf32>, vector<32x128xf32>, vector<8x128xf32> -> vector<8x128xf32>
    %709 = vector.broadcast %5 : vector<1x128xf32> to vector<8x128xf32>
    %710 = arith.addf %708, %709 : vector<8x128xf32>
    %711 = math.tanh %710 : vector<8x128xf32>
    %712 = vector.extract_strided_slice %711 {offsets = [0, 0], sizes = [8, 32], strides = [1, 1]} : vector<8x128xf32> to vector<8x32xf32>
    %713 = arith.mulf %712, %654 : vector<8x32xf32>
    %714 = vector.extract_strided_slice %711 {offsets = [0, 32], sizes = [8, 32], strides = [1, 1]} : vector<8x128xf32> to vector<8x32xf32>
    %715 = arith.mulf %714, %657 : vector<8x32xf32>
    %716 = arith.addf %713, %715 : vector<8x32xf32>
    %717 = vector.extract_strided_slice %711 {offsets = [0, 64], sizes = [8, 32], strides = [1, 1]} : vector<8x128xf32> to vector<8x32xf32>
    %718 = arith.mulf %717, %660 : vector<8x32xf32>
    %719 = arith.addf %716, %718 : vector<8x32xf32>
    %720 = vector.extract_strided_slice %711 {offsets = [0, 96], sizes = [8, 32], strides = [1, 1]} : vector<8x128xf32> to vector<8x32xf32>
    %721 = arith.mulf %720, %663 : vector<8x32xf32>
    %722 = arith.addf %719, %721 : vector<8x32xf32>
    %723 = vector.broadcast %cst_13 : f32 to vector<8x32xf32>
    %724 = arith.mulf %722, %723 : vector<8x32xf32>
    %725 = arith.addf %641, %724 : vector<8x32xf32>
    %cst_100 = arith.constant dense<0.000000e+00> : vector<8x32xf32>
    %726 = tpu.matmul %725, %2, %cst_100 {dimension_numbers = #tpu.dot_dimension_numbers<[1], [0], [0], [1], [0, 0, 1, 1], [], []>} : vector<8x32xf32>, vector<32x32xf32>, vector<8x32xf32> -> vector<8x32xf32>
    %727 = vector.broadcast %3 : vector<1x32xf32> to vector<8x32xf32>
    %728 = arith.addf %726, %727 : vector<8x32xf32>
    %cst_101 = arith.constant 0.000000e+00 : f32
    %729 = vector.broadcast %cst_101 : f32 to vector<8x32xf32>
    %730 = arith.maximumf %728, %729 : vector<8x32xf32>
    %cst_102 = arith.constant dense<0.000000e+00> : vector<8x128xf32>
    %731 = tpu.matmul %730, %4, %cst_102 {dimension_numbers = #tpu.dot_dimension_numbers<[1], [0], [0], [1], [0, 0, 1, 1], [], []>} : vector<8x32xf32>, vector<32x128xf32>, vector<8x128xf32> -> vector<8x128xf32>
    %732 = vector.broadcast %5 : vector<1x128xf32> to vector<8x128xf32>
    %733 = arith.addf %731, %732 : vector<8x128xf32>
    %734 = math.tanh %733 : vector<8x128xf32>
    %735 = vector.extract_strided_slice %734 {offsets = [0, 0], sizes = [8, 32], strides = [1, 1]} : vector<8x128xf32> to vector<8x32xf32>
    %736 = arith.mulf %735, %667 : vector<8x32xf32>
    %737 = vector.extract_strided_slice %734 {offsets = [0, 32], sizes = [8, 32], strides = [1, 1]} : vector<8x128xf32> to vector<8x32xf32>
    %738 = arith.mulf %737, %670 : vector<8x32xf32>
    %739 = arith.addf %736, %738 : vector<8x32xf32>
    %740 = vector.extract_strided_slice %734 {offsets = [0, 64], sizes = [8, 32], strides = [1, 1]} : vector<8x128xf32> to vector<8x32xf32>
    %741 = arith.mulf %740, %673 : vector<8x32xf32>
    %742 = arith.addf %739, %741 : vector<8x32xf32>
    %743 = vector.extract_strided_slice %734 {offsets = [0, 96], sizes = [8, 32], strides = [1, 1]} : vector<8x128xf32> to vector<8x32xf32>
    %744 = arith.mulf %743, %676 : vector<8x32xf32>
    %745 = arith.addf %742, %744 : vector<8x32xf32>
    %746 = vector.broadcast %cst_13 : f32 to vector<8x32xf32>
    %747 = arith.mulf %722, %746 : vector<8x32xf32>
    %748 = arith.subf %745, %747 : vector<8x32xf32>
    %749 = arith.addf %641, %748 : vector<8x32xf32>
    %cst_103 = arith.constant dense<0.000000e+00> : vector<8x32xf32>
    %750 = tpu.matmul %749, %2, %cst_103 {dimension_numbers = #tpu.dot_dimension_numbers<[1], [0], [0], [1], [0, 0, 1, 1], [], []>} : vector<8x32xf32>, vector<32x32xf32>, vector<8x32xf32> -> vector<8x32xf32>
    %751 = vector.broadcast %3 : vector<1x32xf32> to vector<8x32xf32>
    %752 = arith.addf %750, %751 : vector<8x32xf32>
    %cst_104 = arith.constant 0.000000e+00 : f32
    %753 = vector.broadcast %cst_104 : f32 to vector<8x32xf32>
    %754 = arith.maximumf %752, %753 : vector<8x32xf32>
    %cst_105 = arith.constant dense<0.000000e+00> : vector<8x128xf32>
    %755 = tpu.matmul %754, %4, %cst_105 {dimension_numbers = #tpu.dot_dimension_numbers<[1], [0], [0], [1], [0, 0, 1, 1], [], []>} : vector<8x32xf32>, vector<32x128xf32>, vector<8x128xf32> -> vector<8x128xf32>
    %756 = vector.broadcast %5 : vector<1x128xf32> to vector<8x128xf32>
    %757 = arith.addf %755, %756 : vector<8x128xf32>
    %758 = math.tanh %757 : vector<8x128xf32>
    %759 = vector.extract_strided_slice %758 {offsets = [0, 0], sizes = [8, 32], strides = [1, 1]} : vector<8x128xf32> to vector<8x32xf32>
    %760 = arith.mulf %759, %680 : vector<8x32xf32>
    %761 = vector.extract_strided_slice %758 {offsets = [0, 32], sizes = [8, 32], strides = [1, 1]} : vector<8x128xf32> to vector<8x32xf32>
    %762 = arith.mulf %761, %683 : vector<8x32xf32>
    %763 = arith.addf %760, %762 : vector<8x32xf32>
    %764 = vector.extract_strided_slice %758 {offsets = [0, 64], sizes = [8, 32], strides = [1, 1]} : vector<8x128xf32> to vector<8x32xf32>
    %765 = arith.mulf %764, %686 : vector<8x32xf32>
    %766 = arith.addf %763, %765 : vector<8x32xf32>
    %767 = vector.extract_strided_slice %758 {offsets = [0, 96], sizes = [8, 32], strides = [1, 1]} : vector<8x128xf32> to vector<8x32xf32>
    %768 = arith.mulf %767, %689 : vector<8x32xf32>
    %769 = arith.addf %766, %768 : vector<8x32xf32>
    %770 = arith.subf %722, %745 : vector<8x32xf32>
    %771 = arith.addf %770, %769 : vector<8x32xf32>
    %772 = arith.addf %641, %771 : vector<8x32xf32>
    %cst_106 = arith.constant dense<0.000000e+00> : vector<8x32xf32>
    %773 = tpu.matmul %772, %2, %cst_106 {dimension_numbers = #tpu.dot_dimension_numbers<[1], [0], [0], [1], [0, 0, 1, 1], [], []>} : vector<8x32xf32>, vector<32x32xf32>, vector<8x32xf32> -> vector<8x32xf32>
    %774 = vector.broadcast %3 : vector<1x32xf32> to vector<8x32xf32>
    %775 = arith.addf %773, %774 : vector<8x32xf32>
    %cst_107 = arith.constant 0.000000e+00 : f32
    %776 = vector.broadcast %cst_107 : f32 to vector<8x32xf32>
    %777 = arith.maximumf %775, %776 : vector<8x32xf32>
    %cst_108 = arith.constant dense<0.000000e+00> : vector<8x128xf32>
    %778 = tpu.matmul %777, %4, %cst_108 {dimension_numbers = #tpu.dot_dimension_numbers<[1], [0], [0], [1], [0, 0, 1, 1], [], []>} : vector<8x32xf32>, vector<32x128xf32>, vector<8x128xf32> -> vector<8x128xf32>
    %779 = vector.broadcast %5 : vector<1x128xf32> to vector<8x128xf32>
    %780 = arith.addf %778, %779 : vector<8x128xf32>
    %781 = math.tanh %780 : vector<8x128xf32>
    %782 = vector.extract_strided_slice %781 {offsets = [0, 0], sizes = [8, 32], strides = [1, 1]} : vector<8x128xf32> to vector<8x32xf32>
    %783 = arith.mulf %782, %693 : vector<8x32xf32>
    %784 = vector.extract_strided_slice %781 {offsets = [0, 32], sizes = [8, 32], strides = [1, 1]} : vector<8x128xf32> to vector<8x32xf32>
    %785 = arith.mulf %784, %696 : vector<8x32xf32>
    %786 = arith.addf %783, %785 : vector<8x32xf32>
    %787 = vector.extract_strided_slice %781 {offsets = [0, 64], sizes = [8, 32], strides = [1, 1]} : vector<8x128xf32> to vector<8x32xf32>
    %788 = arith.mulf %787, %699 : vector<8x32xf32>
    %789 = arith.addf %786, %788 : vector<8x32xf32>
    %790 = vector.extract_strided_slice %781 {offsets = [0, 96], sizes = [8, 32], strides = [1, 1]} : vector<8x128xf32> to vector<8x32xf32>
    %791 = arith.mulf %790, %702 : vector<8x32xf32>
    %792 = arith.addf %789, %791 : vector<8x32xf32>
    %793 = arith.addf %745, %769 : vector<8x32xf32>
    %cst_109 = arith.constant 3.000000e+00 : f32
    %794 = vector.broadcast %cst_109 : f32 to vector<8x32xf32>
    %795 = arith.mulf %794, %793 : vector<8x32xf32>
    %796 = arith.addf %722, %795 : vector<8x32xf32>
    %797 = arith.addf %796, %792 : vector<8x32xf32>
    %cst_110 = arith.constant 1.250000e-01 : f32
    %798 = vector.broadcast %cst_110 : f32 to vector<8x32xf32>
    %799 = arith.mulf %798, %797 : vector<8x32xf32>
    %800 = arith.addf %641, %799 : vector<8x32xf32>
    %c1_i32_111 = arith.constant 1 : i32
    %801 = arith.addi %650, %c1_i32_111 : i32
    %c4_i32_112 = arith.constant 4 : i32
    %802 = arith.subi %801, %c4_i32_112 : i32
    %c0_i32_113 = arith.constant 0 : i32
    %803 = arith.cmpi sge, %802, %c0_i32_113 : i32
    %c4_i32_114 = arith.constant 4 : i32
    %804 = arith.cmpi slt, %802, %c4_i32_114 : i32
    %805 = arith.andi %803, %804 : i1
    %806 = arith.extui %805 : i1 to i32
    %c0_i32_115 = arith.constant 0 : i32
    %807 = arith.cmpi ne, %806, %c0_i32_115 : i32
    scf.if %807 {
      %1285 = arith.index_cast %802 : i32 to index
      %c0_177 = arith.constant 0 : index
      %c0_178 = arith.constant 0 : index
      %1286 = vector.load %arg9[%1285, %c0_177, %c0_178] : memref<4x8x32xf32, #tpu.memory_space<vmem>>, vector<1x8x32xf32>
      %1287 = vector.shape_cast %1286 : vector<1x8x32xf32> to vector<8x32xf32>
      %1288 = vector.shape_cast %800 : vector<8x32xf32> to vector<1x8x32xf32>
      tpu.vector_store %arg9[%1285, %c0_177, %c0_178], %1288 {strides = array<i32>} : memref<4x8x32xf32, #tpu.memory_space<vmem>>, vector<1x8x32xf32>,
    } else {
    }
    %c8_i32_116 = arith.constant 8 : i32
    %808 = arith.muli %c0_i32, %c8_i32_116 : i32
    %c5_i32 = arith.constant 5 : i32
    %809 = arith.addi %808, %c5_i32 : i32
    %810 = vector.extract_strided_slice %12 {offsets = [0, 80], sizes = [8, 4], strides = [1, 1]} : vector<8x128xf32> to vector<8x4xf32>
    %811 = vector.extract_strided_slice %810 {offsets = [0, 0], sizes = [8, 1], strides = [1, 1]} : vector<8x4xf32> to vector<8x1xf32>
    %812 = vector.shape_cast %811 : vector<8x1xf32> to vector<8x1xf32>
    %813 = vector.broadcast %812 : vector<8x1xf32> to vector<8x32xf32>
    %814 = vector.extract_strided_slice %810 {offsets = [0, 1], sizes = [8, 1], strides = [1, 1]} : vector<8x4xf32> to vector<8x1xf32>
    %815 = vector.shape_cast %814 : vector<8x1xf32> to vector<8x1xf32>
    %816 = vector.broadcast %815 : vector<8x1xf32> to vector<8x32xf32>
    %817 = vector.extract_strided_slice %810 {offsets = [0, 2], sizes = [8, 1], strides = [1, 1]} : vector<8x4xf32> to vector<8x1xf32>
    %818 = vector.shape_cast %817 : vector<8x1xf32> to vector<8x1xf32>
    %819 = vector.broadcast %818 : vector<8x1xf32> to vector<8x32xf32>
    %820 = vector.extract_strided_slice %810 {offsets = [0, 3], sizes = [8, 1], strides = [1, 1]} : vector<8x4xf32> to vector<8x1xf32>
    %821 = vector.shape_cast %820 : vector<8x1xf32> to vector<8x1xf32>
    %822 = vector.broadcast %821 : vector<8x1xf32> to vector<8x32xf32>
    %823 = vector.extract_strided_slice %12 {offsets = [0, 84], sizes = [8, 4], strides = [1, 1]} : vector<8x128xf32> to vector<8x4xf32>
    %824 = vector.extract_strided_slice %823 {offsets = [0, 0], sizes = [8, 1], strides = [1, 1]} : vector<8x4xf32> to vector<8x1xf32>
    %825 = vector.shape_cast %824 : vector<8x1xf32> to vector<8x1xf32>
    %826 = vector.broadcast %825 : vector<8x1xf32> to vector<8x32xf32>
    %827 = vector.extract_strided_slice %823 {offsets = [0, 1], sizes = [8, 1], strides = [1, 1]} : vector<8x4xf32> to vector<8x1xf32>
    %828 = vector.shape_cast %827 : vector<8x1xf32> to vector<8x1xf32>
    %829 = vector.broadcast %828 : vector<8x1xf32> to vector<8x32xf32>
    %830 = vector.extract_strided_slice %823 {offsets = [0, 2], sizes = [8, 1], strides = [1, 1]} : vector<8x4xf32> to vector<8x1xf32>
    %831 = vector.shape_cast %830 : vector<8x1xf32> to vector<8x1xf32>
    %832 = vector.broadcast %831 : vector<8x1xf32> to vector<8x32xf32>
    %833 = vector.extract_strided_slice %823 {offsets = [0, 3], sizes = [8, 1], strides = [1, 1]} : vector<8x4xf32> to vector<8x1xf32>
    %834 = vector.shape_cast %833 : vector<8x1xf32> to vector<8x1xf32>
    %835 = vector.broadcast %834 : vector<8x1xf32> to vector<8x32xf32>
    %836 = vector.extract_strided_slice %12 {offsets = [0, 88], sizes = [8, 4], strides = [1, 1]} : vector<8x128xf32> to vector<8x4xf32>
    %837 = vector.extract_strided_slice %836 {offsets = [0, 0], sizes = [8, 1], strides = [1, 1]} : vector<8x4xf32> to vector<8x1xf32>
    %838 = vector.shape_cast %837 : vector<8x1xf32> to vector<8x1xf32>
    %839 = vector.broadcast %838 : vector<8x1xf32> to vector<8x32xf32>
    %840 = vector.extract_strided_slice %836 {offsets = [0, 1], sizes = [8, 1], strides = [1, 1]} : vector<8x4xf32> to vector<8x1xf32>
    %841 = vector.shape_cast %840 : vector<8x1xf32> to vector<8x1xf32>
    %842 = vector.broadcast %841 : vector<8x1xf32> to vector<8x32xf32>
    %843 = vector.extract_strided_slice %836 {offsets = [0, 2], sizes = [8, 1], strides = [1, 1]} : vector<8x4xf32> to vector<8x1xf32>
    %844 = vector.shape_cast %843 : vector<8x1xf32> to vector<8x1xf32>
    %845 = vector.broadcast %844 : vector<8x1xf32> to vector<8x32xf32>
    %846 = vector.extract_strided_slice %836 {offsets = [0, 3], sizes = [8, 1], strides = [1, 1]} : vector<8x4xf32> to vector<8x1xf32>
    %847 = vector.shape_cast %846 : vector<8x1xf32> to vector<8x1xf32>
    %848 = vector.broadcast %847 : vector<8x1xf32> to vector<8x32xf32>
    %849 = vector.extract_strided_slice %12 {offsets = [0, 92], sizes = [8, 4], strides = [1, 1]} : vector<8x128xf32> to vector<8x4xf32>
    %850 = vector.extract_strided_slice %849 {offsets = [0, 0], sizes = [8, 1], strides = [1, 1]} : vector<8x4xf32> to vector<8x1xf32>
    %851 = vector.shape_cast %850 : vector<8x1xf32> to vector<8x1xf32>
    %852 = vector.broadcast %851 : vector<8x1xf32> to vector<8x32xf32>
    %853 = vector.extract_strided_slice %849 {offsets = [0, 1], sizes = [8, 1], strides = [1, 1]} : vector<8x4xf32> to vector<8x1xf32>
    %854 = vector.shape_cast %853 : vector<8x1xf32> to vector<8x1xf32>
    %855 = vector.broadcast %854 : vector<8x1xf32> to vector<8x32xf32>
    %856 = vector.extract_strided_slice %849 {offsets = [0, 2], sizes = [8, 1], strides = [1, 1]} : vector<8x4xf32> to vector<8x1xf32>
    %857 = vector.shape_cast %856 : vector<8x1xf32> to vector<8x1xf32>
    %858 = vector.broadcast %857 : vector<8x1xf32> to vector<8x32xf32>
    %859 = vector.extract_strided_slice %849 {offsets = [0, 3], sizes = [8, 1], strides = [1, 1]} : vector<8x4xf32> to vector<8x1xf32>
    %860 = vector.shape_cast %859 : vector<8x1xf32> to vector<8x1xf32>
    %861 = vector.broadcast %860 : vector<8x1xf32> to vector<8x32xf32>
    %cst_117 = arith.constant dense<0.000000e+00> : vector<8x32xf32>
    %862 = tpu.matmul %800, %2, %cst_117 {dimension_numbers = #tpu.dot_dimension_numbers<[1], [0], [0], [1], [0, 0, 1, 1], [], []>} : vector<8x32xf32>, vector<32x32xf32>, vector<8x32xf32> -> vector<8x32xf32>
    %863 = vector.broadcast %3 : vector<1x32xf32> to vector<8x32xf32>
    %864 = arith.addf %862, %863 : vector<8x32xf32>
    %cst_118 = arith.constant 0.000000e+00 : f32
    %865 = vector.broadcast %cst_118 : f32 to vector<8x32xf32>
    %866 = arith.maximumf %864, %865 : vector<8x32xf32>
    %cst_119 = arith.constant dense<0.000000e+00> : vector<8x128xf32>
    %867 = tpu.matmul %866, %4, %cst_119 {dimension_numbers = #tpu.dot_dimension_numbers<[1], [0], [0], [1], [0, 0, 1, 1], [], []>} : vector<8x32xf32>, vector<32x128xf32>, vector<8x128xf32> -> vector<8x128xf32>
    %868 = vector.broadcast %5 : vector<1x128xf32> to vector<8x128xf32>
    %869 = arith.addf %867, %868 : vector<8x128xf32>
    %870 = math.tanh %869 : vector<8x128xf32>
    %871 = vector.extract_strided_slice %870 {offsets = [0, 0], sizes = [8, 32], strides = [1, 1]} : vector<8x128xf32> to vector<8x32xf32>
    %872 = arith.mulf %871, %813 : vector<8x32xf32>
    %873 = vector.extract_strided_slice %870 {offsets = [0, 32], sizes = [8, 32], strides = [1, 1]} : vector<8x128xf32> to vector<8x32xf32>
    %874 = arith.mulf %873, %816 : vector<8x32xf32>
    %875 = arith.addf %872, %874 : vector<8x32xf32>
    %876 = vector.extract_strided_slice %870 {offsets = [0, 64], sizes = [8, 32], strides = [1, 1]} : vector<8x128xf32> to vector<8x32xf32>
    %877 = arith.mulf %876, %819 : vector<8x32xf32>
    %878 = arith.addf %875, %877 : vector<8x32xf32>
    %879 = vector.extract_strided_slice %870 {offsets = [0, 96], sizes = [8, 32], strides = [1, 1]} : vector<8x128xf32> to vector<8x32xf32>
    %880 = arith.mulf %879, %822 : vector<8x32xf32>
    %881 = arith.addf %878, %880 : vector<8x32xf32>
    %882 = vector.broadcast %cst_13 : f32 to vector<8x32xf32>
    %883 = arith.mulf %881, %882 : vector<8x32xf32>
    %884 = arith.addf %800, %883 : vector<8x32xf32>
    %cst_120 = arith.constant dense<0.000000e+00> : vector<8x32xf32>
    %885 = tpu.matmul %884, %2, %cst_120 {dimension_numbers = #tpu.dot_dimension_numbers<[1], [0], [0], [1], [0, 0, 1, 1], [], []>} : vector<8x32xf32>, vector<32x32xf32>, vector<8x32xf32> -> vector<8x32xf32>
    %886 = vector.broadcast %3 : vector<1x32xf32> to vector<8x32xf32>
    %887 = arith.addf %885, %886 : vector<8x32xf32>
    %cst_121 = arith.constant 0.000000e+00 : f32
    %888 = vector.broadcast %cst_121 : f32 to vector<8x32xf32>
    %889 = arith.maximumf %887, %888 : vector<8x32xf32>
    %cst_122 = arith.constant dense<0.000000e+00> : vector<8x128xf32>
    %890 = tpu.matmul %889, %4, %cst_122 {dimension_numbers = #tpu.dot_dimension_numbers<[1], [0], [0], [1], [0, 0, 1, 1], [], []>} : vector<8x32xf32>, vector<32x128xf32>, vector<8x128xf32> -> vector<8x128xf32>
    %891 = vector.broadcast %5 : vector<1x128xf32> to vector<8x128xf32>
    %892 = arith.addf %890, %891 : vector<8x128xf32>
    %893 = math.tanh %892 : vector<8x128xf32>
    %894 = vector.extract_strided_slice %893 {offsets = [0, 0], sizes = [8, 32], strides = [1, 1]} : vector<8x128xf32> to vector<8x32xf32>
    %895 = arith.mulf %894, %826 : vector<8x32xf32>
    %896 = vector.extract_strided_slice %893 {offsets = [0, 32], sizes = [8, 32], strides = [1, 1]} : vector<8x128xf32> to vector<8x32xf32>
    %897 = arith.mulf %896, %829 : vector<8x32xf32>
    %898 = arith.addf %895, %897 : vector<8x32xf32>
    %899 = vector.extract_strided_slice %893 {offsets = [0, 64], sizes = [8, 32], strides = [1, 1]} : vector<8x128xf32> to vector<8x32xf32>
    %900 = arith.mulf %899, %832 : vector<8x32xf32>
    %901 = arith.addf %898, %900 : vector<8x32xf32>
    %902 = vector.extract_strided_slice %893 {offsets = [0, 96], sizes = [8, 32], strides = [1, 1]} : vector<8x128xf32> to vector<8x32xf32>
    %903 = arith.mulf %902, %835 : vector<8x32xf32>
    %904 = arith.addf %901, %903 : vector<8x32xf32>
    %905 = vector.broadcast %cst_13 : f32 to vector<8x32xf32>
    %906 = arith.mulf %881, %905 : vector<8x32xf32>
    %907 = arith.subf %904, %906 : vector<8x32xf32>
    %908 = arith.addf %800, %907 : vector<8x32xf32>
    %cst_123 = arith.constant dense<0.000000e+00> : vector<8x32xf32>
    %909 = tpu.matmul %908, %2, %cst_123 {dimension_numbers = #tpu.dot_dimension_numbers<[1], [0], [0], [1], [0, 0, 1, 1], [], []>} : vector<8x32xf32>, vector<32x32xf32>, vector<8x32xf32> -> vector<8x32xf32>
    %910 = vector.broadcast %3 : vector<1x32xf32> to vector<8x32xf32>
    %911 = arith.addf %909, %910 : vector<8x32xf32>
    %cst_124 = arith.constant 0.000000e+00 : f32
    %912 = vector.broadcast %cst_124 : f32 to vector<8x32xf32>
    %913 = arith.maximumf %911, %912 : vector<8x32xf32>
    %cst_125 = arith.constant dense<0.000000e+00> : vector<8x128xf32>
    %914 = tpu.matmul %913, %4, %cst_125 {dimension_numbers = #tpu.dot_dimension_numbers<[1], [0], [0], [1], [0, 0, 1, 1], [], []>} : vector<8x32xf32>, vector<32x128xf32>, vector<8x128xf32> -> vector<8x128xf32>
    %915 = vector.broadcast %5 : vector<1x128xf32> to vector<8x128xf32>
    %916 = arith.addf %914, %915 : vector<8x128xf32>
    %917 = math.tanh %916 : vector<8x128xf32>
    %918 = vector.extract_strided_slice %917 {offsets = [0, 0], sizes = [8, 32], strides = [1, 1]} : vector<8x128xf32> to vector<8x32xf32>
    %919 = arith.mulf %918, %839 : vector<8x32xf32>
    %920 = vector.extract_strided_slice %917 {offsets = [0, 32], sizes = [8, 32], strides = [1, 1]} : vector<8x128xf32> to vector<8x32xf32>
    %921 = arith.mulf %920, %842 : vector<8x32xf32>
    %922 = arith.addf %919, %921 : vector<8x32xf32>
    %923 = vector.extract_strided_slice %917 {offsets = [0, 64], sizes = [8, 32], strides = [1, 1]} : vector<8x128xf32> to vector<8x32xf32>
    %924 = arith.mulf %923, %845 : vector<8x32xf32>
    %925 = arith.addf %922, %924 : vector<8x32xf32>
    %926 = vector.extract_strided_slice %917 {offsets = [0, 96], sizes = [8, 32], strides = [1, 1]} : vector<8x128xf32> to vector<8x32xf32>
    %927 = arith.mulf %926, %848 : vector<8x32xf32>
    %928 = arith.addf %925, %927 : vector<8x32xf32>
    %929 = arith.subf %881, %904 : vector<8x32xf32>
    %930 = arith.addf %929, %928 : vector<8x32xf32>
    %931 = arith.addf %800, %930 : vector<8x32xf32>
    %cst_126 = arith.constant dense<0.000000e+00> : vector<8x32xf32>
    %932 = tpu.matmul %931, %2, %cst_126 {dimension_numbers = #tpu.dot_dimension_numbers<[1], [0], [0], [1], [0, 0, 1, 1], [], []>} : vector<8x32xf32>, vector<32x32xf32>, vector<8x32xf32> -> vector<8x32xf32>
    %933 = vector.broadcast %3 : vector<1x32xf32> to vector<8x32xf32>
    %934 = arith.addf %932, %933 : vector<8x32xf32>
    %cst_127 = arith.constant 0.000000e+00 : f32
    %935 = vector.broadcast %cst_127 : f32 to vector<8x32xf32>
    %936 = arith.maximumf %934, %935 : vector<8x32xf32>
    %cst_128 = arith.constant dense<0.000000e+00> : vector<8x128xf32>
    %937 = tpu.matmul %936, %4, %cst_128 {dimension_numbers = #tpu.dot_dimension_numbers<[1], [0], [0], [1], [0, 0, 1, 1], [], []>} : vector<8x32xf32>, vector<32x128xf32>, vector<8x128xf32> -> vector<8x128xf32>
    %938 = vector.broadcast %5 : vector<1x128xf32> to vector<8x128xf32>
    %939 = arith.addf %937, %938 : vector<8x128xf32>
    %940 = math.tanh %939 : vector<8x128xf32>
    %941 = vector.extract_strided_slice %940 {offsets = [0, 0], sizes = [8, 32], strides = [1, 1]} : vector<8x128xf32> to vector<8x32xf32>
    %942 = arith.mulf %941, %852 : vector<8x32xf32>
    %943 = vector.extract_strided_slice %940 {offsets = [0, 32], sizes = [8, 32], strides = [1, 1]} : vector<8x128xf32> to vector<8x32xf32>
    %944 = arith.mulf %943, %855 : vector<8x32xf32>
    %945 = arith.addf %942, %944 : vector<8x32xf32>
    %946 = vector.extract_strided_slice %940 {offsets = [0, 64], sizes = [8, 32], strides = [1, 1]} : vector<8x128xf32> to vector<8x32xf32>
    %947 = arith.mulf %946, %858 : vector<8x32xf32>
    %948 = arith.addf %945, %947 : vector<8x32xf32>
    %949 = vector.extract_strided_slice %940 {offsets = [0, 96], sizes = [8, 32], strides = [1, 1]} : vector<8x128xf32> to vector<8x32xf32>
    %950 = arith.mulf %949, %861 : vector<8x32xf32>
    %951 = arith.addf %948, %950 : vector<8x32xf32>
    %952 = arith.addf %904, %928 : vector<8x32xf32>
    %cst_129 = arith.constant 3.000000e+00 : f32
    %953 = vector.broadcast %cst_129 : f32 to vector<8x32xf32>
    %954 = arith.mulf %953, %952 : vector<8x32xf32>
    %955 = arith.addf %881, %954 : vector<8x32xf32>
    %956 = arith.addf %955, %951 : vector<8x32xf32>
    %cst_130 = arith.constant 1.250000e-01 : f32
    %957 = vector.broadcast %cst_130 : f32 to vector<8x32xf32>
    %958 = arith.mulf %957, %956 : vector<8x32xf32>
    %959 = arith.addf %800, %958 : vector<8x32xf32>
    %c1_i32_131 = arith.constant 1 : i32
    %960 = arith.addi %809, %c1_i32_131 : i32
    %c4_i32_132 = arith.constant 4 : i32
    %961 = arith.subi %960, %c4_i32_132 : i32
    %c0_i32_133 = arith.constant 0 : i32
    %962 = arith.cmpi sge, %961, %c0_i32_133 : i32
    %c4_i32_134 = arith.constant 4 : i32
    %963 = arith.cmpi slt, %961, %c4_i32_134 : i32
    %964 = arith.andi %962, %963 : i1
    %965 = arith.extui %964 : i1 to i32
    %c0_i32_135 = arith.constant 0 : i32
    %966 = arith.cmpi ne, %965, %c0_i32_135 : i32
    scf.if %966 {
      %1285 = arith.index_cast %961 : i32 to index
      %c0_177 = arith.constant 0 : index
      %c0_178 = arith.constant 0 : index
      %1286 = vector.load %arg9[%1285, %c0_177, %c0_178] : memref<4x8x32xf32, #tpu.memory_space<vmem>>, vector<1x8x32xf32>
      %1287 = vector.shape_cast %1286 : vector<1x8x32xf32> to vector<8x32xf32>
      %1288 = vector.shape_cast %959 : vector<8x32xf32> to vector<1x8x32xf32>
      tpu.vector_store %arg9[%1285, %c0_177, %c0_178], %1288 {strides = array<i32>} : memref<4x8x32xf32, #tpu.memory_space<vmem>>, vector<1x8x32xf32>,
    } else {
    }
    %c8_i32_136 = arith.constant 8 : i32
    %967 = arith.muli %c0_i32, %c8_i32_136 : i32
    %c6_i32 = arith.constant 6 : i32
    %968 = arith.addi %967, %c6_i32 : i32
    %969 = vector.extract_strided_slice %12 {offsets = [0, 96], sizes = [8, 4], strides = [1, 1]} : vector<8x128xf32> to vector<8x4xf32>
    %970 = vector.extract_strided_slice %969 {offsets = [0, 0], sizes = [8, 1], strides = [1, 1]} : vector<8x4xf32> to vector<8x1xf32>
    %971 = vector.shape_cast %970 : vector<8x1xf32> to vector<8x1xf32>
    %972 = vector.broadcast %971 : vector<8x1xf32> to vector<8x32xf32>
    %973 = vector.extract_strided_slice %969 {offsets = [0, 1], sizes = [8, 1], strides = [1, 1]} : vector<8x4xf32> to vector<8x1xf32>
    %974 = vector.shape_cast %973 : vector<8x1xf32> to vector<8x1xf32>
    %975 = vector.broadcast %974 : vector<8x1xf32> to vector<8x32xf32>
    %976 = vector.extract_strided_slice %969 {offsets = [0, 2], sizes = [8, 1], strides = [1, 1]} : vector<8x4xf32> to vector<8x1xf32>
    %977 = vector.shape_cast %976 : vector<8x1xf32> to vector<8x1xf32>
    %978 = vector.broadcast %977 : vector<8x1xf32> to vector<8x32xf32>
    %979 = vector.extract_strided_slice %969 {offsets = [0, 3], sizes = [8, 1], strides = [1, 1]} : vector<8x4xf32> to vector<8x1xf32>
    %980 = vector.shape_cast %979 : vector<8x1xf32> to vector<8x1xf32>
    %981 = vector.broadcast %980 : vector<8x1xf32> to vector<8x32xf32>
    %982 = vector.extract_strided_slice %12 {offsets = [0, 100], sizes = [8, 4], strides = [1, 1]} : vector<8x128xf32> to vector<8x4xf32>
    %983 = vector.extract_strided_slice %982 {offsets = [0, 0], sizes = [8, 1], strides = [1, 1]} : vector<8x4xf32> to vector<8x1xf32>
    %984 = vector.shape_cast %983 : vector<8x1xf32> to vector<8x1xf32>
    %985 = vector.broadcast %984 : vector<8x1xf32> to vector<8x32xf32>
    %986 = vector.extract_strided_slice %982 {offsets = [0, 1], sizes = [8, 1], strides = [1, 1]} : vector<8x4xf32> to vector<8x1xf32>
    %987 = vector.shape_cast %986 : vector<8x1xf32> to vector<8x1xf32>
    %988 = vector.broadcast %987 : vector<8x1xf32> to vector<8x32xf32>
    %989 = vector.extract_strided_slice %982 {offsets = [0, 2], sizes = [8, 1], strides = [1, 1]} : vector<8x4xf32> to vector<8x1xf32>
    %990 = vector.shape_cast %989 : vector<8x1xf32> to vector<8x1xf32>
    %991 = vector.broadcast %990 : vector<8x1xf32> to vector<8x32xf32>
    %992 = vector.extract_strided_slice %982 {offsets = [0, 3], sizes = [8, 1], strides = [1, 1]} : vector<8x4xf32> to vector<8x1xf32>
    %993 = vector.shape_cast %992 : vector<8x1xf32> to vector<8x1xf32>
    %994 = vector.broadcast %993 : vector<8x1xf32> to vector<8x32xf32>
    %995 = vector.extract_strided_slice %12 {offsets = [0, 104], sizes = [8, 4], strides = [1, 1]} : vector<8x128xf32> to vector<8x4xf32>
    %996 = vector.extract_strided_slice %995 {offsets = [0, 0], sizes = [8, 1], strides = [1, 1]} : vector<8x4xf32> to vector<8x1xf32>
    %997 = vector.shape_cast %996 : vector<8x1xf32> to vector<8x1xf32>
    %998 = vector.broadcast %997 : vector<8x1xf32> to vector<8x32xf32>
    %999 = vector.extract_strided_slice %995 {offsets = [0, 1], sizes = [8, 1], strides = [1, 1]} : vector<8x4xf32> to vector<8x1xf32>
    %1000 = vector.shape_cast %999 : vector<8x1xf32> to vector<8x1xf32>
    %1001 = vector.broadcast %1000 : vector<8x1xf32> to vector<8x32xf32>
    %1002 = vector.extract_strided_slice %995 {offsets = [0, 2], sizes = [8, 1], strides = [1, 1]} : vector<8x4xf32> to vector<8x1xf32>
    %1003 = vector.shape_cast %1002 : vector<8x1xf32> to vector<8x1xf32>
    %1004 = vector.broadcast %1003 : vector<8x1xf32> to vector<8x32xf32>
    %1005 = vector.extract_strided_slice %995 {offsets = [0, 3], sizes = [8, 1], strides = [1, 1]} : vector<8x4xf32> to vector<8x1xf32>
    %1006 = vector.shape_cast %1005 : vector<8x1xf32> to vector<8x1xf32>
    %1007 = vector.broadcast %1006 : vector<8x1xf32> to vector<8x32xf32>
    %1008 = vector.extract_strided_slice %12 {offsets = [0, 108], sizes = [8, 4], strides = [1, 1]} : vector<8x128xf32> to vector<8x4xf32>
    %1009 = vector.extract_strided_slice %1008 {offsets = [0, 0], sizes = [8, 1], strides = [1, 1]} : vector<8x4xf32> to vector<8x1xf32>
    %1010 = vector.shape_cast %1009 : vector<8x1xf32> to vector<8x1xf32>
    %1011 = vector.broadcast %1010 : vector<8x1xf32> to vector<8x32xf32>
    %1012 = vector.extract_strided_slice %1008 {offsets = [0, 1], sizes = [8, 1], strides = [1, 1]} : vector<8x4xf32> to vector<8x1xf32>
    %1013 = vector.shape_cast %1012 : vector<8x1xf32> to vector<8x1xf32>
    %1014 = vector.broadcast %1013 : vector<8x1xf32> to vector<8x32xf32>
    %1015 = vector.extract_strided_slice %1008 {offsets = [0, 2], sizes = [8, 1], strides = [1, 1]} : vector<8x4xf32> to vector<8x1xf32>
    %1016 = vector.shape_cast %1015 : vector<8x1xf32> to vector<8x1xf32>
    %1017 = vector.broadcast %1016 : vector<8x1xf32> to vector<8x32xf32>
    %1018 = vector.extract_strided_slice %1008 {offsets = [0, 3], sizes = [8, 1], strides = [1, 1]} : vector<8x4xf32> to vector<8x1xf32>
    %1019 = vector.shape_cast %1018 : vector<8x1xf32> to vector<8x1xf32>
    %1020 = vector.broadcast %1019 : vector<8x1xf32> to vector<8x32xf32>
    %cst_137 = arith.constant dense<0.000000e+00> : vector<8x32xf32>
    %1021 = tpu.matmul %959, %2, %cst_137 {dimension_numbers = #tpu.dot_dimension_numbers<[1], [0], [0], [1], [0, 0, 1, 1], [], []>} : vector<8x32xf32>, vector<32x32xf32>, vector<8x32xf32> -> vector<8x32xf32>
    %1022 = vector.broadcast %3 : vector<1x32xf32> to vector<8x32xf32>
    %1023 = arith.addf %1021, %1022 : vector<8x32xf32>
    %cst_138 = arith.constant 0.000000e+00 : f32
    %1024 = vector.broadcast %cst_138 : f32 to vector<8x32xf32>
    %1025 = arith.maximumf %1023, %1024 : vector<8x32xf32>
    %cst_139 = arith.constant dense<0.000000e+00> : vector<8x128xf32>
    %1026 = tpu.matmul %1025, %4, %cst_139 {dimension_numbers = #tpu.dot_dimension_numbers<[1], [0], [0], [1], [0, 0, 1, 1], [], []>} : vector<8x32xf32>, vector<32x128xf32>, vector<8x128xf32> -> vector<8x128xf32>
    %1027 = vector.broadcast %5 : vector<1x128xf32> to vector<8x128xf32>
    %1028 = arith.addf %1026, %1027 : vector<8x128xf32>
    %1029 = math.tanh %1028 : vector<8x128xf32>
    %1030 = vector.extract_strided_slice %1029 {offsets = [0, 0], sizes = [8, 32], strides = [1, 1]} : vector<8x128xf32> to vector<8x32xf32>
    %1031 = arith.mulf %1030, %972 : vector<8x32xf32>
    %1032 = vector.extract_strided_slice %1029 {offsets = [0, 32], sizes = [8, 32], strides = [1, 1]} : vector<8x128xf32> to vector<8x32xf32>
    %1033 = arith.mulf %1032, %975 : vector<8x32xf32>
    %1034 = arith.addf %1031, %1033 : vector<8x32xf32>
    %1035 = vector.extract_strided_slice %1029 {offsets = [0, 64], sizes = [8, 32], strides = [1, 1]} : vector<8x128xf32> to vector<8x32xf32>
    %1036 = arith.mulf %1035, %978 : vector<8x32xf32>
    %1037 = arith.addf %1034, %1036 : vector<8x32xf32>
    %1038 = vector.extract_strided_slice %1029 {offsets = [0, 96], sizes = [8, 32], strides = [1, 1]} : vector<8x128xf32> to vector<8x32xf32>
    %1039 = arith.mulf %1038, %981 : vector<8x32xf32>
    %1040 = arith.addf %1037, %1039 : vector<8x32xf32>
    %1041 = vector.broadcast %cst_13 : f32 to vector<8x32xf32>
    %1042 = arith.mulf %1040, %1041 : vector<8x32xf32>
    %1043 = arith.addf %959, %1042 : vector<8x32xf32>
    %cst_140 = arith.constant dense<0.000000e+00> : vector<8x32xf32>
    %1044 = tpu.matmul %1043, %2, %cst_140 {dimension_numbers = #tpu.dot_dimension_numbers<[1], [0], [0], [1], [0, 0, 1, 1], [], []>} : vector<8x32xf32>, vector<32x32xf32>, vector<8x32xf32> -> vector<8x32xf32>
    %1045 = vector.broadcast %3 : vector<1x32xf32> to vector<8x32xf32>
    %1046 = arith.addf %1044, %1045 : vector<8x32xf32>
    %cst_141 = arith.constant 0.000000e+00 : f32
    %1047 = vector.broadcast %cst_141 : f32 to vector<8x32xf32>
    %1048 = arith.maximumf %1046, %1047 : vector<8x32xf32>
    %cst_142 = arith.constant dense<0.000000e+00> : vector<8x128xf32>
    %1049 = tpu.matmul %1048, %4, %cst_142 {dimension_numbers = #tpu.dot_dimension_numbers<[1], [0], [0], [1], [0, 0, 1, 1], [], []>} : vector<8x32xf32>, vector<32x128xf32>, vector<8x128xf32> -> vector<8x128xf32>
    %1050 = vector.broadcast %5 : vector<1x128xf32> to vector<8x128xf32>
    %1051 = arith.addf %1049, %1050 : vector<8x128xf32>
    %1052 = math.tanh %1051 : vector<8x128xf32>
    %1053 = vector.extract_strided_slice %1052 {offsets = [0, 0], sizes = [8, 32], strides = [1, 1]} : vector<8x128xf32> to vector<8x32xf32>
    %1054 = arith.mulf %1053, %985 : vector<8x32xf32>
    %1055 = vector.extract_strided_slice %1052 {offsets = [0, 32], sizes = [8, 32], strides = [1, 1]} : vector<8x128xf32> to vector<8x32xf32>
    %1056 = arith.mulf %1055, %988 : vector<8x32xf32>
    %1057 = arith.addf %1054, %1056 : vector<8x32xf32>
    %1058 = vector.extract_strided_slice %1052 {offsets = [0, 64], sizes = [8, 32], strides = [1, 1]} : vector<8x128xf32> to vector<8x32xf32>
    %1059 = arith.mulf %1058, %991 : vector<8x32xf32>
    %1060 = arith.addf %1057, %1059 : vector<8x32xf32>
    %1061 = vector.extract_strided_slice %1052 {offsets = [0, 96], sizes = [8, 32], strides = [1, 1]} : vector<8x128xf32> to vector<8x32xf32>
    %1062 = arith.mulf %1061, %994 : vector<8x32xf32>
    %1063 = arith.addf %1060, %1062 : vector<8x32xf32>
    %1064 = vector.broadcast %cst_13 : f32 to vector<8x32xf32>
    %1065 = arith.mulf %1040, %1064 : vector<8x32xf32>
    %1066 = arith.subf %1063, %1065 : vector<8x32xf32>
    %1067 = arith.addf %959, %1066 : vector<8x32xf32>
    %cst_143 = arith.constant dense<0.000000e+00> : vector<8x32xf32>
    %1068 = tpu.matmul %1067, %2, %cst_143 {dimension_numbers = #tpu.dot_dimension_numbers<[1], [0], [0], [1], [0, 0, 1, 1], [], []>} : vector<8x32xf32>, vector<32x32xf32>, vector<8x32xf32> -> vector<8x32xf32>
    %1069 = vector.broadcast %3 : vector<1x32xf32> to vector<8x32xf32>
    %1070 = arith.addf %1068, %1069 : vector<8x32xf32>
    %cst_144 = arith.constant 0.000000e+00 : f32
    %1071 = vector.broadcast %cst_144 : f32 to vector<8x32xf32>
    %1072 = arith.maximumf %1070, %1071 : vector<8x32xf32>
    %cst_145 = arith.constant dense<0.000000e+00> : vector<8x128xf32>
    %1073 = tpu.matmul %1072, %4, %cst_145 {dimension_numbers = #tpu.dot_dimension_numbers<[1], [0], [0], [1], [0, 0, 1, 1], [], []>} : vector<8x32xf32>, vector<32x128xf32>, vector<8x128xf32> -> vector<8x128xf32>
    %1074 = vector.broadcast %5 : vector<1x128xf32> to vector<8x128xf32>
    %1075 = arith.addf %1073, %1074 : vector<8x128xf32>
    %1076 = math.tanh %1075 : vector<8x128xf32>
    %1077 = vector.extract_strided_slice %1076 {offsets = [0, 0], sizes = [8, 32], strides = [1, 1]} : vector<8x128xf32> to vector<8x32xf32>
    %1078 = arith.mulf %1077, %998 : vector<8x32xf32>
    %1079 = vector.extract_strided_slice %1076 {offsets = [0, 32], sizes = [8, 32], strides = [1, 1]} : vector<8x128xf32> to vector<8x32xf32>
    %1080 = arith.mulf %1079, %1001 : vector<8x32xf32>
    %1081 = arith.addf %1078, %1080 : vector<8x32xf32>
    %1082 = vector.extract_strided_slice %1076 {offsets = [0, 64], sizes = [8, 32], strides = [1, 1]} : vector<8x128xf32> to vector<8x32xf32>
    %1083 = arith.mulf %1082, %1004 : vector<8x32xf32>
    %1084 = arith.addf %1081, %1083 : vector<8x32xf32>
    %1085 = vector.extract_strided_slice %1076 {offsets = [0, 96], sizes = [8, 32], strides = [1, 1]} : vector<8x128xf32> to vector<8x32xf32>
    %1086 = arith.mulf %1085, %1007 : vector<8x32xf32>
    %1087 = arith.addf %1084, %1086 : vector<8x32xf32>
    %1088 = arith.subf %1040, %1063 : vector<8x32xf32>
    %1089 = arith.addf %1088, %1087 : vector<8x32xf32>
    %1090 = arith.addf %959, %1089 : vector<8x32xf32>
    %cst_146 = arith.constant dense<0.000000e+00> : vector<8x32xf32>
    %1091 = tpu.matmul %1090, %2, %cst_146 {dimension_numbers = #tpu.dot_dimension_numbers<[1], [0], [0], [1], [0, 0, 1, 1], [], []>} : vector<8x32xf32>, vector<32x32xf32>, vector<8x32xf32> -> vector<8x32xf32>
    %1092 = vector.broadcast %3 : vector<1x32xf32> to vector<8x32xf32>
    %1093 = arith.addf %1091, %1092 : vector<8x32xf32>
    %cst_147 = arith.constant 0.000000e+00 : f32
    %1094 = vector.broadcast %cst_147 : f32 to vector<8x32xf32>
    %1095 = arith.maximumf %1093, %1094 : vector<8x32xf32>
    %cst_148 = arith.constant dense<0.000000e+00> : vector<8x128xf32>
    %1096 = tpu.matmul %1095, %4, %cst_148 {dimension_numbers = #tpu.dot_dimension_numbers<[1], [0], [0], [1], [0, 0, 1, 1], [], []>} : vector<8x32xf32>, vector<32x128xf32>, vector<8x128xf32> -> vector<8x128xf32>
    %1097 = vector.broadcast %5 : vector<1x128xf32> to vector<8x128xf32>
    %1098 = arith.addf %1096, %1097 : vector<8x128xf32>
    %1099 = math.tanh %1098 : vector<8x128xf32>
    %1100 = vector.extract_strided_slice %1099 {offsets = [0, 0], sizes = [8, 32], strides = [1, 1]} : vector<8x128xf32> to vector<8x32xf32>
    %1101 = arith.mulf %1100, %1011 : vector<8x32xf32>
    %1102 = vector.extract_strided_slice %1099 {offsets = [0, 32], sizes = [8, 32], strides = [1, 1]} : vector<8x128xf32> to vector<8x32xf32>
    %1103 = arith.mulf %1102, %1014 : vector<8x32xf32>
    %1104 = arith.addf %1101, %1103 : vector<8x32xf32>
    %1105 = vector.extract_strided_slice %1099 {offsets = [0, 64], sizes = [8, 32], strides = [1, 1]} : vector<8x128xf32> to vector<8x32xf32>
    %1106 = arith.mulf %1105, %1017 : vector<8x32xf32>
    %1107 = arith.addf %1104, %1106 : vector<8x32xf32>
    %1108 = vector.extract_strided_slice %1099 {offsets = [0, 96], sizes = [8, 32], strides = [1, 1]} : vector<8x128xf32> to vector<8x32xf32>
    %1109 = arith.mulf %1108, %1020 : vector<8x32xf32>
    %1110 = arith.addf %1107, %1109 : vector<8x32xf32>
    %1111 = arith.addf %1063, %1087 : vector<8x32xf32>
    %cst_149 = arith.constant 3.000000e+00 : f32
    %1112 = vector.broadcast %cst_149 : f32 to vector<8x32xf32>
    %1113 = arith.mulf %1112, %1111 : vector<8x32xf32>
    %1114 = arith.addf %1040, %1113 : vector<8x32xf32>
    %1115 = arith.addf %1114, %1110 : vector<8x32xf32>
    %cst_150 = arith.constant 1.250000e-01 : f32
    %1116 = vector.broadcast %cst_150 : f32 to vector<8x32xf32>
    %1117 = arith.mulf %1116, %1115 : vector<8x32xf32>
    %1118 = arith.addf %959, %1117 : vector<8x32xf32>
    %c1_i32_151 = arith.constant 1 : i32
    %1119 = arith.addi %968, %c1_i32_151 : i32
    %c4_i32_152 = arith.constant 4 : i32
    %1120 = arith.subi %1119, %c4_i32_152 : i32
    %c0_i32_153 = arith.constant 0 : i32
    %1121 = arith.cmpi sge, %1120, %c0_i32_153 : i32
    %c4_i32_154 = arith.constant 4 : i32
    %1122 = arith.cmpi slt, %1120, %c4_i32_154 : i32
    %1123 = arith.andi %1121, %1122 : i1
    %1124 = arith.extui %1123 : i1 to i32
    %c0_i32_155 = arith.constant 0 : i32
    %1125 = arith.cmpi ne, %1124, %c0_i32_155 : i32
    scf.if %1125 {
      %1285 = arith.index_cast %1120 : i32 to index
      %c0_177 = arith.constant 0 : index
      %c0_178 = arith.constant 0 : index
      %1286 = vector.load %arg9[%1285, %c0_177, %c0_178] : memref<4x8x32xf32, #tpu.memory_space<vmem>>, vector<1x8x32xf32>
      %1287 = vector.shape_cast %1286 : vector<1x8x32xf32> to vector<8x32xf32>
      %1288 = vector.shape_cast %1118 : vector<8x32xf32> to vector<1x8x32xf32>
      tpu.vector_store %arg9[%1285, %c0_177, %c0_178], %1288 {strides = array<i32>} : memref<4x8x32xf32, #tpu.memory_space<vmem>>, vector<1x8x32xf32>,
    } else {
    }
    %c8_i32_156 = arith.constant 8 : i32
    %1126 = arith.muli %c0_i32, %c8_i32_156 : i32
    %c7_i32 = arith.constant 7 : i32
    %1127 = arith.addi %1126, %c7_i32 : i32
    %1128 = vector.extract_strided_slice %12 {offsets = [0, 112], sizes = [8, 4], strides = [1, 1]} : vector<8x128xf32> to vector<8x4xf32>
    %1129 = vector.extract_strided_slice %1128 {offsets = [0, 0], sizes = [8, 1], strides = [1, 1]} : vector<8x4xf32> to vector<8x1xf32>
    %1130 = vector.shape_cast %1129 : vector<8x1xf32> to vector<8x1xf32>
    %1131 = vector.broadcast %1130 : vector<8x1xf32> to vector<8x32xf32>
    %1132 = vector.extract_strided_slice %1128 {offsets = [0, 1], sizes = [8, 1], strides = [1, 1]} : vector<8x4xf32> to vector<8x1xf32>
    %1133 = vector.shape_cast %1132 : vector<8x1xf32> to vector<8x1xf32>
    %1134 = vector.broadcast %1133 : vector<8x1xf32> to vector<8x32xf32>
    %1135 = vector.extract_strided_slice %1128 {offsets = [0, 2], sizes = [8, 1], strides = [1, 1]} : vector<8x4xf32> to vector<8x1xf32>
    %1136 = vector.shape_cast %1135 : vector<8x1xf32> to vector<8x1xf32>
    %1137 = vector.broadcast %1136 : vector<8x1xf32> to vector<8x32xf32>
    %1138 = vector.extract_strided_slice %1128 {offsets = [0, 3], sizes = [8, 1], strides = [1, 1]} : vector<8x4xf32> to vector<8x1xf32>
    %1139 = vector.shape_cast %1138 : vector<8x1xf32> to vector<8x1xf32>
    %1140 = vector.broadcast %1139 : vector<8x1xf32> to vector<8x32xf32>
    %1141 = vector.extract_strided_slice %12 {offsets = [0, 116], sizes = [8, 4], strides = [1, 1]} : vector<8x128xf32> to vector<8x4xf32>
    %1142 = vector.extract_strided_slice %1141 {offsets = [0, 0], sizes = [8, 1], strides = [1, 1]} : vector<8x4xf32> to vector<8x1xf32>
    %1143 = vector.shape_cast %1142 : vector<8x1xf32> to vector<8x1xf32>
    %1144 = vector.broadcast %1143 : vector<8x1xf32> to vector<8x32xf32>
    %1145 = vector.extract_strided_slice %1141 {offsets = [0, 1], sizes = [8, 1], strides = [1, 1]} : vector<8x4xf32> to vector<8x1xf32>
    %1146 = vector.shape_cast %1145 : vector<8x1xf32> to vector<8x1xf32>
    %1147 = vector.broadcast %1146 : vector<8x1xf32> to vector<8x32xf32>
    %1148 = vector.extract_strided_slice %1141 {offsets = [0, 2], sizes = [8, 1], strides = [1, 1]} : vector<8x4xf32> to vector<8x1xf32>
    %1149 = vector.shape_cast %1148 : vector<8x1xf32> to vector<8x1xf32>
    %1150 = vector.broadcast %1149 : vector<8x1xf32> to vector<8x32xf32>
    %1151 = vector.extract_strided_slice %1141 {offsets = [0, 3], sizes = [8, 1], strides = [1, 1]} : vector<8x4xf32> to vector<8x1xf32>
    %1152 = vector.shape_cast %1151 : vector<8x1xf32> to vector<8x1xf32>
    %1153 = vector.broadcast %1152 : vector<8x1xf32> to vector<8x32xf32>
    %1154 = vector.extract_strided_slice %12 {offsets = [0, 120], sizes = [8, 4], strides = [1, 1]} : vector<8x128xf32> to vector<8x4xf32>
    %1155 = vector.extract_strided_slice %1154 {offsets = [0, 0], sizes = [8, 1], strides = [1, 1]} : vector<8x4xf32> to vector<8x1xf32>
    %1156 = vector.shape_cast %1155 : vector<8x1xf32> to vector<8x1xf32>
    %1157 = vector.broadcast %1156 : vector<8x1xf32> to vector<8x32xf32>
    %1158 = vector.extract_strided_slice %1154 {offsets = [0, 1], sizes = [8, 1], strides = [1, 1]} : vector<8x4xf32> to vector<8x1xf32>
    %1159 = vector.shape_cast %1158 : vector<8x1xf32> to vector<8x1xf32>
    %1160 = vector.broadcast %1159 : vector<8x1xf32> to vector<8x32xf32>
    %1161 = vector.extract_strided_slice %1154 {offsets = [0, 2], sizes = [8, 1], strides = [1, 1]} : vector<8x4xf32> to vector<8x1xf32>
    %1162 = vector.shape_cast %1161 : vector<8x1xf32> to vector<8x1xf32>
    %1163 = vector.broadcast %1162 : vector<8x1xf32> to vector<8x32xf32>
    %1164 = vector.extract_strided_slice %1154 {offsets = [0, 3], sizes = [8, 1], strides = [1, 1]} : vector<8x4xf32> to vector<8x1xf32>
    %1165 = vector.shape_cast %1164 : vector<8x1xf32> to vector<8x1xf32>
    %1166 = vector.broadcast %1165 : vector<8x1xf32> to vector<8x32xf32>
    %1167 = vector.extract_strided_slice %12 {offsets = [0, 124], sizes = [8, 4], strides = [1, 1]} : vector<8x128xf32> to vector<8x4xf32>
    %1168 = vector.extract_strided_slice %1167 {offsets = [0, 0], sizes = [8, 1], strides = [1, 1]} : vector<8x4xf32> to vector<8x1xf32>
    %1169 = vector.shape_cast %1168 : vector<8x1xf32> to vector<8x1xf32>
    %1170 = vector.broadcast %1169 : vector<8x1xf32> to vector<8x32xf32>
    %1171 = vector.extract_strided_slice %1167 {offsets = [0, 1], sizes = [8, 1], strides = [1, 1]} : vector<8x4xf32> to vector<8x1xf32>
    %1172 = vector.shape_cast %1171 : vector<8x1xf32> to vector<8x1xf32>
    %1173 = vector.broadcast %1172 : vector<8x1xf32> to vector<8x32xf32>
    %1174 = vector.extract_strided_slice %1167 {offsets = [0, 2], sizes = [8, 1], strides = [1, 1]} : vector<8x4xf32> to vector<8x1xf32>
    %1175 = vector.shape_cast %1174 : vector<8x1xf32> to vector<8x1xf32>
    %1176 = vector.broadcast %1175 : vector<8x1xf32> to vector<8x32xf32>
    %1177 = vector.extract_strided_slice %1167 {offsets = [0, 3], sizes = [8, 1], strides = [1, 1]} : vector<8x4xf32> to vector<8x1xf32>
    %1178 = vector.shape_cast %1177 : vector<8x1xf32> to vector<8x1xf32>
    %1179 = vector.broadcast %1178 : vector<8x1xf32> to vector<8x32xf32>
    %cst_157 = arith.constant dense<0.000000e+00> : vector<8x32xf32>
    %1180 = tpu.matmul %1118, %2, %cst_157 {dimension_numbers = #tpu.dot_dimension_numbers<[1], [0], [0], [1], [0, 0, 1, 1], [], []>} : vector<8x32xf32>, vector<32x32xf32>, vector<8x32xf32> -> vector<8x32xf32>
    %1181 = vector.broadcast %3 : vector<1x32xf32> to vector<8x32xf32>
    %1182 = arith.addf %1180, %1181 : vector<8x32xf32>
    %cst_158 = arith.constant 0.000000e+00 : f32
    %1183 = vector.broadcast %cst_158 : f32 to vector<8x32xf32>
    %1184 = arith.maximumf %1182, %1183 : vector<8x32xf32>
    %cst_159 = arith.constant dense<0.000000e+00> : vector<8x128xf32>
    %1185 = tpu.matmul %1184, %4, %cst_159 {dimension_numbers = #tpu.dot_dimension_numbers<[1], [0], [0], [1], [0, 0, 1, 1], [], []>} : vector<8x32xf32>, vector<32x128xf32>, vector<8x128xf32> -> vector<8x128xf32>
    %1186 = vector.broadcast %5 : vector<1x128xf32> to vector<8x128xf32>
    %1187 = arith.addf %1185, %1186 : vector<8x128xf32>
    %1188 = math.tanh %1187 : vector<8x128xf32>
    %1189 = vector.extract_strided_slice %1188 {offsets = [0, 0], sizes = [8, 32], strides = [1, 1]} : vector<8x128xf32> to vector<8x32xf32>
    %1190 = arith.mulf %1189, %1131 : vector<8x32xf32>
    %1191 = vector.extract_strided_slice %1188 {offsets = [0, 32], sizes = [8, 32], strides = [1, 1]} : vector<8x128xf32> to vector<8x32xf32>
    %1192 = arith.mulf %1191, %1134 : vector<8x32xf32>
    %1193 = arith.addf %1190, %1192 : vector<8x32xf32>
    %1194 = vector.extract_strided_slice %1188 {offsets = [0, 64], sizes = [8, 32], strides = [1, 1]} : vector<8x128xf32> to vector<8x32xf32>
    %1195 = arith.mulf %1194, %1137 : vector<8x32xf32>
    %1196 = arith.addf %1193, %1195 : vector<8x32xf32>
    %1197 = vector.extract_strided_slice %1188 {offsets = [0, 96], sizes = [8, 32], strides = [1, 1]} : vector<8x128xf32> to vector<8x32xf32>
    %1198 = arith.mulf %1197, %1140 : vector<8x32xf32>
    %1199 = arith.addf %1196, %1198 : vector<8x32xf32>
    %1200 = vector.broadcast %cst_13 : f32 to vector<8x32xf32>
    %1201 = arith.mulf %1199, %1200 : vector<8x32xf32>
    %1202 = arith.addf %1118, %1201 : vector<8x32xf32>
    %cst_160 = arith.constant dense<0.000000e+00> : vector<8x32xf32>
    %1203 = tpu.matmul %1202, %2, %cst_160 {dimension_numbers = #tpu.dot_dimension_numbers<[1], [0], [0], [1], [0, 0, 1, 1], [], []>} : vector<8x32xf32>, vector<32x32xf32>, vector<8x32xf32> -> vector<8x32xf32>
    %1204 = vector.broadcast %3 : vector<1x32xf32> to vector<8x32xf32>
    %1205 = arith.addf %1203, %1204 : vector<8x32xf32>
    %cst_161 = arith.constant 0.000000e+00 : f32
    %1206 = vector.broadcast %cst_161 : f32 to vector<8x32xf32>
    %1207 = arith.maximumf %1205, %1206 : vector<8x32xf32>
    %cst_162 = arith.constant dense<0.000000e+00> : vector<8x128xf32>
    %1208 = tpu.matmul %1207, %4, %cst_162 {dimension_numbers = #tpu.dot_dimension_numbers<[1], [0], [0], [1], [0, 0, 1, 1], [], []>} : vector<8x32xf32>, vector<32x128xf32>, vector<8x128xf32> -> vector<8x128xf32>
    %1209 = vector.broadcast %5 : vector<1x128xf32> to vector<8x128xf32>
    %1210 = arith.addf %1208, %1209 : vector<8x128xf32>
    %1211 = math.tanh %1210 : vector<8x128xf32>
    %1212 = vector.extract_strided_slice %1211 {offsets = [0, 0], sizes = [8, 32], strides = [1, 1]} : vector<8x128xf32> to vector<8x32xf32>
    %1213 = arith.mulf %1212, %1144 : vector<8x32xf32>
    %1214 = vector.extract_strided_slice %1211 {offsets = [0, 32], sizes = [8, 32], strides = [1, 1]} : vector<8x128xf32> to vector<8x32xf32>
    %1215 = arith.mulf %1214, %1147 : vector<8x32xf32>
    %1216 = arith.addf %1213, %1215 : vector<8x32xf32>
    %1217 = vector.extract_strided_slice %1211 {offsets = [0, 64], sizes = [8, 32], strides = [1, 1]} : vector<8x128xf32> to vector<8x32xf32>
    %1218 = arith.mulf %1217, %1150 : vector<8x32xf32>
    %1219 = arith.addf %1216, %1218 : vector<8x32xf32>
    %1220 = vector.extract_strided_slice %1211 {offsets = [0, 96], sizes = [8, 32], strides = [1, 1]} : vector<8x128xf32> to vector<8x32xf32>
    %1221 = arith.mulf %1220, %1153 : vector<8x32xf32>
    %1222 = arith.addf %1219, %1221 : vector<8x32xf32>
    %1223 = vector.broadcast %cst_13 : f32 to vector<8x32xf32>
    %1224 = arith.mulf %1199, %1223 : vector<8x32xf32>
    %1225 = arith.subf %1222, %1224 : vector<8x32xf32>
    %1226 = arith.addf %1118, %1225 : vector<8x32xf32>
    %cst_163 = arith.constant dense<0.000000e+00> : vector<8x32xf32>
    %1227 = tpu.matmul %1226, %2, %cst_163 {dimension_numbers = #tpu.dot_dimension_numbers<[1], [0], [0], [1], [0, 0, 1, 1], [], []>} : vector<8x32xf32>, vector<32x32xf32>, vector<8x32xf32> -> vector<8x32xf32>
    %1228 = vector.broadcast %3 : vector<1x32xf32> to vector<8x32xf32>
    %1229 = arith.addf %1227, %1228 : vector<8x32xf32>
    %cst_164 = arith.constant 0.000000e+00 : f32
    %1230 = vector.broadcast %cst_164 : f32 to vector<8x32xf32>
    %1231 = arith.maximumf %1229, %1230 : vector<8x32xf32>
    %cst_165 = arith.constant dense<0.000000e+00> : vector<8x128xf32>
    %1232 = tpu.matmul %1231, %4, %cst_165 {dimension_numbers = #tpu.dot_dimension_numbers<[1], [0], [0], [1], [0, 0, 1, 1], [], []>} : vector<8x32xf32>, vector<32x128xf32>, vector<8x128xf32> -> vector<8x128xf32>
    %1233 = vector.broadcast %5 : vector<1x128xf32> to vector<8x128xf32>
    %1234 = arith.addf %1232, %1233 : vector<8x128xf32>
    %1235 = math.tanh %1234 : vector<8x128xf32>
    %1236 = vector.extract_strided_slice %1235 {offsets = [0, 0], sizes = [8, 32], strides = [1, 1]} : vector<8x128xf32> to vector<8x32xf32>
    %1237 = arith.mulf %1236, %1157 : vector<8x32xf32>
    %1238 = vector.extract_strided_slice %1235 {offsets = [0, 32], sizes = [8, 32], strides = [1, 1]} : vector<8x128xf32> to vector<8x32xf32>
    %1239 = arith.mulf %1238, %1160 : vector<8x32xf32>
    %1240 = arith.addf %1237, %1239 : vector<8x32xf32>
    %1241 = vector.extract_strided_slice %1235 {offsets = [0, 64], sizes = [8, 32], strides = [1, 1]} : vector<8x128xf32> to vector<8x32xf32>
    %1242 = arith.mulf %1241, %1163 : vector<8x32xf32>
    %1243 = arith.addf %1240, %1242 : vector<8x32xf32>
    %1244 = vector.extract_strided_slice %1235 {offsets = [0, 96], sizes = [8, 32], strides = [1, 1]} : vector<8x128xf32> to vector<8x32xf32>
    %1245 = arith.mulf %1244, %1166 : vector<8x32xf32>
    %1246 = arith.addf %1243, %1245 : vector<8x32xf32>
    %1247 = arith.subf %1199, %1222 : vector<8x32xf32>
    %1248 = arith.addf %1247, %1246 : vector<8x32xf32>
    %1249 = arith.addf %1118, %1248 : vector<8x32xf32>
    %cst_166 = arith.constant dense<0.000000e+00> : vector<8x32xf32>
    %1250 = tpu.matmul %1249, %2, %cst_166 {dimension_numbers = #tpu.dot_dimension_numbers<[1], [0], [0], [1], [0, 0, 1, 1], [], []>} : vector<8x32xf32>, vector<32x32xf32>, vector<8x32xf32> -> vector<8x32xf32>
    %1251 = vector.broadcast %3 : vector<1x32xf32> to vector<8x32xf32>
    %1252 = arith.addf %1250, %1251 : vector<8x32xf32>
    %cst_167 = arith.constant 0.000000e+00 : f32
    %1253 = vector.broadcast %cst_167 : f32 to vector<8x32xf32>
    %1254 = arith.maximumf %1252, %1253 : vector<8x32xf32>
    %cst_168 = arith.constant dense<0.000000e+00> : vector<8x128xf32>
    %1255 = tpu.matmul %1254, %4, %cst_168 {dimension_numbers = #tpu.dot_dimension_numbers<[1], [0], [0], [1], [0, 0, 1, 1], [], []>} : vector<8x32xf32>, vector<32x128xf32>, vector<8x128xf32> -> vector<8x128xf32>
    %1256 = vector.broadcast %5 : vector<1x128xf32> to vector<8x128xf32>
    %1257 = arith.addf %1255, %1256 : vector<8x128xf32>
    %1258 = math.tanh %1257 : vector<8x128xf32>
    %1259 = vector.extract_strided_slice %1258 {offsets = [0, 0], sizes = [8, 32], strides = [1, 1]} : vector<8x128xf32> to vector<8x32xf32>
    %1260 = arith.mulf %1259, %1170 : vector<8x32xf32>
    %1261 = vector.extract_strided_slice %1258 {offsets = [0, 32], sizes = [8, 32], strides = [1, 1]} : vector<8x128xf32> to vector<8x32xf32>
    %1262 = arith.mulf %1261, %1173 : vector<8x32xf32>
    %1263 = arith.addf %1260, %1262 : vector<8x32xf32>
    %1264 = vector.extract_strided_slice %1258 {offsets = [0, 64], sizes = [8, 32], strides = [1, 1]} : vector<8x128xf32> to vector<8x32xf32>
    %1265 = arith.mulf %1264, %1176 : vector<8x32xf32>
    %1266 = arith.addf %1263, %1265 : vector<8x32xf32>
    %1267 = vector.extract_strided_slice %1258 {offsets = [0, 96], sizes = [8, 32], strides = [1, 1]} : vector<8x128xf32> to vector<8x32xf32>
    %1268 = arith.mulf %1267, %1179 : vector<8x32xf32>
    %1269 = arith.addf %1266, %1268 : vector<8x32xf32>
    %1270 = arith.addf %1222, %1246 : vector<8x32xf32>
    %cst_169 = arith.constant 3.000000e+00 : f32
    %1271 = vector.broadcast %cst_169 : f32 to vector<8x32xf32>
    %1272 = arith.mulf %1271, %1270 : vector<8x32xf32>
    %1273 = arith.addf %1199, %1272 : vector<8x32xf32>
    %1274 = arith.addf %1273, %1269 : vector<8x32xf32>
    %cst_170 = arith.constant 1.250000e-01 : f32
    %1275 = vector.broadcast %cst_170 : f32 to vector<8x32xf32>
    %1276 = arith.mulf %1275, %1274 : vector<8x32xf32>
    %1277 = arith.addf %1118, %1276 : vector<8x32xf32>
    %c1_i32_171 = arith.constant 1 : i32
    %1278 = arith.addi %1127, %c1_i32_171 : i32
    %c4_i32_172 = arith.constant 4 : i32
    %1279 = arith.subi %1278, %c4_i32_172 : i32
    %c0_i32_173 = arith.constant 0 : i32
    %1280 = arith.cmpi sge, %1279, %c0_i32_173 : i32
    %c4_i32_174 = arith.constant 4 : i32
    %1281 = arith.cmpi slt, %1279, %c4_i32_174 : i32
    %1282 = arith.andi %1280, %1281 : i1
    %1283 = arith.extui %1282 : i1 to i32
    %c0_i32_175 = arith.constant 0 : i32
    %1284 = arith.cmpi ne, %1283, %c0_i32_175 : i32
    scf.if %1284 {
      %1285 = arith.index_cast %1279 : i32 to index
      %c0_177 = arith.constant 0 : index
      %c0_178 = arith.constant 0 : index
      %1286 = vector.load %arg9[%1285, %c0_177, %c0_178] : memref<4x8x32xf32, #tpu.memory_space<vmem>>, vector<1x8x32xf32>
      %1287 = vector.shape_cast %1286 : vector<1x8x32xf32> to vector<8x32xf32>
      %1288 = vector.shape_cast %1277 : vector<8x32xf32> to vector<1x8x32xf32>
      tpu.vector_store %arg9[%1285, %c0_177, %c0_178], %1288 {strides = array<i32>} : memref<4x8x32xf32, #tpu.memory_space<vmem>>, vector<1x8x32xf32>,
    } else {
    }
    %c1_i32_176 = arith.constant 1 : i32
    return
  }
  func.func @transform_0(%arg0: i32) -> (i32, i32) {
    %c0_i32 = arith.constant 0 : i32
    %c0_i32_0 = arith.constant 0 : i32
    return %arg0, %c0_i32 : i32, i32
  }
  func.func @transform_1(%arg0: i32) -> (i32, i32, i32) {
    %c0_i32 = arith.constant 0 : i32
    %c0_i32_0 = arith.constant 0 : i32
    %c0_i32_1 = arith.constant 0 : i32
    return %c0_i32, %arg0, %c0_i32_0 : i32, i32, i32
  }
  func.func @transform_2(%arg0: i32) -> (i32, i32) {
    %c0_i32 = arith.constant 0 : i32
    %c0_i32_0 = arith.constant 0 : i32
    %c0_i32_1 = arith.constant 0 : i32
    return %c0_i32, %c0_i32_0 : i32, i32
  }
  func.func @transform_3(%arg0: i32) -> (i32, i32) {
    %c0_i32 = arith.constant 0 : i32
    %c0_i32_0 = arith.constant 0 : i32
    %c0_i32_1 = arith.constant 0 : i32
    return %c0_i32, %c0_i32_0 : i32, i32
  }
  func.func @transform_4(%arg0: i32) -> (i32, i32) {
    %c0_i32 = arith.constant 0 : i32
    %c0_i32_0 = arith.constant 0 : i32
    %c0_i32_1 = arith.constant 0 : i32
    return %c0_i32, %c0_i32_0 : i32, i32
  }
  func.func @transform_5(%arg0: i32) -> (i32, i32) {
    %c0_i32 = arith.constant 0 : i32
    %c0_i32_0 = arith.constant 0 : i32
    %c0_i32_1 = arith.constant 0 : i32
    return %c0_i32, %c0_i32_0 : i32, i32
  }
  func.func @transform_6(%arg0: i32) -> (i32, i32) {
    %c0_i32 = arith.constant 0 : i32
    %c0_i32_0 = arith.constant 0 : i32
    %c0_i32_1 = arith.constant 0 : i32
    return %c0_i32, %c0_i32_0 : i32, i32
  }
  func.func @transform_7(%arg0: i32) -> (i32, i32) {
    %c0_i32 = arith.constant 0 : i32
    %c0_i32_0 = arith.constant 0 : i32
    %c0_i32_1 = arith.constant 0 : i32
    return %c0_i32, %c0_i32_0 : i32, i32
  }
  func.func @transform_8(%arg0: i32) -> (i32, i32, i32) {
    %c0_i32 = arith.constant 0 : i32
    %c0_i32_0 = arith.constant 0 : i32
    %c0_i32_1 = arith.constant 0 : i32
    return %c0_i32, %arg0, %c0_i32_0 : i32, i32, i32
  }
}

</mosaic_0001>

<llo_original>
// kernel: tpu_custom_call.1
$region0: #{tpu_custom_call.1}
  #allocation0 [shape = 'u32[]', space=smem, size = 0x4, offset = 0x4, fixed_abs, tag = 'smem constant byte address 0x4 - core index']
  #allocation1 [shape = 'u32[72,128]{1,0:T(1,128)}', space=vmem, size = 0x9000, scoped, tag = 'internal scratch']
  %s0 = inlined_call_operand.vmem [shape: f32[8,4], index: 0, kind: input, shape index: {}]
  %s1 = inlined_call_operand.vmem [shape: f32[1,8,128], index: 1, kind: input, shape index: {}]
  %s2 = inlined_call_operand.vmem [shape: f32[4,32], index: 2, kind: input, shape index: {}]
  %s3 = inlined_call_operand.vmem [shape: f32[1,32], index: 3, kind: input, shape index: {}]
  %s4 = inlined_call_operand.hbm [shape: f32[32,32], index: 4, kind: input, shape index: {}]
  %s5 = inlined_call_operand.vmem [shape: f32[1,32], index: 5, kind: input, shape index: {}]
  %s6 = inlined_call_operand.hbm [shape: f32[32,128], index: 6, kind: input, shape index: {}]
  %s7 = inlined_call_operand.vmem [shape: f32[1,128], index: 7, kind: input, shape index: {}]
  %s8 = inlined_call_operand.hbm [shape: f32[4,8,32], index: 8, kind: output, shape index: {}]
  %s9 = sld [smem:[#allocation0]]
  $region50: #{tpu_custom_call.1} parent=0
    _
  %s11 = ssub.s32 1, %s9
  %s12 = scalar_select 0, %s11, %s9
  $region1: #{tpu_custom_call.1} parent=0
    #allocation2 [shape = 'u8[16384]{0}', space=vmem, size = 0x4000, scoped, tag = 'input window, operand 4, single buffered']
    #allocation3 [shape = 's32[1]{0}', space=sflag, size = 0x4, scoped, tag = 'scoped memory for tpu_custom_call.1']
    #allocation4 [shape = 's32[1]{0}', space=sflag, size = 0x4, scoped, tag = 'scoped memory for tpu_custom_call.1']
    #allocation5 [shape = 'u8[16384]{0}', space=vmem, size = 0x4000, scoped, tag = 'input window, operand 6, single buffered']
    #allocation6 [shape = 's32[1]{0}', space=sflag, size = 0x4, scoped, tag = 'scoped memory for tpu_custom_call.1']
    #allocation7 [shape = 'u8[16384]{0}', space=vmem, size = 0x4000, scoped, tag = 'output window, operand 0, single buffered']
    %13 = vsyncpa [#allocation3], 0
    %14 = vsyncpa [#allocation6], 0
    %15 = vsyncpa [#allocation4], 0
    // Predicated region
    $region2: #{tpu_custom_call.1} parent=1 // pred_check
      _
    $region3: #{tpu_custom_call.1} parent=1 // pred_check_branch
      %17 = sbr.rel (0) target = $region5
    $region4: #{tpu_custom_call.1} parent=1 // pred_region
      _
    $region5: #{tpu_custom_call.1} parent=1 // pred_fallthru
      _
    // Predicated region
    $region6: #{tpu_custom_call.1} parent=1 // pred_check
      _
    $region7: #{tpu_custom_call.1} parent=1 // pred_check_branch
      %19 = sbr.rel (0) target = $region9
    $region8: #{tpu_custom_call.1} parent=1 // pred_region
      _
    $region9: #{tpu_custom_call.1} parent=1 // pred_fallthru
      _
    // Predicated region
    $region10: #{tpu_custom_call.1} parent=1 // pred_check
      _
    $region11: #{tpu_custom_call.1} parent=1 // pred_check_branch
      %21 = sbr.rel (0) target = $region13
    $region12: #{tpu_custom_call.1} parent=1 // pred_region
      _
    $region13: #{tpu_custom_call.1} parent=1 // pred_fallthru
      _
    // Predicated region
    $region14: #{tpu_custom_call.1} parent=1 // pred_check
      _
    $region15: #{tpu_custom_call.1} parent=1 // pred_check_branch
      %23 = sbr.rel (0) target = $region17
    $region16: #{tpu_custom_call.1} parent=1 // pred_region
      _
    $region17: #{tpu_custom_call.1} parent=1 // pred_fallthru
      _
    // Predicated region
    $region18: #{tpu_custom_call.1} parent=1 // pred_check
      _
    $region19: #{tpu_custom_call.1} parent=1 // pred_check_branch
      %25 = sbr.rel (0) target = $region21
    $region20: #{tpu_custom_call.1} parent=1 // pred_region
      %27 = vsyncadd [#allocation3], 0
      %s28 = sshll.u32 %s4, 4
      %s29 = int_to_ptr.hbm [resolvable:$true] %s28
      %s30 = sshll.u32 [#allocation2], 4
      %s31 = int_to_ptr.vmem [resolvable:$true] %s30
      %36 = dma.hbm_to_vmem [thread:$0]  %s29, 512, %s31, [#allocation3], 128, 128, 8
    $region21: #{tpu_custom_call.1} parent=1 // pred_fallthru
      _
    // Predicated region
    $region22: #{tpu_custom_call.1} parent=1 // pred_check
      _
    $region23: #{tpu_custom_call.1} parent=1 // pred_check_branch
      %38 = sbr.rel (0) target = $region25
    $region24: #{tpu_custom_call.1} parent=1 // pred_region
      _
    $region25: #{tpu_custom_call.1} parent=1 // pred_fallthru
      _
    // Predicated region
    $region26: #{tpu_custom_call.1} parent=1 // pred_check
      _
    $region27: #{tpu_custom_call.1} parent=1 // pred_check_branch
      %40 = sbr.rel (0) target = $region29
    $region28: #{tpu_custom_call.1} parent=1 // pred_region
      %42 = vsyncadd [#allocation6], 0
      %s43 = sshll.u32 %s6, 4
      %s44 = int_to_ptr.hbm [resolvable:$true] %s43
      %s45 = sshll.u32 [#allocation5], 4
      %s46 = int_to_ptr.vmem [resolvable:$true] %s45
      %51 = dma.hbm_to_vmem [thread:$0]  %s44, 512, %s46, [#allocation6], 128, 128, 8
    $region29: #{tpu_custom_call.1} parent=1 // pred_fallthru
      _
    // Predicated region
    $region30: #{tpu_custom_call.1} parent=1 // pred_check
      _
    $region31: #{tpu_custom_call.1} parent=1 // pred_check_branch
      %53 = sbr.rel (0) target = $region33
    $region32: #{tpu_custom_call.1} parent=1 // pred_region
      _
    $region33: #{tpu_custom_call.1} parent=1 // pred_fallthru
      _
    // Predicated region
    $region34: #{tpu_custom_call.1} parent=1 // pred_check
      _
    $region35: #{tpu_custom_call.1} parent=1 // pred_check_branch
      %55 = sbr.rel (0) target = $region37
    $region36: #{tpu_custom_call.1} parent=1 // pred_region
      %57 = dma.done [#allocation3], 512
    $region37: #{tpu_custom_call.1} parent=1 // pred_fallthru
      _
    // Predicated region
    $region38: #{tpu_custom_call.1} parent=1 // pred_check
      _
    $region39: #{tpu_custom_call.1} parent=1 // pred_check_branch
      %59 = sbr.rel (0) target = $region41
    $region40: #{tpu_custom_call.1} parent=1 // pred_region
      %61 = dma.done [#allocation6], 512
    $region41: #{tpu_custom_call.1} parent=1 // pred_fallthru
      _
    %v62 = vld [vmem:[%s2] sm:$0xf]
    %v63 = vld [vmem:[%s3] sm:$0x1]
    %v64 = vld [vmem:[#allocation2] sm:$0xff]
    %v65 = vld [vmem:[#allocation2 + $0x8] sm:$0xff]
    %v66 = vld [vmem:[#allocation2 + $0x10] sm:$0xff]
    %v67 = vld [vmem:[#allocation2 + $0x18] sm:$0xff]
    %v68 = vld [vmem:[%s5] sm:$0x1]
    %v69 = vld [vmem:[#allocation5] sm:$0xff]
    %v70 = vld [vmem:[#allocation5 + $0x8] sm:$0xff]
    %v71 = vld [vmem:[#allocation5 + $0x10] sm:$0xff]
    %v72 = vld [vmem:[#allocation5 + $0x18] sm:$0xff]
    %v73 = vld [vmem:[%s7] sm:$0x1]
    %v74 = vld [vmem:[%s0] sm:$0xff]
    %v76 = vperm.slane %v63, 0
    %vm78 = vcmask 31744
    %v80 = vsel %vm78, %v74, 0
    %vm82 = vcmask 1043456
    %v84 = vsel %vm82, %v62, 0
    %86 = vmatpush.msra.mxu0 0.0
    %87 = vmatpush.msra.mxu0 0.0
    %88 = vmatpush.msra.mxu0 0.0
    %89 = vmatpush.msra.mxu0 0.0
    %90 = vmatpush.msra.mxu0 0.0
    %91 = vmatpush.msra.mxu0 0.0
    %92 = vmatpush.msra.mxu0 0.0
    %93 = vmatpush.msra.mxu0 0.0
    %94 = vmatpush.msra.mxu0 0.0
    %95 = vmatpush.msra.mxu0 0.0
    %96 = vmatpush.msra.mxu0 0.0
    %97 = vmatpush.msra.mxu0 0.0
    %98 = vmatpush.msra.mxu0 0.0
    %99 = vmatpush.msra.mxu0 0.0
    %100 = vmatpush.msra.mxu0 0.0
    %101 = vmatpush.msra.mxu0 %v84
    %102 = vmatmul.f32.gmra.mxu0 %v80
    %v103 = vpop.f32.mrf.mxu0
    %v104 = vadd.f32 %v76, %v103
    %105 = vdwg.mxu0
    %v106 = vld [vmem:[%s1] sm:$0xff]
    %108 = vset.pattern.permute.xlu0 0
    %109 = vperm.xlu0 %108, %v106
    %v110 = vpop.permute.xlu0 %109
    %112 = vset.pattern.permute.xlu0 1
    %113 = vperm.xlu0 %112, %v106
    %v114 = vpop.permute.xlu0 %113
    %116 = vset.pattern.permute.xlu0 2
    %117 = vperm.xlu0 %116, %v106
    %v118 = vpop.permute.xlu0 %117
    %120 = vset.pattern.permute.xlu0 3
    %121 = vperm.xlu0 %120, %v106
    %v122 = vpop.permute.xlu0 %121
    %124 = vset.pattern.permute.xlu0 4
    %125 = vperm.xlu0 %124, %v106
    %v126 = vpop.permute.xlu0 %125
    %128 = vset.pattern.permute.xlu0 5
    %129 = vperm.xlu0 %128, %v106
    %v130 = vpop.permute.xlu0 %129
    %132 = vset.pattern.permute.xlu0 6
    %133 = vperm.xlu0 %132, %v106
    %v134 = vpop.permute.xlu0 %133
    %136 = vset.pattern.permute.xlu0 7
    %137 = vperm.xlu0 %136, %v106
    %v138 = vpop.permute.xlu0 %137
    %140 = vset.pattern.permute.xlu0 8
    %141 = vperm.xlu0 %140, %v106
    %v142 = vpop.permute.xlu0 %141
    %144 = vset.pattern.permute.xlu0 9
    %145 = vperm.xlu0 %144, %v106
    %v146 = vpop.permute.xlu0 %145
    %148 = vset.pattern.permute.xlu0 10
    %149 = vperm.xlu0 %148, %v106
    %v150 = vpop.permute.xlu0 %149
    %152 = vset.pattern.permute.xlu0 11
    %153 = vperm.xlu0 %152, %v106
    %v154 = vpop.permute.xlu0 %153
    %156 = vset.pattern.permute.xlu0 12
    %157 = vperm.xlu0 %156, %v106
    %v158 = vpop.permute.xlu0 %157
    %160 = vset.pattern.permute.xlu0 13
    %161 = vperm.xlu0 %160, %v106
    %v162 = vpop.permute.xlu0 %161
    %164 = vset.pattern.permute.xlu0 14
    %165 = vperm.xlu0 %164, %v106
    %v166 = vpop.permute.xlu0 %165
    %168 = vset.pattern.permute.xlu0 15
    %169 = vperm.xlu0 %168, %v106
    %v170 = vpop.permute.xlu0 %169
    %v173 = vperm.slane %v68, 0
    %vm175 = vcmask 261120
    %v177 = vsel %vm175, %v104, 0
    %179 = vmatpush.msra.mxu0 0.0
    %180 = vmatpush.msra.mxu0 0.0
    %181 = vmatpush.msra.mxu0 0.0
    %182 = vmatpush.msra.mxu0 0.0
    %183 = vmatpush.msra.mxu0 0.0
    %184 = vmatpush.msra.mxu0 0.0
    %185 = vmatpush.msra.mxu0 0.0
    %186 = vmatpush.msra.mxu0 0.0
    %187 = vmatpush.msra.mxu0 0.0
    %188 = vmatpush.msra.mxu0 0.0
    %189 = vmatpush.msra.mxu0 0.0
    %190 = vmatpush.msra.mxu0 0.0
    %191 = vmatpush.msra.mxu0 %v67
    %192 = vmatpush.msra.mxu0 %v66
    %193 = vmatpush.msra.mxu0 %v65
    %194 = vmatpush.msra.mxu0 %v64
    %195 = vmatmul.f32.gmra.mxu0 %v177
    %v196 = vpop.f32.mrf.mxu0
    %v197 = vadd.f32 %v173, %v196
    %198 = vdwg.mxu0
    %v199 = vmax.f32 %v197, 0.0
    %v201 = vperm.slane %v73, 0
    %v204 = vsel %vm175, %v199, 0
    %206 = vmatpush.msra.mxu0 0.0
    %207 = vmatpush.msra.mxu0 0.0
    %208 = vmatpush.msra.mxu0 0.0
    %209 = vmatpush.msra.mxu0 0.0
    %210 = vmatpush.msra.mxu0 0.0
    %211 = vmatpush.msra.mxu0 0.0
    %212 = vmatpush.msra.mxu0 0.0
    %213 = vmatpush.msra.mxu0 0.0
    %214 = vmatpush.msra.mxu0 0.0
    %215 = vmatpush.msra.mxu0 0.0
    %216 = vmatpush.msra.mxu0 0.0
    %217 = vmatpush.msra.mxu0 0.0
    %218 = vmatpush.msra.mxu0 %v72
    %219 = vmatpush.msra.mxu0 %v71
    %220 = vmatpush.msra.mxu0 %v70
    %221 = vmatpush.msra.mxu0 %v69
    %222 = vmatmul.f32.gmra.mxu0 %v204
    %v223 = vpop.f32.mrf.mxu0
    %v224 = vadd.f32 %v201, %v223
    %225 = vdwg.mxu0
    %v226 = vtanh.pop %v224
    %v227 = vmul.f32 %v226, %v110
    %v228 = vmul.f32 %v226, %v114
    %230 = vrot.lane.b32.xlu0 %v228, 96
    %v231 = vpop.permute.xlu0 %230
    %v233 = vadd.f32 %v227, %v231
    %v234 = vmul.f32 %v226, %v118
    %236 = vrot.lane.b32.xlu0 %v234, 64
    %v237 = vpop.permute.xlu0 %236
    %v239 = vadd.f32 %v233, %v237
    %v240 = vmul.f32 %v226, %v122
    %242 = vrot.lane.b32.xlu0 %v240, 32
    %v243 = vpop.permute.xlu0 %242
    %v245 = vadd.f32 %v239, %v243
    %v246 = vmul.f32 %v245, 0.33333334
    %v247 = vadd.f32 %v104, %v246
    %v249 = vsel %vm175, %v247, 0
    %251 = vmatpush.msra.mxu0 0.0
    %252 = vmatpush.msra.mxu0 0.0
    %253 = vmatpush.msra.mxu0 0.0
    %254 = vmatpush.msra.mxu0 0.0
    %255 = vmatpush.msra.mxu0 0.0
    %256 = vmatpush.msra.mxu0 0.0
    %257 = vmatpush.msra.mxu0 0.0
    %258 = vmatpush.msra.mxu0 0.0
    %259 = vmatpush.msra.mxu0 0.0
    %260 = vmatpush.msra.mxu0 0.0
    %261 = vmatpush.msra.mxu0 0.0
    %262 = vmatpush.msra.mxu0 0.0
    %263 = vmatpush.msra.mxu0 %v67
    %264 = vmatpush.msra.mxu0 %v66
    %265 = vmatpush.msra.mxu0 %v65
    %266 = vmatpush.msra.mxu0 %v64
    %267 = vmatmul.f32.gmra.mxu0 %v249
    %v268 = vpop.f32.mrf.mxu0
    %v269 = vadd.f32 %v173, %v268
    %270 = vdwg.mxu0
    %v271 = vmax.f32 %v269, 0.0
    %v273 = vsel %vm175, %v271, 0
    %275 = vmatpush.msra.mxu0 0.0
    %276 = vmatpush.msra.mxu0 0.0
    %277 = vmatpush.msra.mxu0 0.0
    %278 = vmatpush.msra.mxu0 0.0
    %279 = vmatpush.msra.mxu0 0.0
    %280 = vmatpush.msra.mxu0 0.0
    %281 = vmatpush.msra.mxu0 0.0
    %282 = vmatpush.msra.mxu0 0.0
    %283 = vmatpush.msra.mxu0 0.0
    %284 = vmatpush.msra.mxu0 0.0
    %285 = vmatpush.msra.mxu0 0.0
    %286 = vmatpush.msra.mxu0 0.0
    %287 = vmatpush.msra.mxu0 %v72
    %288 = vmatpush.msra.mxu0 %v71
    %289 = vmatpush.msra.mxu0 %v70
    %290 = vmatpush.msra.mxu0 %v69
    %291 = vmatmul.f32.gmra.mxu0 %v273
    %v292 = vpop.f32.mrf.mxu0
    %v293 = vadd.f32 %v201, %v292
    %294 = vdwg.mxu0
    %v295 = vtanh.pop %v293
    %v296 = vmul.f32 %v295, %v126
    %v297 = vmul.f32 %v295, %v130
    %299 = vrot.lane.b32.xlu0 %v297, 96
    %v300 = vpop.permute.xlu0 %299
    %v302 = vadd.f32 %v296, %v300
    %v303 = vmul.f32 %v295, %v134
    %305 = vrot.lane.b32.xlu0 %v303, 64
    %v306 = vpop.permute.xlu0 %305
    %v308 = vadd.f32 %v302, %v306
    %v309 = vmul.f32 %v295, %v138
    %311 = vrot.lane.b32.xlu0 %v309, 32
    %v312 = vpop.permute.xlu0 %311
    %v314 = vadd.f32 %v308, %v312
    %v315 = vsub.f32 %v314, %v246
    %v316 = vadd.f32 %v104, %v315
    %v318 = vsel %vm175, %v316, 0
    %320 = vmatpush.msra.mxu0 0.0
    %321 = vmatpush.msra.mxu0 0.0
    %322 = vmatpush.msra.mxu0 0.0
    %323 = vmatpush.msra.mxu0 0.0
    %324 = vmatpush.msra.mxu0 0.0
    %325 = vmatpush.msra.mxu0 0.0
    %326 = vmatpush.msra.mxu0 0.0
    %327 = vmatpush.msra.mxu0 0.0
    %328 = vmatpush.msra.mxu0 0.0
    %329 = vmatpush.msra.mxu0 0.0
    %330 = vmatpush.msra.mxu0 0.0
    %331 = vmatpush.msra.mxu0 0.0
    %332 = vmatpush.msra.mxu0 %v67
    %333 = vmatpush.msra.mxu0 %v66
    %334 = vmatpush.msra.mxu0 %v65
    %335 = vmatpush.msra.mxu0 %v64
    %336 = vmatmul.f32.gmra.mxu0 %v318
    %v337 = vpop.f32.mrf.mxu0
    %v338 = vadd.f32 %v173, %v337
    %339 = vdwg.mxu0
    %v340 = vmax.f32 %v338, 0.0
    %v342 = vsel %vm175, %v340, 0
    %344 = vmatpush.msra.mxu0 0.0
    %345 = vmatpush.msra.mxu0 0.0
    %346 = vmatpush.msra.mxu0 0.0
    %347 = vmatpush.msra.mxu0 0.0
    %348 = vmatpush.msra.mxu0 0.0
    %349 = vmatpush.msra.mxu0 0.0
    %350 = vmatpush.msra.mxu0 0.0
    %351 = vmatpush.msra.mxu0 0.0
    %352 = vmatpush.msra.mxu0 0.0
    %353 = vmatpush.msra.mxu0 0.0
    %354 = vmatpush.msra.mxu0 0.0
    %355 = vmatpush.msra.mxu0 0.0
    %356 = vmatpush.msra.mxu0 %v72
    %357 = vmatpush.msra.mxu0 %v71
    %358 = vmatpush.msra.mxu0 %v70
    %359 = vmatpush.msra.mxu0 %v69
    %360 = vmatmul.f32.gmra.mxu0 %v342
    %v361 = vpop.f32.mrf.mxu0
    %v362 = vadd.f32 %v201, %v361
    %363 = vdwg.mxu0
    %v364 = vtanh.pop %v362
    %v365 = vmul.f32 %v364, %v142
    %v366 = vmul.f32 %v364, %v146
    %368 = vrot.lane.b32.xlu0 %v366, 96
    %v369 = vpop.permute.xlu0 %368
    %v371 = vadd.f32 %v365, %v369
    %v372 = vmul.f32 %v364, %v150
    %374 = vrot.lane.b32.xlu0 %v372, 64
    %v375 = vpop.permute.xlu0 %374
    %v377 = vadd.f32 %v371, %v375
    %v378 = vmul.f32 %v364, %v154
    %380 = vrot.lane.b32.xlu0 %v378, 32
    %v381 = vpop.permute.xlu0 %380
    %v383 = vadd.f32 %v377, %v381
    %v384 = vsub.f32 %v245, %v314
    %v385 = vadd.f32 %v384, %v383
    %v386 = vadd.f32 %v104, %v385
    %v388 = vsel %vm175, %v386, 0
    %390 = vmatpush.msra.mxu0 0.0
    %391 = vmatpush.msra.mxu0 0.0
    %392 = vmatpush.msra.mxu0 0.0
    %393 = vmatpush.msra.mxu0 0.0
    %394 = vmatpush.msra.mxu0 0.0
    %395 = vmatpush.msra.mxu0 0.0
    %396 = vmatpush.msra.mxu0 0.0
    %397 = vmatpush.msra.mxu0 0.0
    %398 = vmatpush.msra.mxu0 0.0
    %399 = vmatpush.msra.mxu0 0.0
    %400 = vmatpush.msra.mxu0 0.0
    %401 = vmatpush.msra.mxu0 0.0
    %402 = vmatpush.msra.mxu0 %v67
    %403 = vmatpush.msra.mxu0 %v66
    %404 = vmatpush.msra.mxu0 %v65
    %405 = vmatpush.msra.mxu0 %v64
    %406 = vmatmul.f32.gmra.mxu0 %v388
    %v407 = vpop.f32.mrf.mxu0
    %v408 = vadd.f32 %v173, %v407
    %409 = vdwg.mxu0
    %v410 = vmax.f32 %v408, 0.0
    %v412 = vsel %vm175, %v410, 0
    %414 = vmatpush.msra.mxu0 0.0
    %415 = vmatpush.msra.mxu0 0.0
    %416 = vmatpush.msra.mxu0 0.0
    %417 = vmatpush.msra.mxu0 0.0
    %418 = vmatpush.msra.mxu0 0.0
    %419 = vmatpush.msra.mxu0 0.0
    %420 = vmatpush.msra.mxu0 0.0
    %421 = vmatpush.msra.mxu0 0.0
    %422 = vmatpush.msra.mxu0 0.0
    %423 = vmatpush.msra.mxu0 0.0
    %424 = vmatpush.msra.mxu0 0.0
    %425 = vmatpush.msra.mxu0 0.0
    %426 = vmatpush.msra.mxu0 %v72
    %427 = vmatpush.msra.mxu0 %v71
    %428 = vmatpush.msra.mxu0 %v70
    %429 = vmatpush.msra.mxu0 %v69
    %430 = vmatmul.f32.gmra.mxu0 %v412
    %v431 = vpop.f32.mrf.mxu0
    %v432 = vadd.f32 %v201, %v431
    %433 = vdwg.mxu0
    %v434 = vtanh.pop %v432
    %v435 = vmul.f32 %v434, %v158
    %v436 = vmul.f32 %v434, %v162
    %438 = vrot.lane.b32.xlu0 %v436, 96
    %v439 = vpop.permute.xlu0 %438
    %v441 = vadd.f32 %v435, %v439
    %v442 = vmul.f32 %v434, %v166
    %444 = vrot.lane.b32.xlu0 %v442, 64
    %v445 = vpop.permute.xlu0 %444
    %v447 = vadd.f32 %v441, %v445
    %v448 = vmul.f32 %v434, %v170
    %450 = vrot.lane.b32.xlu0 %v448, 32
    %v451 = vpop.permute.xlu0 %450
    %v453 = vadd.f32 %v447, %v451
    %v454 = vadd.f32 %v314, %v383
    %v455 = vmul.f32 %v454, 3.0
    %v456 = vadd.f32 %v245, %v455
    %v457 = vadd.f32 %v456, %v453
    %v458 = vmul.f32 %v457, 0.125
    %v459 = vadd.f32 %v104, %v458
    %460 = vset.pattern.permute.xlu0 16
    %461 = vperm.xlu0 %460, %v106
    %v462 = vpop.permute.xlu0 %461
    %464 = vset.pattern.permute.xlu0 17
    %465 = vperm.xlu0 %464, %v106
    %v466 = vpop.permute.xlu0 %465
    %468 = vset.pattern.permute.xlu0 18
    %469 = vperm.xlu0 %468, %v106
    %v470 = vpop.permute.xlu0 %469
    %472 = vset.pattern.permute.xlu0 19
    %473 = vperm.xlu0 %472, %v106
    %v474 = vpop.permute.xlu0 %473
    %476 = vset.pattern.permute.xlu0 20
    %477 = vperm.xlu0 %476, %v106
    %v478 = vpop.permute.xlu0 %477
    %480 = vset.pattern.permute.xlu0 21
    %481 = vperm.xlu0 %480, %v106
    %v482 = vpop.permute.xlu0 %481
    %484 = vset.pattern.permute.xlu0 22
    %485 = vperm.xlu0 %484, %v106
    %v486 = vpop.permute.xlu0 %485
    %488 = vset.pattern.permute.xlu0 23
    %489 = vperm.xlu0 %488, %v106
    %v490 = vpop.permute.xlu0 %489
    %492 = vset.pattern.permute.xlu0 24
    %493 = vperm.xlu0 %492, %v106
    %v494 = vpop.permute.xlu0 %493
    %496 = vset.pattern.permute.xlu0 25
    %497 = vperm.xlu0 %496, %v106
    %v498 = vpop.permute.xlu0 %497
    %500 = vset.pattern.permute.xlu0 26
    %501 = vperm.xlu0 %500, %v106
    %v502 = vpop.permute.xlu0 %501
    %504 = vset.pattern.permute.xlu0 27
    %505 = vperm.xlu0 %504, %v106
    %v506 = vpop.permute.xlu0 %505
    %508 = vset.pattern.permute.xlu0 28
    %509 = vperm.xlu0 %508, %v106
    %v510 = vpop.permute.xlu0 %509
    %512 = vset.pattern.permute.xlu0 29
    %513 = vperm.xlu0 %512, %v106
    %v514 = vpop.permute.xlu0 %513
    %516 = vset.pattern.permute.xlu0 30
    %517 = vperm.xlu0 %516, %v106
    %v518 = vpop.permute.xlu0 %517
    %520 = vset.pattern.permute.xlu0 31
    %521 = vperm.xlu0 %520, %v106
    %v522 = vpop.permute.xlu0 %521
    %v525 = vsel %vm175, %v459, 0
    %527 = vmatpush.msra.mxu0 0.0
    %528 = vmatpush.msra.mxu0 0.0
    %529 = vmatpush.msra.mxu0 0.0
    %530 = vmatpush.msra.mxu0 0.0
    %531 = vmatpush.msra.mxu0 0.0
    %532 = vmatpush.msra.mxu0 0.0
    %533 = vmatpush.msra.mxu0 0.0
    %534 = vmatpush.msra.mxu0 0.0
    %535 = vmatpush.msra.mxu0 0.0
    %536 = vmatpush.msra.mxu0 0.0
    %537 = vmatpush.msra.mxu0 0.0
    %538 = vmatpush.msra.mxu0 0.0
    %539 = vmatpush.msra.mxu0 %v67
    %540 = vmatpush.msra.mxu0 %v66
    %541 = vmatpush.msra.mxu0 %v65
    %542 = vmatpush.msra.mxu0 %v64
    %543 = vmatmul.f32.gmra.mxu0 %v525
    %v544 = vpop.f32.mrf.mxu0
    %v545 = vadd.f32 %v173, %v544
    %546 = vdwg.mxu0
    %v547 = vmax.f32 %v545, 0.0
    %v549 = vsel %vm175, %v547, 0
    %551 = vmatpush.msra.mxu0 0.0
    %552 = vmatpush.msra.mxu0 0.0
    %553 = vmatpush.msra.mxu0 0.0
    %554 = vmatpush.msra.mxu0 0.0
    %555 = vmatpush.msra.mxu0 0.0
    %556 = vmatpush.msra.mxu0 0.0
    %557 = vmatpush.msra.mxu0 0.0
    %558 = vmatpush.msra.mxu0 0.0
    %559 = vmatpush.msra.mxu0 0.0
    %560 = vmatpush.msra.mxu0 0.0
    %561 = vmatpush.msra.mxu0 0.0
    %562 = vmatpush.msra.mxu0 0.0
    %563 = vmatpush.msra.mxu0 %v72
    %564 = vmatpush.msra.mxu0 %v71
    %565 = vmatpush.msra.mxu0 %v70
    %566 = vmatpush.msra.mxu0 %v69
    %567 = vmatmul.f32.gmra.mxu0 %v549
    %v568 = vpop.f32.mrf.mxu0
    %v569 = vadd.f32 %v201, %v568
    %570 = vdwg.mxu0
    %v571 = vtanh.pop %v569
    %v572 = vmul.f32 %v571, %v462
    %v573 = vmul.f32 %v571, %v466
    %575 = vrot.lane.b32.xlu0 %v573, 96
    %v576 = vpop.permute.xlu0 %575
    %v578 = vadd.f32 %v572, %v576
    %v579 = vmul.f32 %v571, %v470
    %581 = vrot.lane.b32.xlu0 %v579, 64
    %v582 = vpop.permute.xlu0 %581
    %v584 = vadd.f32 %v578, %v582
    %v585 = vmul.f32 %v571, %v474
    %587 = vrot.lane.b32.xlu0 %v585, 32
    %v588 = vpop.permute.xlu0 %587
    %v590 = vadd.f32 %v584, %v588
    %v591 = vmul.f32 %v590, 0.33333334
    %v592 = vadd.f32 %v459, %v591
    %v594 = vsel %vm175, %v592, 0
    %596 = vmatpush.msra.mxu0 0.0
    %597 = vmatpush.msra.mxu0 0.0
    %598 = vmatpush.msra.mxu0 0.0
    %599 = vmatpush.msra.mxu0 0.0
    %600 = vmatpush.msra.mxu0 0.0
    %601 = vmatpush.msra.mxu0 0.0
    %602 = vmatpush.msra.mxu0 0.0
    %603 = vmatpush.msra.mxu0 0.0
    %604 = vmatpush.msra.mxu0 0.0
    %605 = vmatpush.msra.mxu0 0.0
    %606 = vmatpush.msra.mxu0 0.0
    %607 = vmatpush.msra.mxu0 0.0
    %608 = vmatpush.msra.mxu0 %v67
    %609 = vmatpush.msra.mxu0 %v66
    %610 = vmatpush.msra.mxu0 %v65
    %611 = vmatpush.msra.mxu0 %v64
    %612 = vmatmul.f32.gmra.mxu0 %v594
    %v613 = vpop.f32.mrf.mxu0
    %v614 = vadd.f32 %v173, %v613
    %615 = vdwg.mxu0
    %v616 = vmax.f32 %v614, 0.0
    %v618 = vsel %vm175, %v616, 0
    %620 = vmatpush.msra.mxu0 0.0
    %621 = vmatpush.msra.mxu0 0.0
    %622 = vmatpush.msra.mxu0 0.0
    %623 = vmatpush.msra.mxu0 0.0
    %624 = vmatpush.msra.mxu0 0.0
    %625 = vmatpush.msra.mxu0 0.0
    %626 = vmatpush.msra.mxu0 0.0
    %627 = vmatpush.msra.mxu0 0.0
    %628 = vmatpush.msra.mxu0 0.0
    %629 = vmatpush.msra.mxu0 0.0
    %630 = vmatpush.msra.mxu0 0.0
    %631 = vmatpush.msra.mxu0 0.0
    %632 = vmatpush.msra.mxu0 %v72
    %633 = vmatpush.msra.mxu0 %v71
    %634 = vmatpush.msra.mxu0 %v70
    %635 = vmatpush.msra.mxu0 %v69
    %636 = vmatmul.f32.gmra.mxu0 %v618
    %v637 = vpop.f32.mrf.mxu0
    %v638 = vadd.f32 %v201, %v637
    %639 = vdwg.mxu0
    %v640 = vtanh.pop %v638
    %v641 = vmul.f32 %v640, %v478
    %v642 = vmul.f32 %v640, %v482
    %644 = vrot.lane.b32.xlu0 %v642, 96
    %v645 = vpop.permute.xlu0 %644
    %v647 = vadd.f32 %v641, %v645
    %v648 = vmul.f32 %v640, %v486
    %650 = vrot.lane.b32.xlu0 %v648, 64
    %v651 = vpop.permute.xlu0 %650
    %v653 = vadd.f32 %v647, %v651
    %v654 = vmul.f32 %v640, %v490
    %656 = vrot.lane.b32.xlu0 %v654, 32
    %v657 = vpop.permute.xlu0 %656
    %v659 = vadd.f32 %v653, %v657
    %v660 = vsub.f32 %v659, %v591
    %v661 = vadd.f32 %v459, %v660
    %v663 = vsel %vm175, %v661, 0
    %665 = vmatpush.msra.mxu0 0.0
    %666 = vmatpush.msra.mxu0 0.0
    %667 = vmatpush.msra.mxu0 0.0
    %668 = vmatpush.msra.mxu0 0.0
    %669 = vmatpush.msra.mxu0 0.0
    %670 = vmatpush.msra.mxu0 0.0
    %671 = vmatpush.msra.mxu0 0.0
    %672 = vmatpush.msra.mxu0 0.0
    %673 = vmatpush.msra.mxu0 0.0
    %674 = vmatpush.msra.mxu0 0.0
    %675 = vmatpush.msra.mxu0 0.0
    %676 = vmatpush.msra.mxu0 0.0
    %677 = vmatpush.msra.mxu0 %v67
    %678 = vmatpush.msra.mxu0 %v66
    %679 = vmatpush.msra.mxu0 %v65
    %680 = vmatpush.msra.mxu0 %v64
    %681 = vmatmul.f32.gmra.mxu0 %v663
    %v682 = vpop.f32.mrf.mxu0
    %v683 = vadd.f32 %v173, %v682
    %684 = vdwg.mxu0
    %v685 = vmax.f32 %v683, 0.0
    %v687 = vsel %vm175, %v685, 0
    %689 = vmatpush.msra.mxu0 0.0
    %690 = vmatpush.msra.mxu0 0.0
    %691 = vmatpush.msra.mxu0 0.0
    %692 = vmatpush.msra.mxu0 0.0
    %693 = vmatpush.msra.mxu0 0.0
    %694 = vmatpush.msra.mxu0 0.0
    %695 = vmatpush.msra.mxu0 0.0
    %696 = vmatpush.msra.mxu0 0.0
    %697 = vmatpush.msra.mxu0 0.0
    %698 = vmatpush.msra.mxu0 0.0
    %699 = vmatpush.msra.mxu0 0.0
    %700 = vmatpush.msra.mxu0 0.0
    %701 = vmatpush.msra.mxu0 %v72
    %702 = vmatpush.msra.mxu0 %v71
    %703 = vmatpush.msra.mxu0 %v70
    %704 = vmatpush.msra.mxu0 %v69
    %705 = vmatmul.f32.gmra.mxu0 %v687
    %v706 = vpop.f32.mrf.mxu0
    %v707 = vadd.f32 %v201, %v706
    %708 = vdwg.mxu0
    %v709 = vtanh.pop %v707
    %v710 = vmul.f32 %v709, %v494
    %v711 = vmul.f32 %v709, %v498
    %713 = vrot.lane.b32.xlu0 %v711, 96
    %v714 = vpop.permute.xlu0 %713
    %v716 = vadd.f32 %v710, %v714
    %v717 = vmul.f32 %v709, %v502
    %719 = vrot.lane.b32.xlu0 %v717, 64
    %v720 = vpop.permute.xlu0 %719
    %v722 = vadd.f32 %v716, %v720
    %v723 = vmul.f32 %v709, %v506
    %725 = vrot.lane.b32.xlu0 %v723, 32
    %v726 = vpop.permute.xlu0 %725
    %v728 = vadd.f32 %v722, %v726
    %v729 = vsub.f32 %v590, %v659
    %v730 = vadd.f32 %v729, %v728
    %v731 = vadd.f32 %v459, %v730
    %v733 = vsel %vm175, %v731, 0
    %735 = vmatpush.msra.mxu0 0.0
    %736 = vmatpush.msra.mxu0 0.0
    %737 = vmatpush.msra.mxu0 0.0
    %738 = vmatpush.msra.mxu0 0.0
    %739 = vmatpush.msra.mxu0 0.0
    %740 = vmatpush.msra.mxu0 0.0
    %741 = vmatpush.msra.mxu0 0.0
    %742 = vmatpush.msra.mxu0 0.0
    %743 = vmatpush.msra.mxu0 0.0
    %744 = vmatpush.msra.mxu0 0.0
    %745 = vmatpush.msra.mxu0 0.0
    %746 = vmatpush.msra.mxu0 0.0
    %747 = vmatpush.msra.mxu0 %v67
    %748 = vmatpush.msra.mxu0 %v66
    %749 = vmatpush.msra.mxu0 %v65
    %750 = vmatpush.msra.mxu0 %v64
    %751 = vmatmul.f32.gmra.mxu0 %v733
    %v752 = vpop.f32.mrf.mxu0
    %v753 = vadd.f32 %v173, %v752
    %754 = vdwg.mxu0
    %v755 = vmax.f32 %v753, 0.0
    %v757 = vsel %vm175, %v755, 0
    %759 = vmatpush.msra.mxu0 0.0
    %760 = vmatpush.msra.mxu0 0.0
    %761 = vmatpush.msra.mxu0 0.0
    %762 = vmatpush.msra.mxu0 0.0
    %763 = vmatpush.msra.mxu0 0.0
    %764 = vmatpush.msra.mxu0 0.0
    %765 = vmatpush.msra.mxu0 0.0
    %766 = vmatpush.msra.mxu0 0.0
    %767 = vmatpush.msra.mxu0 0.0
    %768 = vmatpush.msra.mxu0 0.0
    %769 = vmatpush.msra.mxu0 0.0
    %770 = vmatpush.msra.mxu0 0.0
    %771 = vmatpush.msra.mxu0 %v72
    %772 = vmatpush.msra.mxu0 %v71
    %773 = vmatpush.msra.mxu0 %v70
    %774 = vmatpush.msra.mxu0 %v69
    %775 = vmatmul.f32.gmra.mxu0 %v757
    %v776 = vpop.f32.mrf.mxu0
    %v777 = vadd.f32 %v201, %v776
    %778 = vdwg.mxu0
    %v779 = vtanh.pop %v777
    %v780 = vmul.f32 %v779, %v510
    %v781 = vmul.f32 %v779, %v514
    %783 = vrot.lane.b32.xlu0 %v781, 96
    %v784 = vpop.permute.xlu0 %783
    %v786 = vadd.f32 %v780, %v784
    %v787 = vmul.f32 %v779, %v518
    %789 = vrot.lane.b32.xlu0 %v787, 64
    %v790 = vpop.permute.xlu0 %789
    %v792 = vadd.f32 %v786, %v790
    %v793 = vmul.f32 %v779, %v522
    %795 = vrot.lane.b32.xlu0 %v793, 32
    %v796 = vpop.permute.xlu0 %795
    %v798 = vadd.f32 %v792, %v796
    %v799 = vadd.f32 %v659, %v728
    %v800 = vmul.f32 %v799, 3.0
    %v801 = vadd.f32 %v590, %v800
    %v802 = vadd.f32 %v801, %v798
    %v803 = vmul.f32 %v802, 0.125
    %v804 = vadd.f32 %v459, %v803
    %805 = vset.pattern.permute.xlu0 32
    %806 = vperm.xlu0 %805, %v106
    %v807 = vpop.permute.xlu0 %806
    %809 = vset.pattern.permute.xlu0 33
    %810 = vperm.xlu0 %809, %v106
    %v811 = vpop.permute.xlu0 %810
    %813 = vset.pattern.permute.xlu0 34
    %814 = vperm.xlu0 %813, %v106
    %v815 = vpop.permute.xlu0 %814
    %817 = vset.pattern.permute.xlu0 35
    %818 = vperm.xlu0 %817, %v106
    %v819 = vpop.permute.xlu0 %818
    %821 = vset.pattern.permute.xlu0 36
    %822 = vperm.xlu0 %821, %v106
    %v823 = vpop.permute.xlu0 %822
    %825 = vset.pattern.permute.xlu0 37
    %826 = vperm.xlu0 %825, %v106
    %v827 = vpop.permute.xlu0 %826
    %829 = vset.pattern.permute.xlu0 38
    %830 = vperm.xlu0 %829, %v106
    %v831 = vpop.permute.xlu0 %830
    %833 = vset.pattern.permute.xlu0 39
    %834 = vperm.xlu0 %833, %v106
    %v835 = vpop.permute.xlu0 %834
    %837 = vset.pattern.permute.xlu0 40
    %838 = vperm.xlu0 %837, %v106
    %v839 = vpop.permute.xlu0 %838
    %841 = vset.pattern.permute.xlu0 41
    %842 = vperm.xlu0 %841, %v106
    %v843 = vpop.permute.xlu0 %842
    %845 = vset.pattern.permute.xlu0 42
    %846 = vperm.xlu0 %845, %v106
    %v847 = vpop.permute.xlu0 %846
    %849 = vset.pattern.permute.xlu0 43
    %850 = vperm.xlu0 %849, %v106
    %v851 = vpop.permute.xlu0 %850
    %853 = vset.pattern.permute.xlu0 44
    %854 = vperm.xlu0 %853, %v106
    %v855 = vpop.permute.xlu0 %854
    %857 = vset.pattern.permute.xlu0 45
    %858 = vperm.xlu0 %857, %v106
    %v859 = vpop.permute.xlu0 %858
    %861 = vset.pattern.permute.xlu0 46
    %862 = vperm.xlu0 %861, %v106
    %v863 = vpop.permute.xlu0 %862
    %865 = vset.pattern.permute.xlu0 47
    %866 = vperm.xlu0 %865, %v106
    %v867 = vpop.permute.xlu0 %866
    %v870 = vsel %vm175, %v804, 0
    %872 = vmatpush.msra.mxu0 0.0
    %873 = vmatpush.msra.mxu0 0.0
    %874 = vmatpush.msra.mxu0 0.0
    %875 = vmatpush.msra.mxu0 0.0
    %876 = vmatpush.msra.mxu0 0.0
    %877 = vmatpush.msra.mxu0 0.0
    %878 = vmatpush.msra.mxu0 0.0
    %879 = vmatpush.msra.mxu0 0.0
    %880 = vmatpush.msra.mxu0 0.0
    %881 = vmatpush.msra.mxu0 0.0
    %882 = vmatpush.msra.mxu0 0.0
    %883 = vmatpush.msra.mxu0 0.0
    %884 = vmatpush.msra.mxu0 %v67
    %885 = vmatpush.msra.mxu0 %v66
    %886 = vmatpush.msra.mxu0 %v65
    %887 = vmatpush.msra.mxu0 %v64
    %888 = vmatmul.f32.gmra.mxu0 %v870
    %v889 = vpop.f32.mrf.mxu0
    %v890 = vadd.f32 %v173, %v889
    %891 = vdwg.mxu0
    %v892 = vmax.f32 %v890, 0.0
    %v894 = vsel %vm175, %v892, 0
    %896 = vmatpush.msra.mxu0 0.0
    %897 = vmatpush.msra.mxu0 0.0
    %898 = vmatpush.msra.mxu0 0.0
    %899 = vmatpush.msra.mxu0 0.0
    %900 = vmatpush.msra.mxu0 0.0
    %901 = vmatpush.msra.mxu0 0.0
    %902 = vmatpush.msra.mxu0 0.0
    %903 = vmatpush.msra.mxu0 0.0
    %904 = vmatpush.msra.mxu0 0.0
    %905 = vmatpush.msra.mxu0 0.0
    %906 = vmatpush.msra.mxu0 0.0
    %907 = vmatpush.msra.mxu0 0.0
    %908 = vmatpush.msra.mxu0 %v72
    %909 = vmatpush.msra.mxu0 %v71
    %910 = vmatpush.msra.mxu0 %v70
    %911 = vmatpush.msra.mxu0 %v69
    %912 = vmatmul.f32.gmra.mxu0 %v894
    %v913 = vpop.f32.mrf.mxu0
    %v914 = vadd.f32 %v201, %v913
    %915 = vdwg.mxu0
    %v916 = vtanh.pop %v914
    %v917 = vmul.f32 %v916, %v807
    %v918 = vmul.f32 %v916, %v811
    %920 = vrot.lane.b32.xlu0 %v918, 96
    %v921 = vpop.permute.xlu0 %920
    %v923 = vadd.f32 %v917, %v921
    %v924 = vmul.f32 %v916, %v815
    %926 = vrot.lane.b32.xlu0 %v924, 64
    %v927 = vpop.permute.xlu0 %926
    %v929 = vadd.f32 %v923, %v927
    %v930 = vmul.f32 %v916, %v819
    %932 = vrot.lane.b32.xlu0 %v930, 32
    %v933 = vpop.permute.xlu0 %932
    %v935 = vadd.f32 %v929, %v933
    %v936 = vmul.f32 %v935, 0.33333334
    %v937 = vadd.f32 %v804, %v936
    %v939 = vsel %vm175, %v937, 0
    %941 = vmatpush.msra.mxu0 0.0
    %942 = vmatpush.msra.mxu0 0.0
    %943 = vmatpush.msra.mxu0 0.0
    %944 = vmatpush.msra.mxu0 0.0
    %945 = vmatpush.msra.mxu0 0.0
    %946 = vmatpush.msra.mxu0 0.0
    %947 = vmatpush.msra.mxu0 0.0
    %948 = vmatpush.msra.mxu0 0.0
    %949 = vmatpush.msra.mxu0 0.0
    %950 = vmatpush.msra.mxu0 0.0
    %951 = vmatpush.msra.mxu0 0.0
    %952 = vmatpush.msra.mxu0 0.0
    %953 = vmatpush.msra.mxu0 %v67
    %954 = vmatpush.msra.mxu0 %v66
    %955 = vmatpush.msra.mxu0 %v65
    %956 = vmatpush.msra.mxu0 %v64
    %957 = vmatmul.f32.gmra.mxu0 %v939
    %v958 = vpop.f32.mrf.mxu0
    %v959 = vadd.f32 %v173, %v958
    %960 = vdwg.mxu0
    %v961 = vmax.f32 %v959, 0.0
    %v963 = vsel %vm175, %v961, 0
    %965 = vmatpush.msra.mxu0 0.0
    %966 = vmatpush.msra.mxu0 0.0
    %967 = vmatpush.msra.mxu0 0.0
    %968 = vmatpush.msra.mxu0 0.0
    %969 = vmatpush.msra.mxu0 0.0
    %970 = vmatpush.msra.mxu0 0.0
    %971 = vmatpush.msra.mxu0 0.0
    %972 = vmatpush.msra.mxu0 0.0
    %973 = vmatpush.msra.mxu0 0.0
    %974 = vmatpush.msra.mxu0 0.0
    %975 = vmatpush.msra.mxu0 0.0
    %976 = vmatpush.msra.mxu0 0.0
    %977 = vmatpush.msra.mxu0 %v72
    %978 = vmatpush.msra.mxu0 %v71
    %979 = vmatpush.msra.mxu0 %v70
    %980 = vmatpush.msra.mxu0 %v69
    %981 = vmatmul.f32.gmra.mxu0 %v963
    %v982 = vpop.f32.mrf.mxu0
    %v983 = vadd.f32 %v201, %v982
    %984 = vdwg.mxu0
    %v985 = vtanh.pop %v983
    %v986 = vmul.f32 %v985, %v823
    %v987 = vmul.f32 %v985, %v827
    %989 = vrot.lane.b32.xlu0 %v987, 96
    %v990 = vpop.permute.xlu0 %989
    %v992 = vadd.f32 %v986, %v990
    %v993 = vmul.f32 %v985, %v831
    %995 = vrot.lane.b32.xlu0 %v993, 64
    %v996 = vpop.permute.xlu0 %995
    %v998 = vadd.f32 %v992, %v996
    %v999 = vmul.f32 %v985, %v835
    %1001 = vrot.lane.b32.xlu0 %v999, 32
    %v1002 = vpop.permute.xlu0 %1001
    %v1004 = vadd.f32 %v998, %v1002
    %v1005 = vsub.f32 %v1004, %v936
    %v1006 = vadd.f32 %v804, %v1005
    %v1008 = vsel %vm175, %v1006, 0
    %1010 = vmatpush.msra.mxu0 0.0
    %1011 = vmatpush.msra.mxu0 0.0
    %1012 = vmatpush.msra.mxu0 0.0
    %1013 = vmatpush.msra.mxu0 0.0
    %1014 = vmatpush.msra.mxu0 0.0
    %1015 = vmatpush.msra.mxu0 0.0
    %1016 = vmatpush.msra.mxu0 0.0
    %1017 = vmatpush.msra.mxu0 0.0
    %1018 = vmatpush.msra.mxu0 0.0
    %1019 = vmatpush.msra.mxu0 0.0
    %1020 = vmatpush.msra.mxu0 0.0
    %1021 = vmatpush.msra.mxu0 0.0
    %1022 = vmatpush.msra.mxu0 %v67
    %1023 = vmatpush.msra.mxu0 %v66
    %1024 = vmatpush.msra.mxu0 %v65
    %1025 = vmatpush.msra.mxu0 %v64
    %1026 = vmatmul.f32.gmra.mxu0 %v1008
    %v1027 = vpop.f32.mrf.mxu0
    %v1028 = vadd.f32 %v173, %v1027
    %1029 = vdwg.mxu0
    %v1030 = vmax.f32 %v1028, 0.0
    %v1032 = vsel %vm175, %v1030, 0
    %1034 = vmatpush.msra.mxu0 0.0
    %1035 = vmatpush.msra.mxu0 0.0
    %1036 = vmatpush.msra.mxu0 0.0
    %1037 = vmatpush.msra.mxu0 0.0
    %1038 = vmatpush.msra.mxu0 0.0
    %1039 = vmatpush.msra.mxu0 0.0
    %1040 = vmatpush.msra.mxu0 0.0
    %1041 = vmatpush.msra.mxu0 0.0
    %1042 = vmatpush.msra.mxu0 0.0
    %1043 = vmatpush.msra.mxu0 0.0
    %1044 = vmatpush.msra.mxu0 0.0
    %1045 = vmatpush.msra.mxu0 0.0
    %1046 = vmatpush.msra.mxu0 %v72
    %1047 = vmatpush.msra.mxu0 %v71
    %1048 = vmatpush.msra.mxu0 %v70
    %1049 = vmatpush.msra.mxu0 %v69
    %1050 = vmatmul.f32.gmra.mxu0 %v1032
    %v1051 = vpop.f32.mrf.mxu0
    %v1052 = vadd.f32 %v201, %v1051
    %1053 = vdwg.mxu0
    %v1054 = vtanh.pop %v1052
    %v1055 = vmul.f32 %v1054, %v839
    %v1056 = vmul.f32 %v1054, %v843
    %1058 = vrot.lane.b32.xlu0 %v1056, 96
    %v1059 = vpop.permute.xlu0 %1058
    %v1061 = vadd.f32 %v1055, %v1059
    %v1062 = vmul.f32 %v1054, %v847
    %1064 = vrot.lane.b32.xlu0 %v1062, 64
    %v1065 = vpop.permute.xlu0 %1064
    %v1067 = vadd.f32 %v1061, %v1065
    %v1068 = vmul.f32 %v1054, %v851
    %1070 = vrot.lane.b32.xlu0 %v1068, 32
    %v1071 = vpop.permute.xlu0 %1070
    %v1073 = vadd.f32 %v1067, %v1071
    %v1074 = vsub.f32 %v935, %v1004
    %v1075 = vadd.f32 %v1074, %v1073
    %v1076 = vadd.f32 %v804, %v1075
    %v1078 = vsel %vm175, %v1076, 0
    %1080 = vmatpush.msra.mxu0 0.0
    %1081 = vmatpush.msra.mxu0 0.0
    %1082 = vmatpush.msra.mxu0 0.0
    %1083 = vmatpush.msra.mxu0 0.0
    %1084 = vmatpush.msra.mxu0 0.0
    %1085 = vmatpush.msra.mxu0 0.0
    %1086 = vmatpush.msra.mxu0 0.0
    %1087 = vmatpush.msra.mxu0 0.0
    %1088 = vmatpush.msra.mxu0 0.0
    %1089 = vmatpush.msra.mxu0 0.0
    %1090 = vmatpush.msra.mxu0 0.0
    %1091 = vmatpush.msra.mxu0 0.0
    %1092 = vmatpush.msra.mxu0 %v67
    %1093 = vmatpush.msra.mxu0 %v66
    %1094 = vmatpush.msra.mxu0 %v65
    %1095 = vmatpush.msra.mxu0 %v64
    %1096 = vmatmul.f32.gmra.mxu0 %v1078
    %v1097 = vpop.f32.mrf.mxu0
    %v1098 = vadd.f32 %v173, %v1097
    %1099 = vdwg.mxu0
    %v1100 = vmax.f32 %v1098, 0.0
    %v1102 = vsel %vm175, %v1100, 0
    %1104 = vmatpush.msra.mxu0 0.0
    %1105 = vmatpush.msra.mxu0 0.0
    %1106 = vmatpush.msra.mxu0 0.0
    %1107 = vmatpush.msra.mxu0 0.0
    %1108 = vmatpush.msra.mxu0 0.0
    %1109 = vmatpush.msra.mxu0 0.0
    %1110 = vmatpush.msra.mxu0 0.0
    %1111 = vmatpush.msra.mxu0 0.0
    %1112 = vmatpush.msra.mxu0 0.0
    %1113 = vmatpush.msra.mxu0 0.0
    %1114 = vmatpush.msra.mxu0 0.0
    %1115 = vmatpush.msra.mxu0 0.0
    %1116 = vmatpush.msra.mxu0 %v72
    %1117 = vmatpush.msra.mxu0 %v71
    %1118 = vmatpush.msra.mxu0 %v70
    %1119 = vmatpush.msra.mxu0 %v69
    %1120 = vmatmul.f32.gmra.mxu0 %v1102
    %v1121 = vpop.f32.mrf.mxu0
    %v1122 = vadd.f32 %v201, %v1121
    %1123 = vdwg.mxu0
    %v1124 = vtanh.pop %v1122
    %v1125 = vmul.f32 %v1124, %v855
    %v1126 = vmul.f32 %v1124, %v859
    %1128 = vrot.lane.b32.xlu0 %v1126, 96
    %v1129 = vpop.permute.xlu0 %1128
    %v1131 = vadd.f32 %v1125, %v1129
    %v1132 = vmul.f32 %v1124, %v863
    %1134 = vrot.lane.b32.xlu0 %v1132, 64
    %v1135 = vpop.permute.xlu0 %1134
    %v1137 = vadd.f32 %v1131, %v1135
    %v1138 = vmul.f32 %v1124, %v867
    %1140 = vrot.lane.b32.xlu0 %v1138, 32
    %v1141 = vpop.permute.xlu0 %1140
    %v1143 = vadd.f32 %v1137, %v1141
    %v1144 = vadd.f32 %v1004, %v1073
    %v1145 = vmul.f32 %v1144, 3.0
    %v1146 = vadd.f32 %v935, %v1145
    %v1147 = vadd.f32 %v1146, %v1143
    %v1148 = vmul.f32 %v1147, 0.125
    %v1149 = vadd.f32 %v804, %v1148
    %1150 = vset.pattern.permute.xlu0 48
    %1151 = vperm.xlu0 %1150, %v106
    %v1152 = vpop.permute.xlu0 %1151
    %1154 = vset.pattern.permute.xlu0 49
    %1155 = vperm.xlu0 %1154, %v106
    %v1156 = vpop.permute.xlu0 %1155
    %1158 = vset.pattern.permute.xlu0 50
    %1159 = vperm.xlu0 %1158, %v106
    %v1160 = vpop.permute.xlu0 %1159
    %1162 = vset.pattern.permute.xlu0 51
    %1163 = vperm.xlu0 %1162, %v106
    %v1164 = vpop.permute.xlu0 %1163
    %1166 = vset.pattern.permute.xlu0 52
    %1167 = vperm.xlu0 %1166, %v106
    %v1168 = vpop.permute.xlu0 %1167
    %1170 = vset.pattern.permute.xlu0 53
    %1171 = vperm.xlu0 %1170, %v106
    %v1172 = vpop.permute.xlu0 %1171
    %1174 = vset.pattern.permute.xlu0 54
    %1175 = vperm.xlu0 %1174, %v106
    %v1176 = vpop.permute.xlu0 %1175
    %1178 = vset.pattern.permute.xlu0 55
    %1179 = vperm.xlu0 %1178, %v106
    %v1180 = vpop.permute.xlu0 %1179
    %1182 = vset.pattern.permute.xlu0 56
    %1183 = vperm.xlu0 %1182, %v106
    %v1184 = vpop.permute.xlu0 %1183
    %1186 = vset.pattern.permute.xlu0 57
    %1187 = vperm.xlu0 %1186, %v106
    %v1188 = vpop.permute.xlu0 %1187
    %1190 = vset.pattern.permute.xlu0 58
    %1191 = vperm.xlu0 %1190, %v106
    %v1192 = vpop.permute.xlu0 %1191
    %1194 = vset.pattern.permute.xlu0 59
    %1195 = vperm.xlu0 %1194, %v106
    %v1196 = vpop.permute.xlu0 %1195
    %1198 = vset.pattern.permute.xlu0 60
    %1199 = vperm.xlu0 %1198, %v106
    %v1200 = vpop.permute.xlu0 %1199
    %1202 = vset.pattern.permute.xlu0 61
    %1203 = vperm.xlu0 %1202, %v106
    %v1204 = vpop.permute.xlu0 %1203
    %1206 = vset.pattern.permute.xlu0 62
    %1207 = vperm.xlu0 %1206, %v106
    %v1208 = vpop.permute.xlu0 %1207
    %1210 = vset.pattern.permute.xlu0 63
    %1211 = vperm.xlu0 %1210, %v106
    %v1212 = vpop.permute.xlu0 %1211
    %v1215 = vsel %vm175, %v1149, 0
    %1217 = vmatpush.msra.mxu0 0.0
    %1218 = vmatpush.msra.mxu0 0.0
    %1219 = vmatpush.msra.mxu0 0.0
    %1220 = vmatpush.msra.mxu0 0.0
    %1221 = vmatpush.msra.mxu0 0.0
    %1222 = vmatpush.msra.mxu0 0.0
    %1223 = vmatpush.msra.mxu0 0.0
    %1224 = vmatpush.msra.mxu0 0.0
    %1225 = vmatpush.msra.mxu0 0.0
    %1226 = vmatpush.msra.mxu0 0.0
    %1227 = vmatpush.msra.mxu0 0.0
    %1228 = vmatpush.msra.mxu0 0.0
    %1229 = vmatpush.msra.mxu0 %v67
    %1230 = vmatpush.msra.mxu0 %v66
    %1231 = vmatpush.msra.mxu0 %v65
    %1232 = vmatpush.msra.mxu0 %v64
    %1233 = vmatmul.f32.gmra.mxu0 %v1215
    %v1234 = vpop.f32.mrf.mxu0
    %v1235 = vadd.f32 %v173, %v1234
    %1236 = vdwg.mxu0
    %v1237 = vmax.f32 %v1235, 0.0
    %v1239 = vsel %vm175, %v1237, 0
    %1241 = vmatpush.msra.mxu0 0.0
    %1242 = vmatpush.msra.mxu0 0.0
    %1243 = vmatpush.msra.mxu0 0.0
    %1244 = vmatpush.msra.mxu0 0.0
    %1245 = vmatpush.msra.mxu0 0.0
    %1246 = vmatpush.msra.mxu0 0.0
    %1247 = vmatpush.msra.mxu0 0.0
    %1248 = vmatpush.msra.mxu0 0.0
    %1249 = vmatpush.msra.mxu0 0.0
    %1250 = vmatpush.msra.mxu0 0.0
    %1251 = vmatpush.msra.mxu0 0.0
    %1252 = vmatpush.msra.mxu0 0.0
    %1253 = vmatpush.msra.mxu0 %v72
    %1254 = vmatpush.msra.mxu0 %v71
    %1255 = vmatpush.msra.mxu0 %v70
    %1256 = vmatpush.msra.mxu0 %v69
    %1257 = vmatmul.f32.gmra.mxu0 %v1239
    %v1258 = vpop.f32.mrf.mxu0
    %v1259 = vadd.f32 %v201, %v1258
    %1260 = vdwg.mxu0
    %v1261 = vtanh.pop %v1259
    %v1262 = vmul.f32 %v1261, %v1152
    %v1263 = vmul.f32 %v1261, %v1156
    %1265 = vrot.lane.b32.xlu0 %v1263, 96
    %v1266 = vpop.permute.xlu0 %1265
    %v1268 = vadd.f32 %v1262, %v1266
    %v1269 = vmul.f32 %v1261, %v1160
    %1271 = vrot.lane.b32.xlu0 %v1269, 64
    %v1272 = vpop.permute.xlu0 %1271
    %v1274 = vadd.f32 %v1268, %v1272
    %v1275 = vmul.f32 %v1261, %v1164
    %1277 = vrot.lane.b32.xlu0 %v1275, 32
    %v1278 = vpop.permute.xlu0 %1277
    %v1280 = vadd.f32 %v1274, %v1278
    %v1281 = vmul.f32 %v1280, 0.33333334
    %v1282 = vadd.f32 %v1149, %v1281
    %v1284 = vsel %vm175, %v1282, 0
    %1286 = vmatpush.msra.mxu0 0.0
    %1287 = vmatpush.msra.mxu0 0.0
    %1288 = vmatpush.msra.mxu0 0.0
    %1289 = vmatpush.msra.mxu0 0.0
    %1290 = vmatpush.msra.mxu0 0.0
    %1291 = vmatpush.msra.mxu0 0.0
    %1292 = vmatpush.msra.mxu0 0.0
    %1293 = vmatpush.msra.mxu0 0.0
    %1294 = vmatpush.msra.mxu0 0.0
    %1295 = vmatpush.msra.mxu0 0.0
    %1296 = vmatpush.msra.mxu0 0.0
    %1297 = vmatpush.msra.mxu0 0.0
    %1298 = vmatpush.msra.mxu0 %v67
    %1299 = vmatpush.msra.mxu0 %v66
    %1300 = vmatpush.msra.mxu0 %v65
    %1301 = vmatpush.msra.mxu0 %v64
    %1302 = vmatmul.f32.gmra.mxu0 %v1284
    %v1303 = vpop.f32.mrf.mxu0
    %v1304 = vadd.f32 %v173, %v1303
    %1305 = vdwg.mxu0
    %v1306 = vmax.f32 %v1304, 0.0
    %v1308 = vsel %vm175, %v1306, 0
    %1310 = vmatpush.msra.mxu0 0.0
    %1311 = vmatpush.msra.mxu0 0.0
    %1312 = vmatpush.msra.mxu0 0.0
    %1313 = vmatpush.msra.mxu0 0.0
    %1314 = vmatpush.msra.mxu0 0.0
    %1315 = vmatpush.msra.mxu0 0.0
    %1316 = vmatpush.msra.mxu0 0.0
    %1317 = vmatpush.msra.mxu0 0.0
    %1318 = vmatpush.msra.mxu0 0.0
    %1319 = vmatpush.msra.mxu0 0.0
    %1320 = vmatpush.msra.mxu0 0.0
    %1321 = vmatpush.msra.mxu0 0.0
    %1322 = vmatpush.msra.mxu0 %v72
    %1323 = vmatpush.msra.mxu0 %v71
    %1324 = vmatpush.msra.mxu0 %v70
    %1325 = vmatpush.msra.mxu0 %v69
    %1326 = vmatmul.f32.gmra.mxu0 %v1308
    %v1327 = vpop.f32.mrf.mxu0
    %v1328 = vadd.f32 %v201, %v1327
    %1329 = vdwg.mxu0
    %v1330 = vtanh.pop %v1328
    %v1331 = vmul.f32 %v1330, %v1168
    %v1332 = vmul.f32 %v1330, %v1172
    %1334 = vrot.lane.b32.xlu0 %v1332, 96
    %v1335 = vpop.permute.xlu0 %1334
    %v1337 = vadd.f32 %v1331, %v1335
    %v1338 = vmul.f32 %v1330, %v1176
    %1340 = vrot.lane.b32.xlu0 %v1338, 64
    %v1341 = vpop.permute.xlu0 %1340
    %v1343 = vadd.f32 %v1337, %v1341
    %v1344 = vmul.f32 %v1330, %v1180
    %1346 = vrot.lane.b32.xlu0 %v1344, 32
    %v1347 = vpop.permute.xlu0 %1346
    %v1349 = vadd.f32 %v1343, %v1347
    %v1350 = vsub.f32 %v1349, %v1281
    %v1351 = vadd.f32 %v1149, %v1350
    %v1353 = vsel %vm175, %v1351, 0
    %1355 = vmatpush.msra.mxu0 0.0
    %1356 = vmatpush.msra.mxu0 0.0
    %1357 = vmatpush.msra.mxu0 0.0
    %1358 = vmatpush.msra.mxu0 0.0
    %1359 = vmatpush.msra.mxu0 0.0
    %1360 = vmatpush.msra.mxu0 0.0
    %1361 = vmatpush.msra.mxu0 0.0
    %1362 = vmatpush.msra.mxu0 0.0
    %1363 = vmatpush.msra.mxu0 0.0
    %1364 = vmatpush.msra.mxu0 0.0
    %1365 = vmatpush.msra.mxu0 0.0
    %1366 = vmatpush.msra.mxu0 0.0
    %1367 = vmatpush.msra.mxu0 %v67
    %1368 = vmatpush.msra.mxu0 %v66
    %1369 = vmatpush.msra.mxu0 %v65
    %1370 = vmatpush.msra.mxu0 %v64
    %1371 = vmatmul.f32.gmra.mxu0 %v1353
    %v1372 = vpop.f32.mrf.mxu0
    %v1373 = vadd.f32 %v173, %v1372
    %1374 = vdwg.mxu0
    %v1375 = vmax.f32 %v1373, 0.0
    %v1377 = vsel %vm175, %v1375, 0
    %1379 = vmatpush.msra.mxu0 0.0
    %1380 = vmatpush.msra.mxu0 0.0
    %1381 = vmatpush.msra.mxu0 0.0
    %1382 = vmatpush.msra.mxu0 0.0
    %1383 = vmatpush.msra.mxu0 0.0
    %1384 = vmatpush.msra.mxu0 0.0
    %1385 = vmatpush.msra.mxu0 0.0
    %1386 = vmatpush.msra.mxu0 0.0
    %1387 = vmatpush.msra.mxu0 0.0
    %1388 = vmatpush.msra.mxu0 0.0
    %1389 = vmatpush.msra.mxu0 0.0
    %1390 = vmatpush.msra.mxu0 0.0
    %1391 = vmatpush.msra.mxu0 %v72
    %1392 = vmatpush.msra.mxu0 %v71
    %1393 = vmatpush.msra.mxu0 %v70
    %1394 = vmatpush.msra.mxu0 %v69
    %1395 = vmatmul.f32.gmra.mxu0 %v1377
    %v1396 = vpop.f32.mrf.mxu0
    %v1397 = vadd.f32 %v201, %v1396
    %1398 = vdwg.mxu0
    %v1399 = vtanh.pop %v1397
    %v1400 = vmul.f32 %v1399, %v1184
    %v1401 = vmul.f32 %v1399, %v1188
    %1403 = vrot.lane.b32.xlu0 %v1401, 96
    %v1404 = vpop.permute.xlu0 %1403
    %v1406 = vadd.f32 %v1400, %v1404
    %v1407 = vmul.f32 %v1399, %v1192
    %1409 = vrot.lane.b32.xlu0 %v1407, 64
    %v1410 = vpop.permute.xlu0 %1409
    %v1412 = vadd.f32 %v1406, %v1410
    %v1413 = vmul.f32 %v1399, %v1196
    %1415 = vrot.lane.b32.xlu0 %v1413, 32
    %v1416 = vpop.permute.xlu0 %1415
    %v1418 = vadd.f32 %v1412, %v1416
    %v1419 = vsub.f32 %v1280, %v1349
    %v1420 = vadd.f32 %v1419, %v1418
    %v1421 = vadd.f32 %v1149, %v1420
    %v1423 = vsel %vm175, %v1421, 0
    %1425 = vmatpush.msra.mxu0 0.0
    %1426 = vmatpush.msra.mxu0 0.0
    %1427 = vmatpush.msra.mxu0 0.0
    %1428 = vmatpush.msra.mxu0 0.0
    %1429 = vmatpush.msra.mxu0 0.0
    %1430 = vmatpush.msra.mxu0 0.0
    %1431 = vmatpush.msra.mxu0 0.0
    %1432 = vmatpush.msra.mxu0 0.0
    %1433 = vmatpush.msra.mxu0 0.0
    %1434 = vmatpush.msra.mxu0 0.0
    %1435 = vmatpush.msra.mxu0 0.0
    %1436 = vmatpush.msra.mxu0 0.0
    %1437 = vmatpush.msra.mxu0 %v67
    %1438 = vmatpush.msra.mxu0 %v66
    %1439 = vmatpush.msra.mxu0 %v65
    %1440 = vmatpush.msra.mxu0 %v64
    %1441 = vmatmul.f32.gmra.mxu0 %v1423
    %v1442 = vpop.f32.mrf.mxu0
    %v1443 = vadd.f32 %v173, %v1442
    %1444 = vdwg.mxu0
    %v1445 = vmax.f32 %v1443, 0.0
    %v1447 = vsel %vm175, %v1445, 0
    %1449 = vmatpush.msra.mxu0 0.0
    %1450 = vmatpush.msra.mxu0 0.0
    %1451 = vmatpush.msra.mxu0 0.0
    %1452 = vmatpush.msra.mxu0 0.0
    %1453 = vmatpush.msra.mxu0 0.0
    %1454 = vmatpush.msra.mxu0 0.0
    %1455 = vmatpush.msra.mxu0 0.0
    %1456 = vmatpush.msra.mxu0 0.0
    %1457 = vmatpush.msra.mxu0 0.0
    %1458 = vmatpush.msra.mxu0 0.0
    %1459 = vmatpush.msra.mxu0 0.0
    %1460 = vmatpush.msra.mxu0 0.0
    %1461 = vmatpush.msra.mxu0 %v72
    %1462 = vmatpush.msra.mxu0 %v71
    %1463 = vmatpush.msra.mxu0 %v70
    %1464 = vmatpush.msra.mxu0 %v69
    %1465 = vmatmul.f32.gmra.mxu0 %v1447
    %v1466 = vpop.f32.mrf.mxu0
    %v1467 = vadd.f32 %v201, %v1466
    %1468 = vdwg.mxu0
    %v1469 = vtanh.pop %v1467
    %v1470 = vmul.f32 %v1469, %v1200
    %v1471 = vmul.f32 %v1469, %v1204
    %1473 = vrot.lane.b32.xlu0 %v1471, 96
    %v1474 = vpop.permute.xlu0 %1473
    %v1476 = vadd.f32 %v1470, %v1474
    %v1477 = vmul.f32 %v1469, %v1208
    %1479 = vrot.lane.b32.xlu0 %v1477, 64
    %v1480 = vpop.permute.xlu0 %1479
    %v1482 = vadd.f32 %v1476, %v1480
    %v1483 = vmul.f32 %v1469, %v1212
    %1485 = vrot.lane.b32.xlu0 %v1483, 32
    %v1486 = vpop.permute.xlu0 %1485
    %v1488 = vadd.f32 %v1482, %v1486
    %v1489 = vadd.f32 %v1349, %v1418
    %v1490 = vmul.f32 %v1489, 3.0
    %v1491 = vadd.f32 %v1280, %v1490
    %v1492 = vadd.f32 %v1491, %v1488
    %v1493 = vmul.f32 %v1492, 0.125
    %v1494 = vadd.f32 %v1149, %v1493
    %1495 = vst.msk [vmem:[#allocation7] sm:$0xff] %vm175, %v1494
    %1496 = vset.pattern.permute.xlu0 64
    %1497 = vperm.xlu0 %1496, %v106
    %v1498 = vpop.permute.xlu0 %1497
    %1500 = vset.pattern.permute.xlu0 65
    %1501 = vperm.xlu0 %1500, %v106
    %v1502 = vpop.permute.xlu0 %1501
    %1504 = vset.pattern.permute.xlu0 66
    %1505 = vperm.xlu0 %1504, %v106
    %v1506 = vpop.permute.xlu0 %1505
    %1508 = vset.pattern.permute.xlu0 67
    %1509 = vperm.xlu0 %1508, %v106
    %v1510 = vpop.permute.xlu0 %1509
    %1512 = vset.pattern.permute.xlu0 68
    %1513 = vperm.xlu0 %1512, %v106
    %v1514 = vpop.permute.xlu0 %1513
    %1516 = vset.pattern.permute.xlu0 69
    %1517 = vperm.xlu0 %1516, %v106
    %v1518 = vpop.permute.xlu0 %1517
    %1520 = vset.pattern.permute.xlu0 70
    %1521 = vperm.xlu0 %1520, %v106
    %v1522 = vpop.permute.xlu0 %1521
    %1524 = vset.pattern.permute.xlu0 71
    %1525 = vperm.xlu0 %1524, %v106
    %v1526 = vpop.permute.xlu0 %1525
    %1528 = vset.pattern.permute.xlu0 72
    %1529 = vperm.xlu0 %1528, %v106
    %v1530 = vpop.permute.xlu0 %1529
    %1532 = vset.pattern.permute.xlu0 73
    %1533 = vperm.xlu0 %1532, %v106
    %v1534 = vpop.permute.xlu0 %1533
    %1536 = vset.pattern.permute.xlu0 74
    %1537 = vperm.xlu0 %1536, %v106
    %v1538 = vpop.permute.xlu0 %1537
    %1540 = vset.pattern.permute.xlu0 75
    %1541 = vperm.xlu0 %1540, %v106
    %v1542 = vpop.permute.xlu0 %1541
    %1544 = vset.pattern.permute.xlu0 76
    %1545 = vperm.xlu0 %1544, %v106
    %v1546 = vpop.permute.xlu0 %1545
    %1548 = vset.pattern.permute.xlu0 77
    %1549 = vperm.xlu0 %1548, %v106
    %v1550 = vpop.permute.xlu0 %1549
    %1552 = vset.pattern.permute.xlu0 78
    %1553 = vperm.xlu0 %1552, %v106
    %v1554 = vpop.permute.xlu0 %1553
    %1556 = vset.pattern.permute.xlu0 79
    %1557 = vperm.xlu0 %1556, %v106
    %v1558 = vpop.permute.xlu0 %1557
    %v1561 = vsel %vm175, %v1494, 0
    %1563 = vmatpush.msra.mxu0 0.0
    %1564 = vmatpush.msra.mxu0 0.0
    %1565 = vmatpush.msra.mxu0 0.0
    %1566 = vmatpush.msra.mxu0 0.0
    %1567 = vmatpush.msra.mxu0 0.0
    %1568 = vmatpush.msra.mxu0 0.0
    %1569 = vmatpush.msra.mxu0 0.0
    %1570 = vmatpush.msra.mxu0 0.0
    %1571 = vmatpush.msra.mxu0 0.0
    %1572 = vmatpush.msra.mxu0 0.0
    %1573 = vmatpush.msra.mxu0 0.0
    %1574 = vmatpush.msra.mxu0 0.0
    %1575 = vmatpush.msra.mxu0 %v67
    %1576 = vmatpush.msra.mxu0 %v66
    %1577 = vmatpush.msra.mxu0 %v65
    %1578 = vmatpush.msra.mxu0 %v64
    %1579 = vmatmul.f32.gmra.mxu0 %v1561
    %v1580 = vpop.f32.mrf.mxu0
    %v1581 = vadd.f32 %v173, %v1580
    %1582 = vdwg.mxu0
    %v1583 = vmax.f32 %v1581, 0.0
    %v1585 = vsel %vm175, %v1583, 0
    %1587 = vmatpush.msra.mxu0 0.0
    %1588 = vmatpush.msra.mxu0 0.0
    %1589 = vmatpush.msra.mxu0 0.0
    %1590 = vmatpush.msra.mxu0 0.0
    %1591 = vmatpush.msra.mxu0 0.0
    %1592 = vmatpush.msra.mxu0 0.0
    %1593 = vmatpush.msra.mxu0 0.0
    %1594 = vmatpush.msra.mxu0 0.0
    %1595 = vmatpush.msra.mxu0 0.0
    %1596 = vmatpush.msra.mxu0 0.0
    %1597 = vmatpush.msra.mxu0 0.0
    %1598 = vmatpush.msra.mxu0 0.0
    %1599 = vmatpush.msra.mxu0 %v72
    %1600 = vmatpush.msra.mxu0 %v71
    %1601 = vmatpush.msra.mxu0 %v70
    %1602 = vmatpush.msra.mxu0 %v69
    %1603 = vmatmul.f32.gmra.mxu0 %v1585
    %v1604 = vpop.f32.mrf.mxu0
    %v1605 = vadd.f32 %v201, %v1604
    %1606 = vdwg.mxu0
    %v1607 = vtanh.pop %v1605
    %v1608 = vmul.f32 %v1607, %v1498
    %v1609 = vmul.f32 %v1607, %v1502
    %1611 = vrot.lane.b32.xlu0 %v1609, 96
    %v1612 = vpop.permute.xlu0 %1611
    %v1614 = vadd.f32 %v1608, %v1612
    %v1615 = vmul.f32 %v1607, %v1506
    %1617 = vrot.lane.b32.xlu0 %v1615, 64
    %v1618 = vpop.permute.xlu0 %1617
    %v1620 = vadd.f32 %v1614, %v1618
    %v1621 = vmul.f32 %v1607, %v1510
    %1623 = vrot.lane.b32.xlu0 %v1621, 32
    %v1624 = vpop.permute.xlu0 %1623
    %v1626 = vadd.f32 %v1620, %v1624
    %v1627 = vmul.f32 %v1626, 0.33333334
    %v1628 = vadd.f32 %v1494, %v1627
    %v1630 = vsel %vm175, %v1628, 0
    %1632 = vmatpush.msra.mxu0 0.0
    %1633 = vmatpush.msra.mxu0 0.0
    %1634 = vmatpush.msra.mxu0 0.0
    %1635 = vmatpush.msra.mxu0 0.0
    %1636 = vmatpush.msra.mxu0 0.0
    %1637 = vmatpush.msra.mxu0 0.0
    %1638 = vmatpush.msra.mxu0 0.0
    %1639 = vmatpush.msra.mxu0 0.0
    %1640 = vmatpush.msra.mxu0 0.0
    %1641 = vmatpush.msra.mxu0 0.0
    %1642 = vmatpush.msra.mxu0 0.0
    %1643 = vmatpush.msra.mxu0 0.0
    %1644 = vmatpush.msra.mxu0 %v67
    %1645 = vmatpush.msra.mxu0 %v66
    %1646 = vmatpush.msra.mxu0 %v65
    %1647 = vmatpush.msra.mxu0 %v64
    %1648 = vmatmul.f32.gmra.mxu0 %v1630
    %v1649 = vpop.f32.mrf.mxu0
    %v1650 = vadd.f32 %v173, %v1649
    %1651 = vdwg.mxu0
    %v1652 = vmax.f32 %v1650, 0.0
    %v1654 = vsel %vm175, %v1652, 0
    %1656 = vmatpush.msra.mxu0 0.0
    %1657 = vmatpush.msra.mxu0 0.0
    %1658 = vmatpush.msra.mxu0 0.0
    %1659 = vmatpush.msra.mxu0 0.0
    %1660 = vmatpush.msra.mxu0 0.0
    %1661 = vmatpush.msra.mxu0 0.0
    %1662 = vmatpush.msra.mxu0 0.0
    %1663 = vmatpush.msra.mxu0 0.0
    %1664 = vmatpush.msra.mxu0 0.0
    %1665 = vmatpush.msra.mxu0 0.0
    %1666 = vmatpush.msra.mxu0 0.0
    %1667 = vmatpush.msra.mxu0 0.0
    %1668 = vmatpush.msra.mxu0 %v72
    %1669 = vmatpush.msra.mxu0 %v71
    %1670 = vmatpush.msra.mxu0 %v70
    %1671 = vmatpush.msra.mxu0 %v69
    %1672 = vmatmul.f32.gmra.mxu0 %v1654
    %v1673 = vpop.f32.mrf.mxu0
    %v1674 = vadd.f32 %v201, %v1673
    %1675 = vdwg.mxu0
    %v1676 = vtanh.pop %v1674
    %v1677 = vmul.f32 %v1676, %v1514
    %v1678 = vmul.f32 %v1676, %v1518
    %1680 = vrot.lane.b32.xlu0 %v1678, 96
    %v1681 = vpop.permute.xlu0 %1680
    %v1683 = vadd.f32 %v1677, %v1681
    %v1684 = vmul.f32 %v1676, %v1522
    %1686 = vrot.lane.b32.xlu0 %v1684, 64
    %v1687 = vpop.permute.xlu0 %1686
    %v1689 = vadd.f32 %v1683, %v1687
    %v1690 = vmul.f32 %v1676, %v1526
    %1692 = vrot.lane.b32.xlu0 %v1690, 32
    %v1693 = vpop.permute.xlu0 %1692
    %v1695 = vadd.f32 %v1689, %v1693
    %v1696 = vsub.f32 %v1695, %v1627
    %v1697 = vadd.f32 %v1494, %v1696
    %v1699 = vsel %vm175, %v1697, 0
    %1701 = vmatpush.msra.mxu0 0.0
    %1702 = vmatpush.msra.mxu0 0.0
    %1703 = vmatpush.msra.mxu0 0.0
    %1704 = vmatpush.msra.mxu0 0.0
    %1705 = vmatpush.msra.mxu0 0.0
    %1706 = vmatpush.msra.mxu0 0.0
    %1707 = vmatpush.msra.mxu0 0.0
    %1708 = vmatpush.msra.mxu0 0.0
    %1709 = vmatpush.msra.mxu0 0.0
    %1710 = vmatpush.msra.mxu0 0.0
    %1711 = vmatpush.msra.mxu0 0.0
    %1712 = vmatpush.msra.mxu0 0.0
    %1713 = vmatpush.msra.mxu0 %v67
    %1714 = vmatpush.msra.mxu0 %v66
    %1715 = vmatpush.msra.mxu0 %v65
    %1716 = vmatpush.msra.mxu0 %v64
    %1717 = vmatmul.f32.gmra.mxu0 %v1699
    %v1718 = vpop.f32.mrf.mxu0
    %v1719 = vadd.f32 %v173, %v1718
    %1720 = vdwg.mxu0
    %v1721 = vmax.f32 %v1719, 0.0
    %v1723 = vsel %vm175, %v1721, 0
    %1725 = vmatpush.msra.mxu0 0.0
    %1726 = vmatpush.msra.mxu0 0.0
    %1727 = vmatpush.msra.mxu0 0.0
    %1728 = vmatpush.msra.mxu0 0.0
    %1729 = vmatpush.msra.mxu0 0.0
    %1730 = vmatpush.msra.mxu0 0.0
    %1731 = vmatpush.msra.mxu0 0.0
    %1732 = vmatpush.msra.mxu0 0.0
    %1733 = vmatpush.msra.mxu0 0.0
    %1734 = vmatpush.msra.mxu0 0.0
    %1735 = vmatpush.msra.mxu0 0.0
    %1736 = vmatpush.msra.mxu0 0.0
    %1737 = vmatpush.msra.mxu0 %v72
    %1738 = vmatpush.msra.mxu0 %v71
    %1739 = vmatpush.msra.mxu0 %v70
    %1740 = vmatpush.msra.mxu0 %v69
    %1741 = vmatmul.f32.gmra.mxu0 %v1723
    %v1742 = vpop.f32.mrf.mxu0
    %v1743 = vadd.f32 %v201, %v1742
    %1744 = vdwg.mxu0
    %v1745 = vtanh.pop %v1743
    %v1746 = vmul.f32 %v1745, %v1530
    %v1747 = vmul.f32 %v1745, %v1534
    %1749 = vrot.lane.b32.xlu0 %v1747, 96
    %v1750 = vpop.permute.xlu0 %1749
    %v1752 = vadd.f32 %v1746, %v1750
    %v1753 = vmul.f32 %v1745, %v1538
    %1755 = vrot.lane.b32.xlu0 %v1753, 64
    %v1756 = vpop.permute.xlu0 %1755
    %v1758 = vadd.f32 %v1752, %v1756
    %v1759 = vmul.f32 %v1745, %v1542
    %1761 = vrot.lane.b32.xlu0 %v1759, 32
    %v1762 = vpop.permute.xlu0 %1761
    %v1764 = vadd.f32 %v1758, %v1762
    %v1765 = vsub.f32 %v1626, %v1695
    %v1766 = vadd.f32 %v1765, %v1764
    %v1767 = vadd.f32 %v1494, %v1766
    %v1769 = vsel %vm175, %v1767, 0
    %1771 = vmatpush.msra.mxu0 0.0
    %1772 = vmatpush.msra.mxu0 0.0
    %1773 = vmatpush.msra.mxu0 0.0
    %1774 = vmatpush.msra.mxu0 0.0
    %1775 = vmatpush.msra.mxu0 0.0
    %1776 = vmatpush.msra.mxu0 0.0
    %1777 = vmatpush.msra.mxu0 0.0
    %1778 = vmatpush.msra.mxu0 0.0
    %1779 = vmatpush.msra.mxu0 0.0
    %1780 = vmatpush.msra.mxu0 0.0
    %1781 = vmatpush.msra.mxu0 0.0
    %1782 = vmatpush.msra.mxu0 0.0
    %1783 = vmatpush.msra.mxu0 %v67
    %1784 = vmatpush.msra.mxu0 %v66
    %1785 = vmatpush.msra.mxu0 %v65
    %1786 = vmatpush.msra.mxu0 %v64
    %1787 = vmatmul.f32.gmra.mxu0 %v1769
    %v1788 = vpop.f32.mrf.mxu0
    %v1789 = vadd.f32 %v173, %v1788
    %1790 = vdwg.mxu0
    %v1791 = vmax.f32 %v1789, 0.0
    %v1793 = vsel %vm175, %v1791, 0
    %1795 = vmatpush.msra.mxu0 0.0
    %1796 = vmatpush.msra.mxu0 0.0
    %1797 = vmatpush.msra.mxu0 0.0
    %1798 = vmatpush.msra.mxu0 0.0
    %1799 = vmatpush.msra.mxu0 0.0
    %1800 = vmatpush.msra.mxu0 0.0
    %1801 = vmatpush.msra.mxu0 0.0
    %1802 = vmatpush.msra.mxu0 0.0
    %1803 = vmatpush.msra.mxu0 0.0
    %1804 = vmatpush.msra.mxu0 0.0
    %1805 = vmatpush.msra.mxu0 0.0
    %1806 = vmatpush.msra.mxu0 0.0
    %1807 = vmatpush.msra.mxu0 %v72
    %1808 = vmatpush.msra.mxu0 %v71
    %1809 = vmatpush.msra.mxu0 %v70
    %1810 = vmatpush.msra.mxu0 %v69
    %1811 = vmatmul.f32.gmra.mxu0 %v1793
    %v1812 = vpop.f32.mrf.mxu0
    %v1813 = vadd.f32 %v201, %v1812
    %1814 = vdwg.mxu0
    %v1815 = vtanh.pop %v1813
    %v1816 = vmul.f32 %v1815, %v1546
    %v1817 = vmul.f32 %v1815, %v1550
    %1819 = vrot.lane.b32.xlu0 %v1817, 96
    %v1820 = vpop.permute.xlu0 %1819
    %v1822 = vadd.f32 %v1816, %v1820
    %v1823 = vmul.f32 %v1815, %v1554
    %1825 = vrot.lane.b32.xlu0 %v1823, 64
    %v1826 = vpop.permute.xlu0 %1825
    %v1828 = vadd.f32 %v1822, %v1826
    %v1829 = vmul.f32 %v1815, %v1558
    %1831 = vrot.lane.b32.xlu0 %v1829, 32
    %v1832 = vpop.permute.xlu0 %1831
    %v1834 = vadd.f32 %v1828, %v1832
    %v1835 = vadd.f32 %v1695, %v1764
    %v1836 = vmul.f32 %v1835, 3.0
    %v1837 = vadd.f32 %v1626, %v1836
    %v1838 = vadd.f32 %v1837, %v1834
    %v1839 = vmul.f32 %v1838, 0.125
    %v1840 = vadd.f32 %v1494, %v1839
    %s1841 = scalar_lea.vmem [#allocation7], 8
    %1842 = vst.msk [vmem:[%s1841] sm:$0xff] %vm175, %v1840
    %1843 = vset.pattern.permute.xlu0 80
    %1844 = vperm.xlu0 %1843, %v106
    %v1845 = vpop.permute.xlu0 %1844
    %1847 = vset.pattern.permute.xlu0 81
    %1848 = vperm.xlu0 %1847, %v106
    %v1849 = vpop.permute.xlu0 %1848
    %1851 = vset.pattern.permute.xlu0 82
    %1852 = vperm.xlu0 %1851, %v106
    %v1853 = vpop.permute.xlu0 %1852
    %1855 = vset.pattern.permute.xlu0 83
    %1856 = vperm.xlu0 %1855, %v106
    %v1857 = vpop.permute.xlu0 %1856
    %1859 = vset.pattern.permute.xlu0 84
    %1860 = vperm.xlu0 %1859, %v106
    %v1861 = vpop.permute.xlu0 %1860
    %1863 = vset.pattern.permute.xlu0 85
    %1864 = vperm.xlu0 %1863, %v106
    %v1865 = vpop.permute.xlu0 %1864
    %1867 = vset.pattern.permute.xlu0 86
    %1868 = vperm.xlu0 %1867, %v106
    %v1869 = vpop.permute.xlu0 %1868
    %1871 = vset.pattern.permute.xlu0 87
    %1872 = vperm.xlu0 %1871, %v106
    %v1873 = vpop.permute.xlu0 %1872
    %1875 = vset.pattern.permute.xlu0 88
    %1876 = vperm.xlu0 %1875, %v106
    %v1877 = vpop.permute.xlu0 %1876
    %1879 = vset.pattern.permute.xlu0 89
    %1880 = vperm.xlu0 %1879, %v106
    %v1881 = vpop.permute.xlu0 %1880
    %1883 = vset.pattern.permute.xlu0 90
    %1884 = vperm.xlu0 %1883, %v106
    %v1885 = vpop.permute.xlu0 %1884
    %1887 = vset.pattern.permute.xlu0 91
    %1888 = vperm.xlu0 %1887, %v106
    %v1889 = vpop.permute.xlu0 %1888
    %1891 = vset.pattern.permute.xlu0 92
    %1892 = vperm.xlu0 %1891, %v106
    %v1893 = vpop.permute.xlu0 %1892
    %1895 = vset.pattern.permute.xlu0 93
    %1896 = vperm.xlu0 %1895, %v106
    %v1897 = vpop.permute.xlu0 %1896
    %1899 = vset.pattern.permute.xlu0 94
    %1900 = vperm.xlu0 %1899, %v106
    %v1901 = vpop.permute.xlu0 %1900
    %1903 = vset.pattern.permute.xlu0 95
    %1904 = vperm.xlu0 %1903, %v106
    %v1905 = vpop.permute.xlu0 %1904
    %v1908 = vsel %vm175, %v1840, 0
    %1910 = vmatpush.msra.mxu0 0.0
    %1911 = vmatpush.msra.mxu0 0.0
    %1912 = vmatpush.msra.mxu0 0.0
    %1913 = vmatpush.msra.mxu0 0.0
    %1914 = vmatpush.msra.mxu0 0.0
    %1915 = vmatpush.msra.mxu0 0.0
    %1916 = vmatpush.msra.mxu0 0.0
    %1917 = vmatpush.msra.mxu0 0.0
    %1918 = vmatpush.msra.mxu0 0.0
    %1919 = vmatpush.msra.mxu0 0.0
    %1920 = vmatpush.msra.mxu0 0.0
    %1921 = vmatpush.msra.mxu0 0.0
    %1922 = vmatpush.msra.mxu0 %v67
    %1923 = vmatpush.msra.mxu0 %v66
    %1924 = vmatpush.msra.mxu0 %v65
    %1925 = vmatpush.msra.mxu0 %v64
    %1926 = vmatmul.f32.gmra.mxu0 %v1908
    %v1927 = vpop.f32.mrf.mxu0
    %v1928 = vadd.f32 %v173, %v1927
    %1929 = vdwg.mxu0
    %v1930 = vmax.f32 %v1928, 0.0
    %v1932 = vsel %vm175, %v1930, 0
    %1934 = vmatpush.msra.mxu0 0.0
    %1935 = vmatpush.msra.mxu0 0.0
    %1936 = vmatpush.msra.mxu0 0.0
    %1937 = vmatpush.msra.mxu0 0.0
    %1938 = vmatpush.msra.mxu0 0.0
    %1939 = vmatpush.msra.mxu0 0.0
    %1940 = vmatpush.msra.mxu0 0.0
    %1941 = vmatpush.msra.mxu0 0.0
    %1942 = vmatpush.msra.mxu0 0.0
    %1943 = vmatpush.msra.mxu0 0.0
    %1944 = vmatpush.msra.mxu0 0.0
    %1945 = vmatpush.msra.mxu0 0.0
    %1946 = vmatpush.msra.mxu0 %v72
    %1947 = vmatpush.msra.mxu0 %v71
    %1948 = vmatpush.msra.mxu0 %v70
    %1949 = vmatpush.msra.mxu0 %v69
    %1950 = vmatmul.f32.gmra.mxu0 %v1932
    %v1951 = vpop.f32.mrf.mxu0
    %v1952 = vadd.f32 %v201, %v1951
    %1953 = vdwg.mxu0
    %v1954 = vtanh.pop %v1952
    %v1955 = vmul.f32 %v1954, %v1845
    %v1956 = vmul.f32 %v1954, %v1849
    %1958 = vrot.lane.b32.xlu0 %v1956, 96
    %v1959 = vpop.permute.xlu0 %1958
    %v1961 = vadd.f32 %v1955, %v1959
    %v1962 = vmul.f32 %v1954, %v1853
    %1964 = vrot.lane.b32.xlu0 %v1962, 64
    %v1965 = vpop.permute.xlu0 %1964
    %v1967 = vadd.f32 %v1961, %v1965
    %v1968 = vmul.f32 %v1954, %v1857
    %1970 = vrot.lane.b32.xlu0 %v1968, 32
    %v1971 = vpop.permute.xlu0 %1970
    %v1973 = vadd.f32 %v1967, %v1971
    %v1974 = vmul.f32 %v1973, 0.33333334
    %v1975 = vadd.f32 %v1840, %v1974
    %v1977 = vsel %vm175, %v1975, 0
    %1979 = vmatpush.msra.mxu0 0.0
    %1980 = vmatpush.msra.mxu0 0.0
    %1981 = vmatpush.msra.mxu0 0.0
    %1982 = vmatpush.msra.mxu0 0.0
    %1983 = vmatpush.msra.mxu0 0.0
    %1984 = vmatpush.msra.mxu0 0.0
    %1985 = vmatpush.msra.mxu0 0.0
    %1986 = vmatpush.msra.mxu0 0.0
    %1987 = vmatpush.msra.mxu0 0.0
    %1988 = vmatpush.msra.mxu0 0.0
    %1989 = vmatpush.msra.mxu0 0.0
    %1990 = vmatpush.msra.mxu0 0.0
    %1991 = vmatpush.msra.mxu0 %v67
    %1992 = vmatpush.msra.mxu0 %v66
    %1993 = vmatpush.msra.mxu0 %v65
    %1994 = vmatpush.msra.mxu0 %v64
    %1995 = vmatmul.f32.gmra.mxu0 %v1977
    %v1996 = vpop.f32.mrf.mxu0
    %v1997 = vadd.f32 %v173, %v1996
    %1998 = vdwg.mxu0
    %v1999 = vmax.f32 %v1997, 0.0
    %v2001 = vsel %vm175, %v1999, 0
    %2003 = vmatpush.msra.mxu0 0.0
    %2004 = vmatpush.msra.mxu0 0.0
    %2005 = vmatpush.msra.mxu0 0.0
    %2006 = vmatpush.msra.mxu0 0.0
    %2007 = vmatpush.msra.mxu0 0.0
    %2008 = vmatpush.msra.mxu0 0.0
    %2009 = vmatpush.msra.mxu0 0.0
    %2010 = vmatpush.msra.mxu0 0.0
    %2011 = vmatpush.msra.mxu0 0.0
    %2012 = vmatpush.msra.mxu0 0.0
    %2013 = vmatpush.msra.mxu0 0.0
    %2014 = vmatpush.msra.mxu0 0.0
    %2015 = vmatpush.msra.mxu0 %v72
    %2016 = vmatpush.msra.mxu0 %v71
    %2017 = vmatpush.msra.mxu0 %v70
    %2018 = vmatpush.msra.mxu0 %v69
    %2019 = vmatmul.f32.gmra.mxu0 %v2001
    %v2020 = vpop.f32.mrf.mxu0
    %v2021 = vadd.f32 %v201, %v2020
    %2022 = vdwg.mxu0
    %v2023 = vtanh.pop %v2021
    %v2024 = vmul.f32 %v2023, %v1861
    %v2025 = vmul.f32 %v2023, %v1865
    %2027 = vrot.lane.b32.xlu0 %v2025, 96
    %v2028 = vpop.permute.xlu0 %2027
    %v2030 = vadd.f32 %v2024, %v2028
    %v2031 = vmul.f32 %v2023, %v1869
    %2033 = vrot.lane.b32.xlu0 %v2031, 64
    %v2034 = vpop.permute.xlu0 %2033
    %v2036 = vadd.f32 %v2030, %v2034
    %v2037 = vmul.f32 %v2023, %v1873
    %2039 = vrot.lane.b32.xlu0 %v2037, 32
    %v2040 = vpop.permute.xlu0 %2039
    %v2042 = vadd.f32 %v2036, %v2040
    %v2043 = vsub.f32 %v2042, %v1974
    %v2044 = vadd.f32 %v1840, %v2043
    %v2046 = vsel %vm175, %v2044, 0
    %2048 = vmatpush.msra.mxu0 0.0
    %2049 = vmatpush.msra.mxu0 0.0
    %2050 = vmatpush.msra.mxu0 0.0
    %2051 = vmatpush.msra.mxu0 0.0
    %2052 = vmatpush.msra.mxu0 0.0
    %2053 = vmatpush.msra.mxu0 0.0
    %2054 = vmatpush.msra.mxu0 0.0
    %2055 = vmatpush.msra.mxu0 0.0
    %2056 = vmatpush.msra.mxu0 0.0
    %2057 = vmatpush.msra.mxu0 0.0
    %2058 = vmatpush.msra.mxu0 0.0
    %2059 = vmatpush.msra.mxu0 0.0
    %2060 = vmatpush.msra.mxu0 %v67
    %2061 = vmatpush.msra.mxu0 %v66
    %2062 = vmatpush.msra.mxu0 %v65
    %2063 = vmatpush.msra.mxu0 %v64
    %2064 = vmatmul.f32.gmra.mxu0 %v2046
    %v2065 = vpop.f32.mrf.mxu0
    %v2066 = vadd.f32 %v173, %v2065
    %2067 = vdwg.mxu0
    %v2068 = vmax.f32 %v2066, 0.0
    %v2070 = vsel %vm175, %v2068, 0
    %2072 = vmatpush.msra.mxu0 0.0
    %2073 = vmatpush.msra.mxu0 0.0
    %2074 = vmatpush.msra.mxu0 0.0
    %2075 = vmatpush.msra.mxu0 0.0
    %2076 = vmatpush.msra.mxu0 0.0
    %2077 = vmatpush.msra.mxu0 0.0
    %2078 = vmatpush.msra.mxu0 0.0
    %2079 = vmatpush.msra.mxu0 0.0
    %2080 = vmatpush.msra.mxu0 0.0
    %2081 = vmatpush.msra.mxu0 0.0
    %2082 = vmatpush.msra.mxu0 0.0
    %2083 = vmatpush.msra.mxu0 0.0
    %2084 = vmatpush.msra.mxu0 %v72
    %2085 = vmatpush.msra.mxu0 %v71
    %2086 = vmatpush.msra.mxu0 %v70
    %2087 = vmatpush.msra.mxu0 %v69
    %2088 = vmatmul.f32.gmra.mxu0 %v2070
    %v2089 = vpop.f32.mrf.mxu0
    %v2090 = vadd.f32 %v201, %v2089
    %2091 = vdwg.mxu0
    %v2092 = vtanh.pop %v2090
    %v2093 = vmul.f32 %v2092, %v1877
    %v2094 = vmul.f32 %v2092, %v1881
    %2096 = vrot.lane.b32.xlu0 %v2094, 96
    %v2097 = vpop.permute.xlu0 %2096
    %v2099 = vadd.f32 %v2093, %v2097
    %v2100 = vmul.f32 %v2092, %v1885
    %2102 = vrot.lane.b32.xlu0 %v2100, 64
    %v2103 = vpop.permute.xlu0 %2102
    %v2105 = vadd.f32 %v2099, %v2103
    %v2106 = vmul.f32 %v2092, %v1889
    %2108 = vrot.lane.b32.xlu0 %v2106, 32
    %v2109 = vpop.permute.xlu0 %2108
    %v2111 = vadd.f32 %v2105, %v2109
    %v2112 = vsub.f32 %v1973, %v2042
    %v2113 = vadd.f32 %v2112, %v2111
    %v2114 = vadd.f32 %v1840, %v2113
    %v2116 = vsel %vm175, %v2114, 0
    %2118 = vmatpush.msra.mxu0 0.0
    %2119 = vmatpush.msra.mxu0 0.0
    %2120 = vmatpush.msra.mxu0 0.0
    %2121 = vmatpush.msra.mxu0 0.0
    %2122 = vmatpush.msra.mxu0 0.0
    %2123 = vmatpush.msra.mxu0 0.0
    %2124 = vmatpush.msra.mxu0 0.0
    %2125 = vmatpush.msra.mxu0 0.0
    %2126 = vmatpush.msra.mxu0 0.0
    %2127 = vmatpush.msra.mxu0 0.0
    %2128 = vmatpush.msra.mxu0 0.0
    %2129 = vmatpush.msra.mxu0 0.0
    %2130 = vmatpush.msra.mxu0 %v67
    %2131 = vmatpush.msra.mxu0 %v66
    %2132 = vmatpush.msra.mxu0 %v65
    %2133 = vmatpush.msra.mxu0 %v64
    %2134 = vmatmul.f32.gmra.mxu0 %v2116
    %v2135 = vpop.f32.mrf.mxu0
    %v2136 = vadd.f32 %v173, %v2135
    %2137 = vdwg.mxu0
    %v2138 = vmax.f32 %v2136, 0.0
    %v2140 = vsel %vm175, %v2138, 0
    %2142 = vmatpush.msra.mxu0 0.0
    %2143 = vmatpush.msra.mxu0 0.0
    %2144 = vmatpush.msra.mxu0 0.0
    %2145 = vmatpush.msra.mxu0 0.0
    %2146 = vmatpush.msra.mxu0 0.0
    %2147 = vmatpush.msra.mxu0 0.0
    %2148 = vmatpush.msra.mxu0 0.0
    %2149 = vmatpush.msra.mxu0 0.0
    %2150 = vmatpush.msra.mxu0 0.0
    %2151 = vmatpush.msra.mxu0 0.0
    %2152 = vmatpush.msra.mxu0 0.0
    %2153 = vmatpush.msra.mxu0 0.0
    %2154 = vmatpush.msra.mxu0 %v72
    %2155 = vmatpush.msra.mxu0 %v71
    %2156 = vmatpush.msra.mxu0 %v70
    %2157 = vmatpush.msra.mxu0 %v69
    %2158 = vmatmul.f32.gmra.mxu0 %v2140
    %v2159 = vpop.f32.mrf.mxu0
    %v2160 = vadd.f32 %v201, %v2159
    %2161 = vdwg.mxu0
    %v2162 = vtanh.pop %v2160
    %v2163 = vmul.f32 %v2162, %v1893
    %v2164 = vmul.f32 %v2162, %v1897
    %2166 = vrot.lane.b32.xlu0 %v2164, 96
    %v2167 = vpop.permute.xlu0 %2166
    %v2169 = vadd.f32 %v2163, %v2167
    %v2170 = vmul.f32 %v2162, %v1901
    %2172 = vrot.lane.b32.xlu0 %v2170, 64
    %v2173 = vpop.permute.xlu0 %2172
    %v2175 = vadd.f32 %v2169, %v2173
    %v2176 = vmul.f32 %v2162, %v1905
    %2178 = vrot.lane.b32.xlu0 %v2176, 32
    %v2179 = vpop.permute.xlu0 %2178
    %v2181 = vadd.f32 %v2175, %v2179
    %v2182 = vadd.f32 %v2042, %v2111
    %v2183 = vmul.f32 %v2182, 3.0
    %v2184 = vadd.f32 %v1973, %v2183
    %v2185 = vadd.f32 %v2184, %v2181
    %v2186 = vmul.f32 %v2185, 0.125
    %v2187 = vadd.f32 %v1840, %v2186
    %s2188 = scalar_lea.vmem [#allocation7], 16
    %2189 = vst.msk [vmem:[%s2188] sm:$0xff] %vm175, %v2187
    %2190 = vset.pattern.permute.xlu0 96
    %2191 = vperm.xlu0 %2190, %v106
    %v2192 = vpop.permute.xlu0 %2191
    %2194 = vset.pattern.permute.xlu0 97
    %2195 = vperm.xlu0 %2194, %v106
    %v2196 = vpop.permute.xlu0 %2195
    %2198 = vset.pattern.permute.xlu0 98
    %2199 = vperm.xlu0 %2198, %v106
    %v2200 = vpop.permute.xlu0 %2199
    %2202 = vset.pattern.permute.xlu0 99
    %2203 = vperm.xlu0 %2202, %v106
    %v2204 = vpop.permute.xlu0 %2203
    %2206 = vset.pattern.permute.xlu0 100
    %2207 = vperm.xlu0 %2206, %v106
    %v2208 = vpop.permute.xlu0 %2207
    %2210 = vset.pattern.permute.xlu0 101
    %2211 = vperm.xlu0 %2210, %v106
    %v2212 = vpop.permute.xlu0 %2211
    %2214 = vset.pattern.permute.xlu0 102
    %2215 = vperm.xlu0 %2214, %v106
    %v2216 = vpop.permute.xlu0 %2215
    %2218 = vset.pattern.permute.xlu0 103
    %2219 = vperm.xlu0 %2218, %v106
    %v2220 = vpop.permute.xlu0 %2219
    %2222 = vset.pattern.permute.xlu0 104
    %2223 = vperm.xlu0 %2222, %v106
    %v2224 = vpop.permute.xlu0 %2223
    %2226 = vset.pattern.permute.xlu0 105
    %2227 = vperm.xlu0 %2226, %v106
    %v2228 = vpop.permute.xlu0 %2227
    %2230 = vset.pattern.permute.xlu0 106
    %2231 = vperm.xlu0 %2230, %v106
    %v2232 = vpop.permute.xlu0 %2231
    %2234 = vset.pattern.permute.xlu0 107
    %2235 = vperm.xlu0 %2234, %v106
    %v2236 = vpop.permute.xlu0 %2235
    %2238 = vset.pattern.permute.xlu0 108
    %2239 = vperm.xlu0 %2238, %v106
    %v2240 = vpop.permute.xlu0 %2239
    %2242 = vset.pattern.permute.xlu0 109
    %2243 = vperm.xlu0 %2242, %v106
    %v2244 = vpop.permute.xlu0 %2243
    %2246 = vset.pattern.permute.xlu0 110
    %2247 = vperm.xlu0 %2246, %v106
    %v2248 = vpop.permute.xlu0 %2247
    %2250 = vset.pattern.permute.xlu0 111
    %2251 = vperm.xlu0 %2250, %v106
    %v2252 = vpop.permute.xlu0 %2251
    %v2255 = vsel %vm175, %v2187, 0
    %2257 = vmatpush.msra.mxu0 0.0
    %2258 = vmatpush.msra.mxu0 0.0
    %2259 = vmatpush.msra.mxu0 0.0
    %2260 = vmatpush.msra.mxu0 0.0
    %2261 = vmatpush.msra.mxu0 0.0
    %2262 = vmatpush.msra.mxu0 0.0
    %2263 = vmatpush.msra.mxu0 0.0
    %2264 = vmatpush.msra.mxu0 0.0
    %2265 = vmatpush.msra.mxu0 0.0
    %2266 = vmatpush.msra.mxu0 0.0
    %2267 = vmatpush.msra.mxu0 0.0
    %2268 = vmatpush.msra.mxu0 0.0
    %2269 = vmatpush.msra.mxu0 %v67
    %2270 = vmatpush.msra.mxu0 %v66
    %2271 = vmatpush.msra.mxu0 %v65
    %2272 = vmatpush.msra.mxu0 %v64
    %2273 = vmatmul.f32.gmra.mxu0 %v2255
    %v2274 = vpop.f32.mrf.mxu0
    %v2275 = vadd.f32 %v173, %v2274
    %2276 = vdwg.mxu0
    %v2277 = vmax.f32 %v2275, 0.0
    %v2279 = vsel %vm175, %v2277, 0
    %2281 = vmatpush.msra.mxu0 0.0
    %2282 = vmatpush.msra.mxu0 0.0
    %2283 = vmatpush.msra.mxu0 0.0
    %2284 = vmatpush.msra.mxu0 0.0
    %2285 = vmatpush.msra.mxu0 0.0
    %2286 = vmatpush.msra.mxu0 0.0
    %2287 = vmatpush.msra.mxu0 0.0
    %2288 = vmatpush.msra.mxu0 0.0
    %2289 = vmatpush.msra.mxu0 0.0
    %2290 = vmatpush.msra.mxu0 0.0
    %2291 = vmatpush.msra.mxu0 0.0
    %2292 = vmatpush.msra.mxu0 0.0
    %2293 = vmatpush.msra.mxu0 %v72
    %2294 = vmatpush.msra.mxu0 %v71
    %2295 = vmatpush.msra.mxu0 %v70
    %2296 = vmatpush.msra.mxu0 %v69
    %2297 = vmatmul.f32.gmra.mxu0 %v2279
    %v2298 = vpop.f32.mrf.mxu0
    %v2299 = vadd.f32 %v201, %v2298
    %2300 = vdwg.mxu0
    %v2301 = vtanh.pop %v2299
    %v2302 = vmul.f32 %v2301, %v2192
    %v2303 = vmul.f32 %v2301, %v2196
    %2305 = vrot.lane.b32.xlu0 %v2303, 96
    %v2306 = vpop.permute.xlu0 %2305
    %v2308 = vadd.f32 %v2302, %v2306
    %v2309 = vmul.f32 %v2301, %v2200
    %2311 = vrot.lane.b32.xlu0 %v2309, 64
    %v2312 = vpop.permute.xlu0 %2311
    %v2314 = vadd.f32 %v2308, %v2312
    %v2315 = vmul.f32 %v2301, %v2204
    %2317 = vrot.lane.b32.xlu0 %v2315, 32
    %v2318 = vpop.permute.xlu0 %2317
    %v2320 = vadd.f32 %v2314, %v2318
    %v2321 = vmul.f32 %v2320, 0.33333334
    %v2322 = vadd.f32 %v2187, %v2321
    %v2324 = vsel %vm175, %v2322, 0
    %2326 = vmatpush.msra.mxu0 0.0
    %2327 = vmatpush.msra.mxu0 0.0
    %2328 = vmatpush.msra.mxu0 0.0
    %2329 = vmatpush.msra.mxu0 0.0
    %2330 = vmatpush.msra.mxu0 0.0
    %2331 = vmatpush.msra.mxu0 0.0
    %2332 = vmatpush.msra.mxu0 0.0
    %2333 = vmatpush.msra.mxu0 0.0
    %2334 = vmatpush.msra.mxu0 0.0
    %2335 = vmatpush.msra.mxu0 0.0
    %2336 = vmatpush.msra.mxu0 0.0
    %2337 = vmatpush.msra.mxu0 0.0
    %2338 = vmatpush.msra.mxu0 %v67
    %2339 = vmatpush.msra.mxu0 %v66
    %2340 = vmatpush.msra.mxu0 %v65
    %2341 = vmatpush.msra.mxu0 %v64
    %2342 = vmatmul.f32.gmra.mxu0 %v2324
    %v2343 = vpop.f32.mrf.mxu0
    %v2344 = vadd.f32 %v173, %v2343
    %2345 = vdwg.mxu0
    %v2346 = vmax.f32 %v2344, 0.0
    %v2348 = vsel %vm175, %v2346, 0
    %2350 = vmatpush.msra.mxu0 0.0
    %2351 = vmatpush.msra.mxu0 0.0
    %2352 = vmatpush.msra.mxu0 0.0
    %2353 = vmatpush.msra.mxu0 0.0
    %2354 = vmatpush.msra.mxu0 0.0
    %2355 = vmatpush.msra.mxu0 0.0
    %2356 = vmatpush.msra.mxu0 0.0
    %2357 = vmatpush.msra.mxu0 0.0
    %2358 = vmatpush.msra.mxu0 0.0
    %2359 = vmatpush.msra.mxu0 0.0
    %2360 = vmatpush.msra.mxu0 0.0
    %2361 = vmatpush.msra.mxu0 0.0
    %2362 = vmatpush.msra.mxu0 %v72
    %2363 = vmatpush.msra.mxu0 %v71
    %2364 = vmatpush.msra.mxu0 %v70
    %2365 = vmatpush.msra.mxu0 %v69
    %2366 = vmatmul.f32.gmra.mxu0 %v2348
    %v2367 = vpop.f32.mrf.mxu0
    %v2368 = vadd.f32 %v201, %v2367
    %2369 = vdwg.mxu0
    %v2370 = vtanh.pop %v2368
    %v2371 = vmul.f32 %v2370, %v2208
    %v2372 = vmul.f32 %v2370, %v2212
    %2374 = vrot.lane.b32.xlu0 %v2372, 96
    %v2375 = vpop.permute.xlu0 %2374
    %v2377 = vadd.f32 %v2371, %v2375
    %v2378 = vmul.f32 %v2370, %v2216
    %2380 = vrot.lane.b32.xlu0 %v2378, 64
    %v2381 = vpop.permute.xlu0 %2380
    %v2383 = vadd.f32 %v2377, %v2381
    %v2384 = vmul.f32 %v2370, %v2220
    %2386 = vrot.lane.b32.xlu0 %v2384, 32
    %v2387 = vpop.permute.xlu0 %2386
    %v2389 = vadd.f32 %v2383, %v2387
    %v2390 = vsub.f32 %v2389, %v2321
    %v2391 = vadd.f32 %v2187, %v2390
    %v2393 = vsel %vm175, %v2391, 0
    %2395 = vmatpush.msra.mxu0 0.0
    %2396 = vmatpush.msra.mxu0 0.0
    %2397 = vmatpush.msra.mxu0 0.0
    %2398 = vmatpush.msra.mxu0 0.0
    %2399 = vmatpush.msra.mxu0 0.0
    %2400 = vmatpush.msra.mxu0 0.0
    %2401 = vmatpush.msra.mxu0 0.0
    %2402 = vmatpush.msra.mxu0 0.0
    %2403 = vmatpush.msra.mxu0 0.0
    %2404 = vmatpush.msra.mxu0 0.0
    %2405 = vmatpush.msra.mxu0 0.0
    %2406 = vmatpush.msra.mxu0 0.0
    %2407 = vmatpush.msra.mxu0 %v67
    %2408 = vmatpush.msra.mxu0 %v66
    %2409 = vmatpush.msra.mxu0 %v65
    %2410 = vmatpush.msra.mxu0 %v64
    %2411 = vmatmul.f32.gmra.mxu0 %v2393
    %v2412 = vpop.f32.mrf.mxu0
    %v2413 = vadd.f32 %v173, %v2412
    %2414 = vdwg.mxu0
    %v2415 = vmax.f32 %v2413, 0.0
    %v2417 = vsel %vm175, %v2415, 0
    %2419 = vmatpush.msra.mxu0 0.0
    %2420 = vmatpush.msra.mxu0 0.0
    %2421 = vmatpush.msra.mxu0 0.0
    %2422 = vmatpush.msra.mxu0 0.0
    %2423 = vmatpush.msra.mxu0 0.0
    %2424 = vmatpush.msra.mxu0 0.0
    %2425 = vmatpush.msra.mxu0 0.0
    %2426 = vmatpush.msra.mxu0 0.0
    %2427 = vmatpush.msra.mxu0 0.0
    %2428 = vmatpush.msra.mxu0 0.0
    %2429 = vmatpush.msra.mxu0 0.0
    %2430 = vmatpush.msra.mxu0 0.0
    %2431 = vmatpush.msra.mxu0 %v72
    %2432 = vmatpush.msra.mxu0 %v71
    %2433 = vmatpush.msra.mxu0 %v70
    %2434 = vmatpush.msra.mxu0 %v69
    %2435 = vmatmul.f32.gmra.mxu0 %v2417
    %v2436 = vpop.f32.mrf.mxu0
    %v2437 = vadd.f32 %v201, %v2436
    %2438 = vdwg.mxu0
    %v2439 = vtanh.pop %v2437
    %v2440 = vmul.f32 %v2439, %v2224
    %v2441 = vmul.f32 %v2439, %v2228
    %2443 = vrot.lane.b32.xlu0 %v2441, 96
    %v2444 = vpop.permute.xlu0 %2443
    %v2446 = vadd.f32 %v2440, %v2444
    %v2447 = vmul.f32 %v2439, %v2232
    %2449 = vrot.lane.b32.xlu0 %v2447, 64
    %v2450 = vpop.permute.xlu0 %2449
    %v2452 = vadd.f32 %v2446, %v2450
    %v2453 = vmul.f32 %v2439, %v2236
    %2455 = vrot.lane.b32.xlu0 %v2453, 32
    %v2456 = vpop.permute.xlu0 %2455
    %v2458 = vadd.f32 %v2452, %v2456
    %v2459 = vsub.f32 %v2320, %v2389
    %v2460 = vadd.f32 %v2459, %v2458
    %v2461 = vadd.f32 %v2187, %v2460
    %v2463 = vsel %vm175, %v2461, 0
    %2465 = vmatpush.msra.mxu0 0.0
    %2466 = vmatpush.msra.mxu0 0.0
    %2467 = vmatpush.msra.mxu0 0.0
    %2468 = vmatpush.msra.mxu0 0.0
    %2469 = vmatpush.msra.mxu0 0.0
    %2470 = vmatpush.msra.mxu0 0.0
    %2471 = vmatpush.msra.mxu0 0.0
    %2472 = vmatpush.msra.mxu0 0.0
    %2473 = vmatpush.msra.mxu0 0.0
    %2474 = vmatpush.msra.mxu0 0.0
    %2475 = vmatpush.msra.mxu0 0.0
    %2476 = vmatpush.msra.mxu0 0.0
    %2477 = vmatpush.msra.mxu0 %v67
    %2478 = vmatpush.msra.mxu0 %v66
    %2479 = vmatpush.msra.mxu0 %v65
    %2480 = vmatpush.msra.mxu0 %v64
    %2481 = vmatmul.f32.gmra.mxu0 %v2463
    %v2482 = vpop.f32.mrf.mxu0
    %v2483 = vadd.f32 %v173, %v2482
    %2484 = vdwg.mxu0
    %v2485 = vmax.f32 %v2483, 0.0
    %v2487 = vsel %vm175, %v2485, 0
    %2489 = vmatpush.msra.mxu0 0.0
    %2490 = vmatpush.msra.mxu0 0.0
    %2491 = vmatpush.msra.mxu0 0.0
    %2492 = vmatpush.msra.mxu0 0.0
    %2493 = vmatpush.msra.mxu0 0.0
    %2494 = vmatpush.msra.mxu0 0.0
    %2495 = vmatpush.msra.mxu0 0.0
    %2496 = vmatpush.msra.mxu0 0.0
    %2497 = vmatpush.msra.mxu0 0.0
    %2498 = vmatpush.msra.mxu0 0.0
    %2499 = vmatpush.msra.mxu0 0.0
    %2500 = vmatpush.msra.mxu0 0.0
    %2501 = vmatpush.msra.mxu0 %v72
    %2502 = vmatpush.msra.mxu0 %v71
    %2503 = vmatpush.msra.mxu0 %v70
    %2504 = vmatpush.msra.mxu0 %v69
    %2505 = vmatmul.f32.gmra.mxu0 %v2487
    %v2506 = vpop.f32.mrf.mxu0
    %v2507 = vadd.f32 %v201, %v2506
    %2508 = vdwg.mxu0
    %v2509 = vtanh.pop %v2507
    %v2510 = vmul.f32 %v2509, %v2240
    %v2511 = vmul.f32 %v2509, %v2244
    %2513 = vrot.lane.b32.xlu0 %v2511, 96
    %v2514 = vpop.permute.xlu0 %2513
    %v2516 = vadd.f32 %v2510, %v2514
    %v2517 = vmul.f32 %v2509, %v2248
    %2519 = vrot.lane.b32.xlu0 %v2517, 64
    %v2520 = vpop.permute.xlu0 %2519
    %v2522 = vadd.f32 %v2516, %v2520
    %v2523 = vmul.f32 %v2509, %v2252
    %2525 = vrot.lane.b32.xlu0 %v2523, 32
    %v2526 = vpop.permute.xlu0 %2525
    %v2528 = vadd.f32 %v2522, %v2526
    %v2529 = vadd.f32 %v2389, %v2458
    %v2530 = vmul.f32 %v2529, 3.0
    %v2531 = vadd.f32 %v2320, %v2530
    %v2532 = vadd.f32 %v2531, %v2528
    %v2533 = vmul.f32 %v2532, 0.125
    %v2534 = vadd.f32 %v2187, %v2533
    %s2535 = scalar_lea.vmem [#allocation7], 24
    %2536 = vst.msk [vmem:[%s2535] sm:$0xff] %vm175, %v2534
    // Predicated region
    $region42: #{tpu_custom_call.1} parent=1 // pred_check
      _
    $region43: #{tpu_custom_call.1} parent=1 // pred_check_branch
      %2538 = sbr.rel (0) target = $region45
    $region44: #{tpu_custom_call.1} parent=1 // pred_region
      %2540 = vsyncadd [#allocation4], 0
      %s2541 = sshll.u32 [#allocation7], 4
      %s2542 = int_to_ptr.vmem [resolvable:$true] %s2541
      %s2543 = sshll.u32 %s8, 4
      %s2544 = int_to_ptr.hbm [resolvable:$true] %s2543
      %2549 = dma.vmem_to_hbm [thread:$0]  %s2542, 512, %s2544, [#allocation4], 128, 128, 8
    $region45: #{tpu_custom_call.1} parent=1 // pred_fallthru
      _
    // Predicated region
    $region46: #{tpu_custom_call.1} parent=1 // pred_check
      _
    $region47: #{tpu_custom_call.1} parent=1 // pred_check_branch
      %2551 = sbr.rel (0) target = $region49
    $region48: #{tpu_custom_call.1} parent=1 // pred_region
      %2553 = dma.done [#allocation4], 512
    $region49: #{tpu_custom_call.1} parent=1 // pred_fallthru
      _
    %2554 = vsyncpa [#allocation3], 1
    %2555 = vsyncpa [#allocation6], 1
    %2556 = vsyncpa [#allocation4], 1

</llo_original>
